<compile_context>
chip_gen: v6e
topology: v6e:2x2x1
jax: 0.10.0
libtpu: 0.0.40
codegen_flags: <defaults>
</compile_context>

<pallas_src>
import functools
import math

import jax
import jax.numpy as jnp
from jax import lax
from jax.experimental import pallas as pl
from jax.experimental.pallas import tpu as pltpu


# ----------------------------- model config ---------------------------------
BATCH = 2
SEQ = 8
HIDDEN = 128
N_HEADS = 2
HEAD_DIM = HIDDEN // N_HEADS
FFN_DIM = 256
N_LAYERS = 2
VOCAB = 120
MAX_POS = 32
OUTPUT_SIZE = 4
FC_PAD = 128            # classifier output padded to a lane-dense width
LN_EPS = 1e-12          # DistilBERT LayerNorm eps
ATTN_SCALE = 1.0 / math.sqrt(HEAD_DIM)


# --------------------------- in-kernel helpers -------------------------------
def _gelu(x):
    # TODO(synk): HF DistilBERT uses exact (erf-based) GELU; tanh approximation
    # is used here to guarantee Mosaic lowering of the transcendental.
    c = math.sqrt(2.0 / math.pi)
    return 0.5 * x * (1.0 + jnp.tanh(c * (x + 0.044715 * x * x * x)))


def _layernorm(x, g, b):
    mu = jnp.mean(x, axis=-1, keepdims=True)
    xc = x - mu
    var = jnp.mean(xc * xc, axis=-1, keepdims=True)
    return xc * lax.rsqrt(var + LN_EPS) * g + b


# ------------------------------- fused kernel --------------------------------
def _encoder_kernel(
    emb_ref, emb_g_ref, emb_b_ref, mask_ref,
    wqkv_ref, bqkv_ref, wo_ref, bo_ref, sa_g_ref, sa_b_ref,
    w1_ref, b1_ref, w2_ref, b2_ref, out_g_ref, out_b_ref,
    fc_w_ref, fc_b_ref,
    logits_ref,
    *, batch, seq, n_layers,
):
    # ---- embedding LayerNorm over all batch*seq rows at once ----
    x = _layernorm(emb_ref[...].astype(jnp.float32),
                   emb_g_ref[...], emb_b_ref[...])          # (B*S, H) f32
    mask_full = mask_ref[...]                                # (B*NH*S, S) additive

    for l in range(n_layers):                                # unrolled: all weights resident
        x_bf = x.astype(jnp.bfloat16)

        # ---- fused QKV projection for ALL rows (M = B*S) ----
        # (attention scale is pre-folded into the Q weight columns)
        qkv = (jnp.dot(x_bf, wqkv_ref[l], preferred_element_type=jnp.float32)
               + bqkv_ref[l])                                # (B*S, 3H)

        # ---- scores for every (batch, head) pair; one softmax pass ----
        score_tiles = []
        v_tiles = []
        for b in range(batch):
            r0 = b * seq
            for h in range(N_HEADS):
                lo = h * HEAD_DIM
                qh = qkv[r0:r0 + seq, lo:lo + HEAD_DIM].astype(jnp.bfloat16)
                kh = qkv[r0:r0 + seq,
                         HIDDEN + lo:HIDDEN + lo + HEAD_DIM].astype(jnp.bfloat16)
                vh = qkv[r0:r0 + seq,
                         2 * HIDDEN + lo:2 * HIDDEN + lo + HEAD_DIM].astype(jnp.bfloat16)
                score_tiles.append(
                    lax.dot_general(qh, kh, (((1,), (1,)), ((), ())),
                                    preferred_element_type=jnp.float32))  # (S, S)
                v_tiles.append(vh)

        s_all = jnp.concatenate(score_tiles, axis=0) + mask_full   # (B*NH*S, S)
        s_all = s_all - jnp.max(s_all, axis=-1, keepdims=True)
        p_all = jnp.exp(s_all)
        p_all = (p_all / jnp.sum(p_all, axis=-1, keepdims=True)).astype(jnp.bfloat16)

        # ---- per-head contexts kept in vregs, assembled lane/sublane dense ----
        batch_ctx = []
        idx = 0
        for b in range(batch):
            head_ctx = []
            for h in range(N_HEADS):
                r0 = idx * seq
                head_ctx.append(jnp.dot(p_all[r0:r0 + seq, :], v_tiles[idx],
                                        preferred_element_type=jnp.float32))
                idx += 1
            batch_ctx.append(jnp.concatenate(head_ctx, axis=-1))   # (S, H)
        ctx = jnp.concatenate(batch_ctx, axis=0)                   # (B*S, H)

        # ---- attention output projection + residual + LayerNorm ----
        attn_out = (jnp.dot(ctx.astype(jnp.bfloat16), wo_ref[l],
                            preferred_element_type=jnp.float32) + bo_ref[l])
        h1 = _layernorm(attn_out + x, sa_g_ref[l], sa_b_ref[l])

        # ---- FFN (GELU) + residual + LayerNorm ----
        g = _gelu(jnp.dot(h1.astype(jnp.bfloat16), w1_ref[l],
                          preferred_element_type=jnp.float32) + b1_ref[l])
        ff = (jnp.dot(g.astype(jnp.bfloat16), w2_ref[l],
                      preferred_element_type=jnp.float32) + b2_ref[l])
        x = _layernorm(ff + h1, out_g_ref[l], out_b_ref[l])

    # ---- classifier head on CLS rows (row b*seq for each batch item) ----
    # dropout(p=0.1) on pooled CLS -> identity at inference
    cls = jnp.concatenate([x[b * seq:b * seq + 1, :] for b in range(batch)],
                          axis=0).astype(jnp.bfloat16)             # (B, H)
    logits = (jnp.dot(cls, fc_w_ref[...], preferred_element_type=jnp.float32)
              + fc_b_ref[...])                                      # (B, FC_PAD)
    logits_ref[...] = logits


# ------------------------------ forward wrapper -------------------------------
@jax.jit
def distilbert_classifier_forward(params, input_ids, attention_mask=None):
    b, s = input_ids.shape
    hidden = params["word_emb"].shape[-1]
    n_layers = params["wqkv"].shape[0]
    if attention_mask is None:
        attention_mask = jnp.ones((b, s), dtype=jnp.float32)

    # Embedding gather + position add (XLA glue: data-dependent gather).
    word = jnp.take(params["word_emb"], input_ids, axis=0)          # (b, s, H)
    pos = params["pos_emb"][:s][jnp.newaxis, :, :]                  # (1, s, H)
    emb = (word + pos).reshape(b * s, hidden)                       # (b*s, H)

    # Additive attention-mask bias, pre-broadcast to the concatenated
    # (batch*heads*seq, seq) score-tile layout used inside the kernel.
    mask_bias = (attention_mask.astype(jnp.float32) - 1.0) * 1e9    # (b, s)
    mask_full = jnp.repeat(mask_bias, N_HEADS * s, axis=0)          # (b*NH*s, s)

    def full_spec(shape):
        z = (0,) * len(shape)
        return pl.BlockSpec(tuple(shape), lambda i, z=z: z)

    inputs = (emb, params["emb_ln_g"], params["emb_ln_b"], mask_full,
              params["wqkv"], params["bqkv"], params["wo"], params["bo"],
              params["sa_ln_g"], params["sa_ln_b"],
              params["w1"], params["b1"], params["w2"], params["b2"],
              params["out_ln_g"], params["out_ln_b"],
              params["fc_w"], params["fc_b"])

    kernel = functools.partial(_encoder_kernel, batch=b, seq=s, n_layers=n_layers)

    logits_pad = pl.pallas_call(
        kernel,
        out_shape=jax.ShapeDtypeStruct((b, FC_PAD), jnp.float32),
        grid=(1,),                                     # single step: everything resident
        in_specs=[full_spec(x.shape) for x in inputs],
        out_specs=pl.BlockSpec((b, FC_PAD), lambda i: (0, 0)),
        compiler_params=pltpu.CompilerParams(
            dimension_semantics=("arbitrary",)),
    )(*inputs)

    return logits_pad[:, :OUTPUT_SIZE]


# --------------------------- parameter construction ---------------------------
def init_params(key):
    n_keys = 2 + 6 * N_LAYERS + 1
    keys = iter(jax.random.split(key, n_keys))

    def nrm(k, shape):
        return 0.02 * jax.random.normal(k, shape, dtype=jnp.float32)

    params = {
        "word_emb": nrm(next(keys), (VOCAB, HIDDEN)),
        "pos_emb": nrm(next(keys), (MAX_POS, HIDDEN)),
        "emb_ln_g": jnp.ones((1, HIDDEN), jnp.float32),
        "emb_ln_b": jnp.zeros((1, HIDDEN), jnp.float32),
    }

    wqkv, wo, w1, w2 = [], [], [], []
    for _ in range(N_LAYERS):
        # 1/sqrt(HEAD_DIM) attention scale folded into Q weights (Q bias is 0).
        wq = nrm(next(keys), (HIDDEN, HIDDEN)) * ATTN_SCALE
        wk = nrm(next(keys), (HIDDEN, HIDDEN))
        wv = nrm(next(keys), (HIDDEN, HIDDEN))
        wqkv.append(jnp.concatenate([wq, wk, wv], axis=1))          # fused QKV (H, 3H)
        wo.append(nrm(next(keys), (HIDDEN, HIDDEN)))
        w1.append(nrm(next(keys), (HIDDEN, FFN_DIM)))
        w2.append(nrm(next(keys), (FFN_DIM, HIDDEN)))

    params.update({
        # weights stored bf16 (MXU inputs); biases / LN params stay f32
        "wqkv": jnp.stack(wqkv).astype(jnp.bfloat16),               # (L, H, 3H)
        "bqkv": jnp.zeros((N_LAYERS, 1, 3 * HIDDEN), jnp.float32),
        "wo": jnp.stack(wo).astype(jnp.bfloat16),                   # (L, H, H)
        "bo": jnp.zeros((N_LAYERS, 1, HIDDEN), jnp.float32),
        "sa_ln_g": jnp.ones((N_LAYERS, 1, HIDDEN), jnp.float32),
        "sa_ln_b": jnp.zeros((N_LAYERS, 1, HIDDEN), jnp.float32),
        "w1": jnp.stack(w1).astype(jnp.bfloat16),                   # (L, H, F)
        "b1": jnp.zeros((N_LAYERS, 1, FFN_DIM), jnp.float32),
        "w2": jnp.stack(w2).astype(jnp.bfloat16),                   # (L, F, H)
        "b2": jnp.zeros((N_LAYERS, 1, HIDDEN), jnp.float32),
        "out_ln_g": jnp.ones((N_LAYERS, 1, HIDDEN), jnp.float32),
        "out_ln_b": jnp.zeros((N_LAYERS, 1, HIDDEN), jnp.float32),
    })

    fc_w = nrm(next(keys), (HIDDEN, OUTPUT_SIZE))
    fc_w_pad = jnp.zeros((HIDDEN, FC_PAD), jnp.float32).at[:, :OUTPUT_SIZE].set(fc_w)
    params["fc_w"] = fc_w_pad.astype(jnp.bfloat16)                  # lane-dense head
    params["fc_b"] = jnp.zeros((1, FC_PAD), jnp.float32)
    return params


# ----------------------------------- main -------------------------------------
if __name__ == "__main__":
    root = jax.random.PRNGKey(0)
    k_params, k_ids = jax.random.split(root)

    params = init_params(k_params)
    input_ids = jax.random.randint(k_ids, (BATCH, SEQ), 0, VOCAB, dtype=jnp.int32)
    # second sequence has 2 padding positions to exercise the attention mask
    attention_mask = jnp.array(
        [[1.0] * SEQ, [1.0] * (SEQ - 2) + [0.0] * 2], dtype=jnp.float32
    )

    logits = distilbert_classifier_forward(params, input_ids, attention_mask)
    logits = jax.block_until_ready(logits)
    assert logits.shape == (BATCH, OUTPUT_SIZE)
    assert bool(jnp.all(jnp.isfinite(logits)))
    print("KERNEL_OK")
</pallas_src>

<mosaic_0001>
module attributes {stable_mosaic.version = 11 : i64} {
  func.func @_encoder_kernel(%arg0: i32, %arg1: memref<16x128xf32, #tpu.memory_space<vmem>>, %arg2: memref<1x128xf32, #tpu.memory_space<vmem>>, %arg3: memref<1x128xf32, #tpu.memory_space<vmem>>, %arg4: memref<32x8xf32, #tpu.memory_space<vmem>>, %arg5: memref<2x128x384xbf16, #tpu.memory_space<vmem>>, %arg6: memref<2x1x384xf32, #tpu.memory_space<vmem>>, %arg7: memref<2x128x128xbf16, #tpu.memory_space<vmem>>, %arg8: memref<2x1x128xf32, #tpu.memory_space<vmem>>, %arg9: memref<2x1x128xf32, #tpu.memory_space<vmem>>, %arg10: memref<2x1x128xf32, #tpu.memory_space<vmem>>, %arg11: memref<2x128x256xbf16, #tpu.memory_space<vmem>>, %arg12: memref<2x1x256xf32, #tpu.memory_space<vmem>>, %arg13: memref<2x256x128xbf16, #tpu.memory_space<vmem>>, %arg14: memref<2x1x128xf32, #tpu.memory_space<vmem>>, %arg15: memref<2x1x128xf32, #tpu.memory_space<vmem>>, %arg16: memref<2x1x128xf32, #tpu.memory_space<vmem>>, %arg17: memref<128x128xbf16, #tpu.memory_space<vmem>>, %arg18: memref<1x128xf32, #tpu.memory_space<vmem>>, %arg19: memref<2x128xf32, #tpu.memory_space<vmem>>) attributes {dimension_semantics = [#tpu.dimension_semantics<arbitrary>], iteration_bounds = array<i64: 1>, scalar_prefetch = 0 : i64, scratch_operands = 0 : i64, tpu.core_type = #tpu.core_type<tc>, window_params = [{pipeline_mode = #tpu.pipeline_mode<synchronous>, transform_indices = @transform_0, window_bounds = array<i64: 16, 128>}, {pipeline_mode = #tpu.pipeline_mode<synchronous>, transform_indices = @transform_1, window_bounds = array<i64: 1, 128>}, {pipeline_mode = #tpu.pipeline_mode<synchronous>, transform_indices = @transform_2, window_bounds = array<i64: 1, 128>}, {pipeline_mode = #tpu.pipeline_mode<synchronous>, transform_indices = @transform_3, window_bounds = array<i64: 32, 8>}, {pipeline_mode = #tpu.pipeline_mode<synchronous>, transform_indices = @transform_4, window_bounds = array<i64: 2, 128, 384>}, {pipeline_mode = #tpu.pipeline_mode<synchronous>, transform_indices = @transform_5, window_bounds = array<i64: 2, 1, 384>}, {pipeline_mode = #tpu.pipeline_mode<synchronous>, transform_indices = @transform_6, window_bounds = array<i64: 2, 128, 128>}, {pipeline_mode = #tpu.pipeline_mode<synchronous>, transform_indices = @transform_7, window_bounds = array<i64: 2, 1, 128>}, {pipeline_mode = #tpu.pipeline_mode<synchronous>, transform_indices = @transform_8, window_bounds = array<i64: 2, 1, 128>}, {pipeline_mode = #tpu.pipeline_mode<synchronous>, transform_indices = @transform_9, window_bounds = array<i64: 2, 1, 128>}, {pipeline_mode = #tpu.pipeline_mode<synchronous>, transform_indices = @transform_10, window_bounds = array<i64: 2, 128, 256>}, {pipeline_mode = #tpu.pipeline_mode<synchronous>, transform_indices = @transform_11, window_bounds = array<i64: 2, 1, 256>}, {pipeline_mode = #tpu.pipeline_mode<synchronous>, transform_indices = @transform_12, window_bounds = array<i64: 2, 256, 128>}, {pipeline_mode = #tpu.pipeline_mode<synchronous>, transform_indices = @transform_13, window_bounds = array<i64: 2, 1, 128>}, {pipeline_mode = #tpu.pipeline_mode<synchronous>, transform_indices = @transform_14, window_bounds = array<i64: 2, 1, 128>}, {pipeline_mode = #tpu.pipeline_mode<synchronous>, transform_indices = @transform_15, window_bounds = array<i64: 2, 1, 128>}, {pipeline_mode = #tpu.pipeline_mode<synchronous>, transform_indices = @transform_16, window_bounds = array<i64: 128, 128>}, {pipeline_mode = #tpu.pipeline_mode<synchronous>, transform_indices = @transform_17, window_bounds = array<i64: 1, 128>}, {pipeline_mode = #tpu.pipeline_mode<synchronous>, transform_indices = @transform_18, window_bounds = array<i64: 2, 128>}]} {
    %c0 = arith.constant 0 : index
    %c0_0 = arith.constant 0 : index
    %0 = vector.load %arg1[%c0, %c0_0] : memref<16x128xf32, #tpu.memory_space<vmem>>, vector<16x128xf32>
    %c0_1 = arith.constant 0 : index
    %c0_2 = arith.constant 0 : index
    %1 = vector.load %arg2[%c0_1, %c0_2] : memref<1x128xf32, #tpu.memory_space<vmem>>, vector<1x128xf32>
    %c0_3 = arith.constant 0 : index
    %c0_4 = arith.constant 0 : index
    %2 = vector.load %arg3[%c0_3, %c0_4] : memref<1x128xf32, #tpu.memory_space<vmem>>, vector<1x128xf32>
    %cst = arith.constant dense<0.000000e+00> : vector<16xf32>
    %3 = vector.multi_reduction <add>, %0, %cst [1] : vector<16x128xf32> to vector<16xf32>
    %4 = vector.shape_cast %3 : vector<16xf32> to vector<16x1xf32>
    %cst_5 = arith.constant 1.280000e+02 : f32
    %5 = vector.broadcast %cst_5 : f32 to vector<16x1xf32>
    %6 = arith.divf %4, %5 : vector<16x1xf32>
    %7 = vector.broadcast %6 : vector<16x1xf32> to vector<16x128xf32>
    %8 = arith.subf %0, %7 : vector<16x128xf32>
    %9 = arith.mulf %8, %8 : vector<16x128xf32>
    %cst_6 = arith.constant dense<0.000000e+00> : vector<16xf32>
    %10 = vector.multi_reduction <add>, %9, %cst_6 [1] : vector<16x128xf32> to vector<16xf32>
    %11 = vector.shape_cast %10 : vector<16xf32> to vector<16x1xf32>
    %cst_7 = arith.constant 1.280000e+02 : f32
    %12 = vector.broadcast %cst_7 : f32 to vector<16x1xf32>
    %13 = arith.divf %11, %12 : vector<16x1xf32>
    %cst_8 = arith.constant 9.99999996E-13 : f32
    %14 = vector.broadcast %cst_8 : f32 to vector<16x1xf32>
    %15 = arith.addf %13, %14 : vector<16x1xf32>
    %16 = math.rsqrt %15 : vector<16x1xf32>
    %17 = vector.broadcast %16 : vector<16x1xf32> to vector<16x128xf32>
    %18 = arith.mulf %8, %17 : vector<16x128xf32>
    %19 = vector.broadcast %1 : vector<1x128xf32> to vector<16x128xf32>
    %20 = arith.mulf %18, %19 : vector<16x128xf32>
    %21 = vector.broadcast %2 : vector<1x128xf32> to vector<16x128xf32>
    %22 = arith.addf %20, %21 : vector<16x128xf32>
    %c0_9 = arith.constant 0 : index
    %c0_10 = arith.constant 0 : index
    %23 = vector.load %arg4[%c0_9, %c0_10] : memref<32x8xf32, #tpu.memory_space<vmem>>, vector<32x8xf32>
    %24 = arith.truncf %22 : vector<16x128xf32> to vector<16x128xbf16>
    %c0_11 = arith.constant 0 : index
    %c0_12 = arith.constant 0 : index
    %c0_13 = arith.constant 0 : index
    %25 = vector.load %arg5[%c0_11, %c0_12, %c0_13] : memref<2x128x384xbf16, #tpu.memory_space<vmem>>, vector<1x128x384xbf16>
    %26 = vector.shape_cast %25 : vector<1x128x384xbf16> to vector<128x384xbf16>
    %cst_14 = arith.constant dense<0.000000e+00> : vector<16x384xf32>
    %27 = tpu.matmul %24, %26, %cst_14 {dimension_numbers = #tpu.dot_dimension_numbers<[1], [0], [0], [1], [0, 0, 1, 1], [], []>} : vector<16x128xbf16>, vector<128x384xbf16>, vector<16x384xf32> -> vector<16x384xf32>
    %c0_15 = arith.constant 0 : index
    %c0_16 = arith.constant 0 : index
    %c0_17 = arith.constant 0 : index
    %28 = vector.load %arg6[%c0_15, %c0_16, %c0_17] : memref<2x1x384xf32, #tpu.memory_space<vmem>>, vector<1x1x384xf32>
    %29 = vector.shape_cast %28 : vector<1x1x384xf32> to vector<1x384xf32>
    %30 = vector.broadcast %29 : vector<1x384xf32> to vector<16x384xf32>
    %31 = arith.addf %27, %30 : vector<16x384xf32>
    %32 = vector.extract_strided_slice %31 {offsets = [0, 0], sizes = [8, 64], strides = [1, 1]} : vector<16x384xf32> to vector<8x64xf32>
    %33 = arith.truncf %32 : vector<8x64xf32> to vector<8x64xbf16>
    %34 = vector.extract_strided_slice %31 {offsets = [0, 128], sizes = [8, 64], strides = [1, 1]} : vector<16x384xf32> to vector<8x64xf32>
    %35 = arith.truncf %34 : vector<8x64xf32> to vector<8x64xbf16>
    %36 = vector.extract_strided_slice %31 {offsets = [0, 256], sizes = [8, 64], strides = [1, 1]} : vector<16x384xf32> to vector<8x64xf32>
    %37 = arith.truncf %36 : vector<8x64xf32> to vector<8x64xbf16>
    %cst_18 = arith.constant dense<0.000000e+00> : vector<8x8xf32>
    %38 = tpu.matmul %33, %35, %cst_18 {dimension_numbers = #tpu.dot_dimension_numbers<[1], [1], [0], [0], [0, 0, 1, 0], [], []>} : vector<8x64xbf16>, vector<8x64xbf16>, vector<8x8xf32> -> vector<8x8xf32>
    %39 = vector.extract_strided_slice %31 {offsets = [0, 64], sizes = [8, 64], strides = [1, 1]} : vector<16x384xf32> to vector<8x64xf32>
    %40 = arith.truncf %39 : vector<8x64xf32> to vector<8x64xbf16>
    %41 = vector.extract_strided_slice %31 {offsets = [0, 192], sizes = [8, 64], strides = [1, 1]} : vector<16x384xf32> to vector<8x64xf32>
    %42 = arith.truncf %41 : vector<8x64xf32> to vector<8x64xbf16>
    %43 = vector.extract_strided_slice %31 {offsets = [0, 320], sizes = [8, 64], strides = [1, 1]} : vector<16x384xf32> to vector<8x64xf32>
    %44 = arith.truncf %43 : vector<8x64xf32> to vector<8x64xbf16>
    %cst_19 = arith.constant dense<0.000000e+00> : vector<8x8xf32>
    %45 = tpu.matmul %40, %42, %cst_19 {dimension_numbers = #tpu.dot_dimension_numbers<[1], [1], [0], [0], [0, 0, 1, 0], [], []>} : vector<8x64xbf16>, vector<8x64xbf16>, vector<8x8xf32> -> vector<8x8xf32>
    %46 = vector.extract_strided_slice %31 {offsets = [8, 0], sizes = [8, 64], strides = [1, 1]} : vector<16x384xf32> to vector<8x64xf32>
    %47 = arith.truncf %46 : vector<8x64xf32> to vector<8x64xbf16>
    %48 = vector.extract_strided_slice %31 {offsets = [8, 128], sizes = [8, 64], strides = [1, 1]} : vector<16x384xf32> to vector<8x64xf32>
    %49 = arith.truncf %48 : vector<8x64xf32> to vector<8x64xbf16>
    %50 = vector.extract_strided_slice %31 {offsets = [8, 256], sizes = [8, 64], strides = [1, 1]} : vector<16x384xf32> to vector<8x64xf32>
    %51 = arith.truncf %50 : vector<8x64xf32> to vector<8x64xbf16>
    %cst_20 = arith.constant dense<0.000000e+00> : vector<8x8xf32>
    %52 = tpu.matmul %47, %49, %cst_20 {dimension_numbers = #tpu.dot_dimension_numbers<[1], [1], [0], [0], [0, 0, 1, 0], [], []>} : vector<8x64xbf16>, vector<8x64xbf16>, vector<8x8xf32> -> vector<8x8xf32>
    %53 = vector.extract_strided_slice %31 {offsets = [8, 64], sizes = [8, 64], strides = [1, 1]} : vector<16x384xf32> to vector<8x64xf32>
    %54 = arith.truncf %53 : vector<8x64xf32> to vector<8x64xbf16>
    %55 = vector.extract_strided_slice %31 {offsets = [8, 192], sizes = [8, 64], strides = [1, 1]} : vector<16x384xf32> to vector<8x64xf32>
    %56 = arith.truncf %55 : vector<8x64xf32> to vector<8x64xbf16>
    %57 = vector.extract_strided_slice %31 {offsets = [8, 320], sizes = [8, 64], strides = [1, 1]} : vector<16x384xf32> to vector<8x64xf32>
    %58 = arith.truncf %57 : vector<8x64xf32> to vector<8x64xbf16>
    %cst_21 = arith.constant dense<0.000000e+00> : vector<8x8xf32>
    %59 = tpu.matmul %54, %56, %cst_21 {dimension_numbers = #tpu.dot_dimension_numbers<[1], [1], [0], [0], [0, 0, 1, 0], [], []>} : vector<8x64xbf16>, vector<8x64xbf16>, vector<8x8xf32> -> vector<8x8xf32>
    %60 = tpu.concatenate %38, %45, %52, %59 in 0 : vector<8x8xf32>, vector<8x8xf32>, vector<8x8xf32>, vector<8x8xf32> -> vector<32x8xf32>
    %61 = arith.addf %60, %23 : vector<32x8xf32>
    %cst_22 = arith.constant dense<0xFF800000> : vector<32xf32>
    %62 = vector.multi_reduction <maximumf>, %61, %cst_22 [1] : vector<32x8xf32> to vector<32xf32>
    %63 = vector.shape_cast %62 : vector<32xf32> to vector<32x1xf32>
    %64 = vector.broadcast %63 : vector<32x1xf32> to vector<32x8xf32>
    %65 = arith.subf %61, %64 : vector<32x8xf32>
    %66 = math.exp %65 : vector<32x8xf32>
    %cst_23 = arith.constant dense<0.000000e+00> : vector<32xf32>
    %67 = vector.multi_reduction <add>, %66, %cst_23 [1] : vector<32x8xf32> to vector<32xf32>
    %68 = vector.shape_cast %67 : vector<32xf32> to vector<32x1xf32>
    %69 = vector.broadcast %68 : vector<32x1xf32> to vector<32x8xf32>
    %70 = arith.divf %66, %69 : vector<32x8xf32>
    %71 = arith.truncf %70 : vector<32x8xf32> to vector<32x8xbf16>
    %72 = vector.extract_strided_slice %71 {offsets = [0, 0], sizes = [8, 8], strides = [1, 1]} : vector<32x8xbf16> to vector<8x8xbf16>
    %cst_24 = arith.constant dense<0.000000e+00> : vector<8x64xf32>
    %73 = tpu.matmul %72, %37, %cst_24 {dimension_numbers = #tpu.dot_dimension_numbers<[1], [0], [0], [1], [0, 0, 1, 1], [], []>} : vector<8x8xbf16>, vector<8x64xbf16>, vector<8x64xf32> -> vector<8x64xf32>
    %74 = vector.extract_strided_slice %71 {offsets = [8, 0], sizes = [8, 8], strides = [1, 1]} : vector<32x8xbf16> to vector<8x8xbf16>
    %cst_25 = arith.constant dense<0.000000e+00> : vector<8x64xf32>
    %75 = tpu.matmul %74, %44, %cst_25 {dimension_numbers = #tpu.dot_dimension_numbers<[1], [0], [0], [1], [0, 0, 1, 1], [], []>} : vector<8x8xbf16>, vector<8x64xbf16>, vector<8x64xf32> -> vector<8x64xf32>
    %76 = tpu.concatenate %73, %75 in 1 : vector<8x64xf32>, vector<8x64xf32> -> vector<8x128xf32>
    %77 = vector.extract_strided_slice %71 {offsets = [16, 0], sizes = [8, 8], strides = [1, 1]} : vector<32x8xbf16> to vector<8x8xbf16>
    %cst_26 = arith.constant dense<0.000000e+00> : vector<8x64xf32>
    %78 = tpu.matmul %77, %51, %cst_26 {dimension_numbers = #tpu.dot_dimension_numbers<[1], [0], [0], [1], [0, 0, 1, 1], [], []>} : vector<8x8xbf16>, vector<8x64xbf16>, vector<8x64xf32> -> vector<8x64xf32>
    %79 = vector.extract_strided_slice %71 {offsets = [24, 0], sizes = [8, 8], strides = [1, 1]} : vector<32x8xbf16> to vector<8x8xbf16>
    %cst_27 = arith.constant dense<0.000000e+00> : vector<8x64xf32>
    %80 = tpu.matmul %79, %58, %cst_27 {dimension_numbers = #tpu.dot_dimension_numbers<[1], [0], [0], [1], [0, 0, 1, 1], [], []>} : vector<8x8xbf16>, vector<8x64xbf16>, vector<8x64xf32> -> vector<8x64xf32>
    %81 = tpu.concatenate %78, %80 in 1 : vector<8x64xf32>, vector<8x64xf32> -> vector<8x128xf32>
    %82 = tpu.concatenate %76, %81 in 0 : vector<8x128xf32>, vector<8x128xf32> -> vector<16x128xf32>
    %83 = arith.truncf %82 : vector<16x128xf32> to vector<16x128xbf16>
    %c0_28 = arith.constant 0 : index
    %c0_29 = arith.constant 0 : index
    %c0_30 = arith.constant 0 : index
    %84 = vector.load %arg7[%c0_28, %c0_29, %c0_30] : memref<2x128x128xbf16, #tpu.memory_space<vmem>>, vector<1x128x128xbf16>
    %85 = vector.shape_cast %84 : vector<1x128x128xbf16> to vector<128x128xbf16>
    %cst_31 = arith.constant dense<0.000000e+00> : vector<16x128xf32>
    %86 = tpu.matmul %83, %85, %cst_31 {dimension_numbers = #tpu.dot_dimension_numbers<[1], [0], [0], [1], [0, 0, 1, 1], [], []>} : vector<16x128xbf16>, vector<128x128xbf16>, vector<16x128xf32> -> vector<16x128xf32>
    %c0_32 = arith.constant 0 : index
    %c0_33 = arith.constant 0 : index
    %c0_34 = arith.constant 0 : index
    %87 = vector.load %arg8[%c0_32, %c0_33, %c0_34] : memref<2x1x128xf32, #tpu.memory_space<vmem>>, vector<1x1x128xf32>
    %88 = vector.shape_cast %87 : vector<1x1x128xf32> to vector<1x128xf32>
    %89 = vector.broadcast %88 : vector<1x128xf32> to vector<16x128xf32>
    %90 = arith.addf %86, %89 : vector<16x128xf32>
    %91 = arith.addf %90, %22 : vector<16x128xf32>
    %c0_35 = arith.constant 0 : index
    %c0_36 = arith.constant 0 : index
    %c0_37 = arith.constant 0 : index
    %92 = vector.load %arg9[%c0_35, %c0_36, %c0_37] : memref<2x1x128xf32, #tpu.memory_space<vmem>>, vector<1x1x128xf32>
    %93 = vector.shape_cast %92 : vector<1x1x128xf32> to vector<1x128xf32>
    %c0_38 = arith.constant 0 : index
    %c0_39 = arith.constant 0 : index
    %c0_40 = arith.constant 0 : index
    %94 = vector.load %arg10[%c0_38, %c0_39, %c0_40] : memref<2x1x128xf32, #tpu.memory_space<vmem>>, vector<1x1x128xf32>
    %95 = vector.shape_cast %94 : vector<1x1x128xf32> to vector<1x128xf32>
    %cst_41 = arith.constant dense<0.000000e+00> : vector<16xf32>
    %96 = vector.multi_reduction <add>, %91, %cst_41 [1] : vector<16x128xf32> to vector<16xf32>
    %97 = vector.shape_cast %96 : vector<16xf32> to vector<16x1xf32>
    %cst_42 = arith.constant 1.280000e+02 : f32
    %98 = vector.broadcast %cst_42 : f32 to vector<16x1xf32>
    %99 = arith.divf %97, %98 : vector<16x1xf32>
    %100 = vector.broadcast %99 : vector<16x1xf32> to vector<16x128xf32>
    %101 = arith.subf %91, %100 : vector<16x128xf32>
    %102 = arith.mulf %101, %101 : vector<16x128xf32>
    %cst_43 = arith.constant dense<0.000000e+00> : vector<16xf32>
    %103 = vector.multi_reduction <add>, %102, %cst_43 [1] : vector<16x128xf32> to vector<16xf32>
    %104 = vector.shape_cast %103 : vector<16xf32> to vector<16x1xf32>
    %cst_44 = arith.constant 1.280000e+02 : f32
    %105 = vector.broadcast %cst_44 : f32 to vector<16x1xf32>
    %106 = arith.divf %104, %105 : vector<16x1xf32>
    %cst_45 = arith.constant 9.99999996E-13 : f32
    %107 = vector.broadcast %cst_45 : f32 to vector<16x1xf32>
    %108 = arith.addf %106, %107 : vector<16x1xf32>
    %109 = math.rsqrt %108 : vector<16x1xf32>
    %110 = vector.broadcast %109 : vector<16x1xf32> to vector<16x128xf32>
    %111 = arith.mulf %101, %110 : vector<16x128xf32>
    %112 = vector.broadcast %93 : vector<1x128xf32> to vector<16x128xf32>
    %113 = arith.mulf %111, %112 : vector<16x128xf32>
    %114 = vector.broadcast %95 : vector<1x128xf32> to vector<16x128xf32>
    %115 = arith.addf %113, %114 : vector<16x128xf32>
    %116 = arith.truncf %115 : vector<16x128xf32> to vector<16x128xbf16>
    %c0_46 = arith.constant 0 : index
    %c0_47 = arith.constant 0 : index
    %c0_48 = arith.constant 0 : index
    %117 = vector.load %arg11[%c0_46, %c0_47, %c0_48] : memref<2x128x256xbf16, #tpu.memory_space<vmem>>, vector<1x128x256xbf16>
    %118 = vector.shape_cast %117 : vector<1x128x256xbf16> to vector<128x256xbf16>
    %cst_49 = arith.constant dense<0.000000e+00> : vector<16x256xf32>
    %119 = tpu.matmul %116, %118, %cst_49 {dimension_numbers = #tpu.dot_dimension_numbers<[1], [0], [0], [1], [0, 0, 1, 1], [], []>} : vector<16x128xbf16>, vector<128x256xbf16>, vector<16x256xf32> -> vector<16x256xf32>
    %c0_50 = arith.constant 0 : index
    %c0_51 = arith.constant 0 : index
    %c0_52 = arith.constant 0 : index
    %120 = vector.load %arg12[%c0_50, %c0_51, %c0_52] : memref<2x1x256xf32, #tpu.memory_space<vmem>>, vector<1x1x256xf32>
    %121 = vector.shape_cast %120 : vector<1x1x256xf32> to vector<1x256xf32>
    %122 = vector.broadcast %121 : vector<1x256xf32> to vector<16x256xf32>
    %123 = arith.addf %119, %122 : vector<16x256xf32>
    %cst_53 = arith.constant 5.000000e-01 : f32
    %124 = vector.broadcast %cst_53 : f32 to vector<16x256xf32>
    %125 = arith.mulf %124, %123 : vector<16x256xf32>
    %cst_54 = arith.constant 4.471500e-02 : f32
    %126 = vector.broadcast %cst_54 : f32 to vector<16x256xf32>
    %127 = arith.mulf %126, %123 : vector<16x256xf32>
    %128 = arith.mulf %127, %123 : vector<16x256xf32>
    %129 = arith.mulf %128, %123 : vector<16x256xf32>
    %130 = arith.addf %123, %129 : vector<16x256xf32>
    %cst_55 = arith.constant 0.797884583 : f32
    %131 = vector.broadcast %cst_55 : f32 to vector<16x256xf32>
    %132 = arith.mulf %131, %130 : vector<16x256xf32>
    %133 = math.tanh %132 : vector<16x256xf32>
    %cst_56 = arith.constant 1.000000e+00 : f32
    %134 = vector.broadcast %cst_56 : f32 to vector<16x256xf32>
    %135 = arith.addf %134, %133 : vector<16x256xf32>
    %136 = arith.mulf %125, %135 : vector<16x256xf32>
    %137 = arith.truncf %136 : vector<16x256xf32> to vector<16x256xbf16>
    %c0_57 = arith.constant 0 : index
    %c0_58 = arith.constant 0 : index
    %c0_59 = arith.constant 0 : index
    %138 = vector.load %arg13[%c0_57, %c0_58, %c0_59] : memref<2x256x128xbf16, #tpu.memory_space<vmem>>, vector<1x256x128xbf16>
    %139 = vector.shape_cast %138 : vector<1x256x128xbf16> to vector<256x128xbf16>
    %cst_60 = arith.constant dense<0.000000e+00> : vector<16x128xf32>
    %140 = tpu.matmul %137, %139, %cst_60 {dimension_numbers = #tpu.dot_dimension_numbers<[1], [0], [0], [1], [0, 0, 1, 1], [], []>} : vector<16x256xbf16>, vector<256x128xbf16>, vector<16x128xf32> -> vector<16x128xf32>
    %c0_61 = arith.constant 0 : index
    %c0_62 = arith.constant 0 : index
    %c0_63 = arith.constant 0 : index
    %141 = vector.load %arg14[%c0_61, %c0_62, %c0_63] : memref<2x1x128xf32, #tpu.memory_space<vmem>>, vector<1x1x128xf32>
    %142 = vector.shape_cast %141 : vector<1x1x128xf32> to vector<1x128xf32>
    %143 = vector.broadcast %142 : vector<1x128xf32> to vector<16x128xf32>
    %144 = arith.addf %140, %143 : vector<16x128xf32>
    %145 = arith.addf %144, %115 : vector<16x128xf32>
    %c0_64 = arith.constant 0 : index
    %c0_65 = arith.constant 0 : index
    %c0_66 = arith.constant 0 : index
    %146 = vector.load %arg15[%c0_64, %c0_65, %c0_66] : memref<2x1x128xf32, #tpu.memory_space<vmem>>, vector<1x1x128xf32>
    %147 = vector.shape_cast %146 : vector<1x1x128xf32> to vector<1x128xf32>
    %c0_67 = arith.constant 0 : index
    %c0_68 = arith.constant 0 : index
    %c0_69 = arith.constant 0 : index
    %148 = vector.load %arg16[%c0_67, %c0_68, %c0_69] : memref<2x1x128xf32, #tpu.memory_space<vmem>>, vector<1x1x128xf32>
    %149 = vector.shape_cast %148 : vector<1x1x128xf32> to vector<1x128xf32>
    %cst_70 = arith.constant dense<0.000000e+00> : vector<16xf32>
    %150 = vector.multi_reduction <add>, %145, %cst_70 [1] : vector<16x128xf32> to vector<16xf32>
    %151 = vector.shape_cast %150 : vector<16xf32> to vector<16x1xf32>
    %cst_71 = arith.constant 1.280000e+02 : f32
    %152 = vector.broadcast %cst_71 : f32 to vector<16x1xf32>
    %153 = arith.divf %151, %152 : vector<16x1xf32>
    %154 = vector.broadcast %153 : vector<16x1xf32> to vector<16x128xf32>
    %155 = arith.subf %145, %154 : vector<16x128xf32>
    %156 = arith.mulf %155, %155 : vector<16x128xf32>
    %cst_72 = arith.constant dense<0.000000e+00> : vector<16xf32>
    %157 = vector.multi_reduction <add>, %156, %cst_72 [1] : vector<16x128xf32> to vector<16xf32>
    %158 = vector.shape_cast %157 : vector<16xf32> to vector<16x1xf32>
    %cst_73 = arith.constant 1.280000e+02 : f32
    %159 = vector.broadcast %cst_73 : f32 to vector<16x1xf32>
    %160 = arith.divf %158, %159 : vector<16x1xf32>
    %cst_74 = arith.constant 9.99999996E-13 : f32
    %161 = vector.broadcast %cst_74 : f32 to vector<16x1xf32>
    %162 = arith.addf %160, %161 : vector<16x1xf32>
    %163 = math.rsqrt %162 : vector<16x1xf32>
    %164 = vector.broadcast %163 : vector<16x1xf32> to vector<16x128xf32>
    %165 = arith.mulf %155, %164 : vector<16x128xf32>
    %166 = vector.broadcast %147 : vector<1x128xf32> to vector<16x128xf32>
    %167 = arith.mulf %165, %166 : vector<16x128xf32>
    %168 = vector.broadcast %149 : vector<1x128xf32> to vector<16x128xf32>
    %169 = arith.addf %167, %168 : vector<16x128xf32>
    %170 = arith.truncf %169 : vector<16x128xf32> to vector<16x128xbf16>
    %c1 = arith.constant 1 : index
    %c0_75 = arith.constant 0 : index
    %c0_76 = arith.constant 0 : index
    %171 = vector.load %arg5[%c1, %c0_75, %c0_76] : memref<2x128x384xbf16, #tpu.memory_space<vmem>>, vector<1x128x384xbf16>
    %172 = vector.shape_cast %171 : vector<1x128x384xbf16> to vector<128x384xbf16>
    %cst_77 = arith.constant dense<0.000000e+00> : vector<16x384xf32>
    %173 = tpu.matmul %170, %172, %cst_77 {dimension_numbers = #tpu.dot_dimension_numbers<[1], [0], [0], [1], [0, 0, 1, 1], [], []>} : vector<16x128xbf16>, vector<128x384xbf16>, vector<16x384xf32> -> vector<16x384xf32>
    %c1_78 = arith.constant 1 : index
    %c0_79 = arith.constant 0 : index
    %c0_80 = arith.constant 0 : index
    %174 = vector.load %arg6[%c1_78, %c0_79, %c0_80] : memref<2x1x384xf32, #tpu.memory_space<vmem>>, vector<1x1x384xf32>
    %175 = vector.shape_cast %174 : vector<1x1x384xf32> to vector<1x384xf32>
    %176 = vector.broadcast %175 : vector<1x384xf32> to vector<16x384xf32>
    %177 = arith.addf %173, %176 : vector<16x384xf32>
    %178 = vector.extract_strided_slice %177 {offsets = [0, 0], sizes = [8, 64], strides = [1, 1]} : vector<16x384xf32> to vector<8x64xf32>
    %179 = arith.truncf %178 : vector<8x64xf32> to vector<8x64xbf16>
    %180 = vector.extract_strided_slice %177 {offsets = [0, 128], sizes = [8, 64], strides = [1, 1]} : vector<16x384xf32> to vector<8x64xf32>
    %181 = arith.truncf %180 : vector<8x64xf32> to vector<8x64xbf16>
    %182 = vector.extract_strided_slice %177 {offsets = [0, 256], sizes = [8, 64], strides = [1, 1]} : vector<16x384xf32> to vector<8x64xf32>
    %183 = arith.truncf %182 : vector<8x64xf32> to vector<8x64xbf16>
    %cst_81 = arith.constant dense<0.000000e+00> : vector<8x8xf32>
    %184 = tpu.matmul %179, %181, %cst_81 {dimension_numbers = #tpu.dot_dimension_numbers<[1], [1], [0], [0], [0, 0, 1, 0], [], []>} : vector<8x64xbf16>, vector<8x64xbf16>, vector<8x8xf32> -> vector<8x8xf32>
    %185 = vector.extract_strided_slice %177 {offsets = [0, 64], sizes = [8, 64], strides = [1, 1]} : vector<16x384xf32> to vector<8x64xf32>
    %186 = arith.truncf %185 : vector<8x64xf32> to vector<8x64xbf16>
    %187 = vector.extract_strided_slice %177 {offsets = [0, 192], sizes = [8, 64], strides = [1, 1]} : vector<16x384xf32> to vector<8x64xf32>
    %188 = arith.truncf %187 : vector<8x64xf32> to vector<8x64xbf16>
    %189 = vector.extract_strided_slice %177 {offsets = [0, 320], sizes = [8, 64], strides = [1, 1]} : vector<16x384xf32> to vector<8x64xf32>
    %190 = arith.truncf %189 : vector<8x64xf32> to vector<8x64xbf16>
    %cst_82 = arith.constant dense<0.000000e+00> : vector<8x8xf32>
    %191 = tpu.matmul %186, %188, %cst_82 {dimension_numbers = #tpu.dot_dimension_numbers<[1], [1], [0], [0], [0, 0, 1, 0], [], []>} : vector<8x64xbf16>, vector<8x64xbf16>, vector<8x8xf32> -> vector<8x8xf32>
    %192 = vector.extract_strided_slice %177 {offsets = [8, 0], sizes = [8, 64], strides = [1, 1]} : vector<16x384xf32> to vector<8x64xf32>
    %193 = arith.truncf %192 : vector<8x64xf32> to vector<8x64xbf16>
    %194 = vector.extract_strided_slice %177 {offsets = [8, 128], sizes = [8, 64], strides = [1, 1]} : vector<16x384xf32> to vector<8x64xf32>
    %195 = arith.truncf %194 : vector<8x64xf32> to vector<8x64xbf16>
    %196 = vector.extract_strided_slice %177 {offsets = [8, 256], sizes = [8, 64], strides = [1, 1]} : vector<16x384xf32> to vector<8x64xf32>
    %197 = arith.truncf %196 : vector<8x64xf32> to vector<8x64xbf16>
    %cst_83 = arith.constant dense<0.000000e+00> : vector<8x8xf32>
    %198 = tpu.matmul %193, %195, %cst_83 {dimension_numbers = #tpu.dot_dimension_numbers<[1], [1], [0], [0], [0, 0, 1, 0], [], []>} : vector<8x64xbf16>, vector<8x64xbf16>, vector<8x8xf32> -> vector<8x8xf32>
    %199 = vector.extract_strided_slice %177 {offsets = [8, 64], sizes = [8, 64], strides = [1, 1]} : vector<16x384xf32> to vector<8x64xf32>
    %200 = arith.truncf %199 : vector<8x64xf32> to vector<8x64xbf16>
    %201 = vector.extract_strided_slice %177 {offsets = [8, 192], sizes = [8, 64], strides = [1, 1]} : vector<16x384xf32> to vector<8x64xf32>
    %202 = arith.truncf %201 : vector<8x64xf32> to vector<8x64xbf16>
    %203 = vector.extract_strided_slice %177 {offsets = [8, 320], sizes = [8, 64], strides = [1, 1]} : vector<16x384xf32> to vector<8x64xf32>
    %204 = arith.truncf %203 : vector<8x64xf32> to vector<8x64xbf16>
    %cst_84 = arith.constant dense<0.000000e+00> : vector<8x8xf32>
    %205 = tpu.matmul %200, %202, %cst_84 {dimension_numbers = #tpu.dot_dimension_numbers<[1], [1], [0], [0], [0, 0, 1, 0], [], []>} : vector<8x64xbf16>, vector<8x64xbf16>, vector<8x8xf32> -> vector<8x8xf32>
    %206 = tpu.concatenate %184, %191, %198, %205 in 0 : vector<8x8xf32>, vector<8x8xf32>, vector<8x8xf32>, vector<8x8xf32> -> vector<32x8xf32>
    %207 = arith.addf %206, %23 : vector<32x8xf32>
    %cst_85 = arith.constant dense<0xFF800000> : vector<32xf32>
    %208 = vector.multi_reduction <maximumf>, %207, %cst_85 [1] : vector<32x8xf32> to vector<32xf32>
    %209 = vector.shape_cast %208 : vector<32xf32> to vector<32x1xf32>
    %210 = vector.broadcast %209 : vector<32x1xf32> to vector<32x8xf32>
    %211 = arith.subf %207, %210 : vector<32x8xf32>
    %212 = math.exp %211 : vector<32x8xf32>
    %cst_86 = arith.constant dense<0.000000e+00> : vector<32xf32>
    %213 = vector.multi_reduction <add>, %212, %cst_86 [1] : vector<32x8xf32> to vector<32xf32>
    %214 = vector.shape_cast %213 : vector<32xf32> to vector<32x1xf32>
    %215 = vector.broadcast %214 : vector<32x1xf32> to vector<32x8xf32>
    %216 = arith.divf %212, %215 : vector<32x8xf32>
    %217 = arith.truncf %216 : vector<32x8xf32> to vector<32x8xbf16>
    %218 = vector.extract_strided_slice %217 {offsets = [0, 0], sizes = [8, 8], strides = [1, 1]} : vector<32x8xbf16> to vector<8x8xbf16>
    %cst_87 = arith.constant dense<0.000000e+00> : vector<8x64xf32>
    %219 = tpu.matmul %218, %183, %cst_87 {dimension_numbers = #tpu.dot_dimension_numbers<[1], [0], [0], [1], [0, 0, 1, 1], [], []>} : vector<8x8xbf16>, vector<8x64xbf16>, vector<8x64xf32> -> vector<8x64xf32>
    %220 = vector.extract_strided_slice %217 {offsets = [8, 0], sizes = [8, 8], strides = [1, 1]} : vector<32x8xbf16> to vector<8x8xbf16>
    %cst_88 = arith.constant dense<0.000000e+00> : vector<8x64xf32>
    %221 = tpu.matmul %220, %190, %cst_88 {dimension_numbers = #tpu.dot_dimension_numbers<[1], [0], [0], [1], [0, 0, 1, 1], [], []>} : vector<8x8xbf16>, vector<8x64xbf16>, vector<8x64xf32> -> vector<8x64xf32>
    %222 = tpu.concatenate %219, %221 in 1 : vector<8x64xf32>, vector<8x64xf32> -> vector<8x128xf32>
    %223 = vector.extract_strided_slice %217 {offsets = [16, 0], sizes = [8, 8], strides = [1, 1]} : vector<32x8xbf16> to vector<8x8xbf16>
    %cst_89 = arith.constant dense<0.000000e+00> : vector<8x64xf32>
    %224 = tpu.matmul %223, %197, %cst_89 {dimension_numbers = #tpu.dot_dimension_numbers<[1], [0], [0], [1], [0, 0, 1, 1], [], []>} : vector<8x8xbf16>, vector<8x64xbf16>, vector<8x64xf32> -> vector<8x64xf32>
    %225 = vector.extract_strided_slice %217 {offsets = [24, 0], sizes = [8, 8], strides = [1, 1]} : vector<32x8xbf16> to vector<8x8xbf16>
    %cst_90 = arith.constant dense<0.000000e+00> : vector<8x64xf32>
    %226 = tpu.matmul %225, %204, %cst_90 {dimension_numbers = #tpu.dot_dimension_numbers<[1], [0], [0], [1], [0, 0, 1, 1], [], []>} : vector<8x8xbf16>, vector<8x64xbf16>, vector<8x64xf32> -> vector<8x64xf32>
    %227 = tpu.concatenate %224, %226 in 1 : vector<8x64xf32>, vector<8x64xf32> -> vector<8x128xf32>
    %228 = tpu.concatenate %222, %227 in 0 : vector<8x128xf32>, vector<8x128xf32> -> vector<16x128xf32>
    %229 = arith.truncf %228 : vector<16x128xf32> to vector<16x128xbf16>
    %c1_91 = arith.constant 1 : index
    %c0_92 = arith.constant 0 : index
    %c0_93 = arith.constant 0 : index
    %230 = vector.load %arg7[%c1_91, %c0_92, %c0_93] : memref<2x128x128xbf16, #tpu.memory_space<vmem>>, vector<1x128x128xbf16>
    %231 = vector.shape_cast %230 : vector<1x128x128xbf16> to vector<128x128xbf16>
    %cst_94 = arith.constant dense<0.000000e+00> : vector<16x128xf32>
    %232 = tpu.matmul %229, %231, %cst_94 {dimension_numbers = #tpu.dot_dimension_numbers<[1], [0], [0], [1], [0, 0, 1, 1], [], []>} : vector<16x128xbf16>, vector<128x128xbf16>, vector<16x128xf32> -> vector<16x128xf32>
    %c1_95 = arith.constant 1 : index
    %c0_96 = arith.constant 0 : index
    %c0_97 = arith.constant 0 : index
    %233 = vector.load %arg8[%c1_95, %c0_96, %c0_97] : memref<2x1x128xf32, #tpu.memory_space<vmem>>, vector<1x1x128xf32>
    %234 = vector.shape_cast %233 : vector<1x1x128xf32> to vector<1x128xf32>
    %235 = vector.broadcast %234 : vector<1x128xf32> to vector<16x128xf32>
    %236 = arith.addf %232, %235 : vector<16x128xf32>
    %237 = arith.addf %236, %169 : vector<16x128xf32>
    %c1_98 = arith.constant 1 : index
    %c0_99 = arith.constant 0 : index
    %c0_100 = arith.constant 0 : index
    %238 = vector.load %arg9[%c1_98, %c0_99, %c0_100] : memref<2x1x128xf32, #tpu.memory_space<vmem>>, vector<1x1x128xf32>
    %239 = vector.shape_cast %238 : vector<1x1x128xf32> to vector<1x128xf32>
    %c1_101 = arith.constant 1 : index
    %c0_102 = arith.constant 0 : index
    %c0_103 = arith.constant 0 : index
    %240 = vector.load %arg10[%c1_101, %c0_102, %c0_103] : memref<2x1x128xf32, #tpu.memory_space<vmem>>, vector<1x1x128xf32>
    %241 = vector.shape_cast %240 : vector<1x1x128xf32> to vector<1x128xf32>
    %cst_104 = arith.constant dense<0.000000e+00> : vector<16xf32>
    %242 = vector.multi_reduction <add>, %237, %cst_104 [1] : vector<16x128xf32> to vector<16xf32>
    %243 = vector.shape_cast %242 : vector<16xf32> to vector<16x1xf32>
    %cst_105 = arith.constant 1.280000e+02 : f32
    %244 = vector.broadcast %cst_105 : f32 to vector<16x1xf32>
    %245 = arith.divf %243, %244 : vector<16x1xf32>
    %246 = vector.broadcast %245 : vector<16x1xf32> to vector<16x128xf32>
    %247 = arith.subf %237, %246 : vector<16x128xf32>
    %248 = arith.mulf %247, %247 : vector<16x128xf32>
    %cst_106 = arith.constant dense<0.000000e+00> : vector<16xf32>
    %249 = vector.multi_reduction <add>, %248, %cst_106 [1] : vector<16x128xf32> to vector<16xf32>
    %250 = vector.shape_cast %249 : vector<16xf32> to vector<16x1xf32>
    %cst_107 = arith.constant 1.280000e+02 : f32
    %251 = vector.broadcast %cst_107 : f32 to vector<16x1xf32>
    %252 = arith.divf %250, %251 : vector<16x1xf32>
    %cst_108 = arith.constant 9.99999996E-13 : f32
    %253 = vector.broadcast %cst_108 : f32 to vector<16x1xf32>
    %254 = arith.addf %252, %253 : vector<16x1xf32>
    %255 = math.rsqrt %254 : vector<16x1xf32>
    %256 = vector.broadcast %255 : vector<16x1xf32> to vector<16x128xf32>
    %257 = arith.mulf %247, %256 : vector<16x128xf32>
    %258 = vector.broadcast %239 : vector<1x128xf32> to vector<16x128xf32>
    %259 = arith.mulf %257, %258 : vector<16x128xf32>
    %260 = vector.broadcast %241 : vector<1x128xf32> to vector<16x128xf32>
    %261 = arith.addf %259, %260 : vector<16x128xf32>
    %262 = arith.truncf %261 : vector<16x128xf32> to vector<16x128xbf16>
    %c1_109 = arith.constant 1 : index
    %c0_110 = arith.constant 0 : index
    %c0_111 = arith.constant 0 : index
    %263 = vector.load %arg11[%c1_109, %c0_110, %c0_111] : memref<2x128x256xbf16, #tpu.memory_space<vmem>>, vector<1x128x256xbf16>
    %264 = vector.shape_cast %263 : vector<1x128x256xbf16> to vector<128x256xbf16>
    %cst_112 = arith.constant dense<0.000000e+00> : vector<16x256xf32>
    %265 = tpu.matmul %262, %264, %cst_112 {dimension_numbers = #tpu.dot_dimension_numbers<[1], [0], [0], [1], [0, 0, 1, 1], [], []>} : vector<16x128xbf16>, vector<128x256xbf16>, vector<16x256xf32> -> vector<16x256xf32>
    %c1_113 = arith.constant 1 : index
    %c0_114 = arith.constant 0 : index
    %c0_115 = arith.constant 0 : index
    %266 = vector.load %arg12[%c1_113, %c0_114, %c0_115] : memref<2x1x256xf32, #tpu.memory_space<vmem>>, vector<1x1x256xf32>
    %267 = vector.shape_cast %266 : vector<1x1x256xf32> to vector<1x256xf32>
    %268 = vector.broadcast %267 : vector<1x256xf32> to vector<16x256xf32>
    %269 = arith.addf %265, %268 : vector<16x256xf32>
    %cst_116 = arith.constant 5.000000e-01 : f32
    %270 = vector.broadcast %cst_116 : f32 to vector<16x256xf32>
    %271 = arith.mulf %270, %269 : vector<16x256xf32>
    %cst_117 = arith.constant 4.471500e-02 : f32
    %272 = vector.broadcast %cst_117 : f32 to vector<16x256xf32>
    %273 = arith.mulf %272, %269 : vector<16x256xf32>
    %274 = arith.mulf %273, %269 : vector<16x256xf32>
    %275 = arith.mulf %274, %269 : vector<16x256xf32>
    %276 = arith.addf %269, %275 : vector<16x256xf32>
    %cst_118 = arith.constant 0.797884583 : f32
    %277 = vector.broadcast %cst_118 : f32 to vector<16x256xf32>
    %278 = arith.mulf %277, %276 : vector<16x256xf32>
    %279 = math.tanh %278 : vector<16x256xf32>
    %cst_119 = arith.constant 1.000000e+00 : f32
    %280 = vector.broadcast %cst_119 : f32 to vector<16x256xf32>
    %281 = arith.addf %280, %279 : vector<16x256xf32>
    %282 = arith.mulf %271, %281 : vector<16x256xf32>
    %283 = arith.truncf %282 : vector<16x256xf32> to vector<16x256xbf16>
    %c1_120 = arith.constant 1 : index
    %c0_121 = arith.constant 0 : index
    %c0_122 = arith.constant 0 : index
    %284 = vector.load %arg13[%c1_120, %c0_121, %c0_122] : memref<2x256x128xbf16, #tpu.memory_space<vmem>>, vector<1x256x128xbf16>
    %285 = vector.shape_cast %284 : vector<1x256x128xbf16> to vector<256x128xbf16>
    %cst_123 = arith.constant dense<0.000000e+00> : vector<16x128xf32>
    %286 = tpu.matmul %283, %285, %cst_123 {dimension_numbers = #tpu.dot_dimension_numbers<[1], [0], [0], [1], [0, 0, 1, 1], [], []>} : vector<16x256xbf16>, vector<256x128xbf16>, vector<16x128xf32> -> vector<16x128xf32>
    %c1_124 = arith.constant 1 : index
    %c0_125 = arith.constant 0 : index
    %c0_126 = arith.constant 0 : index
    %287 = vector.load %arg14[%c1_124, %c0_125, %c0_126] : memref<2x1x128xf32, #tpu.memory_space<vmem>>, vector<1x1x128xf32>
    %288 = vector.shape_cast %287 : vector<1x1x128xf32> to vector<1x128xf32>
    %289 = vector.broadcast %288 : vector<1x128xf32> to vector<16x128xf32>
    %290 = arith.addf %286, %289 : vector<16x128xf32>
    %291 = arith.addf %290, %261 : vector<16x128xf32>
    %c1_127 = arith.constant 1 : index
    %c0_128 = arith.constant 0 : index
    %c0_129 = arith.constant 0 : index
    %292 = vector.load %arg15[%c1_127, %c0_128, %c0_129] : memref<2x1x128xf32, #tpu.memory_space<vmem>>, vector<1x1x128xf32>
    %293 = vector.shape_cast %292 : vector<1x1x128xf32> to vector<1x128xf32>
    %c1_130 = arith.constant 1 : index
    %c0_131 = arith.constant 0 : index
    %c0_132 = arith.constant 0 : index
    %294 = vector.load %arg16[%c1_130, %c0_131, %c0_132] : memref<2x1x128xf32, #tpu.memory_space<vmem>>, vector<1x1x128xf32>
    %295 = vector.shape_cast %294 : vector<1x1x128xf32> to vector<1x128xf32>
    %cst_133 = arith.constant dense<0.000000e+00> : vector<16xf32>
    %296 = vector.multi_reduction <add>, %291, %cst_133 [1] : vector<16x128xf32> to vector<16xf32>
    %297 = vector.shape_cast %296 : vector<16xf32> to vector<16x1xf32>
    %cst_134 = arith.constant 1.280000e+02 : f32
    %298 = vector.broadcast %cst_134 : f32 to vector<16x1xf32>
    %299 = arith.divf %297, %298 : vector<16x1xf32>
    %300 = vector.broadcast %299 : vector<16x1xf32> to vector<16x128xf32>
    %301 = arith.subf %291, %300 : vector<16x128xf32>
    %302 = arith.mulf %301, %301 : vector<16x128xf32>
    %cst_135 = arith.constant dense<0.000000e+00> : vector<16xf32>
    %303 = vector.multi_reduction <add>, %302, %cst_135 [1] : vector<16x128xf32> to vector<16xf32>
    %304 = vector.shape_cast %303 : vector<16xf32> to vector<16x1xf32>
    %cst_136 = arith.constant 1.280000e+02 : f32
    %305 = vector.broadcast %cst_136 : f32 to vector<16x1xf32>
    %306 = arith.divf %304, %305 : vector<16x1xf32>
    %cst_137 = arith.constant 9.99999996E-13 : f32
    %307 = vector.broadcast %cst_137 : f32 to vector<16x1xf32>
    %308 = arith.addf %306, %307 : vector<16x1xf32>
    %309 = math.rsqrt %308 : vector<16x1xf32>
    %310 = vector.broadcast %309 : vector<16x1xf32> to vector<16x128xf32>
    %311 = arith.mulf %301, %310 : vector<16x128xf32>
    %312 = vector.broadcast %293 : vector<1x128xf32> to vector<16x128xf32>
    %313 = arith.mulf %311, %312 : vector<16x128xf32>
    %314 = vector.broadcast %295 : vector<1x128xf32> to vector<16x128xf32>
    %315 = arith.addf %313, %314 : vector<16x128xf32>
    %316 = vector.extract_strided_slice %315 {offsets = [0, 0], sizes = [1, 128], strides = [1, 1]} : vector<16x128xf32> to vector<1x128xf32>
    %317 = vector.extract_strided_slice %315 {offsets = [8, 0], sizes = [1, 128], strides = [1, 1]} : vector<16x128xf32> to vector<1x128xf32>
    %318 = tpu.concatenate %316, %317 in 0 : vector<1x128xf32>, vector<1x128xf32> -> vector<2x128xf32>
    %319 = arith.truncf %318 : vector<2x128xf32> to vector<2x128xbf16>
    %c0_138 = arith.constant 0 : index
    %c0_139 = arith.constant 0 : index
    %320 = vector.load %arg17[%c0_138, %c0_139] : memref<128x128xbf16, #tpu.memory_space<vmem>>, vector<128x128xbf16>
    %cst_140 = arith.constant dense<0.000000e+00> : vector<2x128xf32>
    %321 = tpu.matmul %319, %320, %cst_140 {dimension_numbers = #tpu.dot_dimension_numbers<[1], [0], [0], [1], [0, 0, 1, 1], [], []>} : vector<2x128xbf16>, vector<128x128xbf16>, vector<2x128xf32> -> vector<2x128xf32>
    %c0_141 = arith.constant 0 : index
    %c0_142 = arith.constant 0 : index
    %322 = vector.load %arg18[%c0_141, %c0_142] : memref<1x128xf32, #tpu.memory_space<vmem>>, vector<1x128xf32>
    %323 = vector.broadcast %322 : vector<1x128xf32> to vector<2x128xf32>
    %324 = arith.addf %321, %323 : vector<2x128xf32>
    %c0_143 = arith.constant 0 : index
    %c0_144 = arith.constant 0 : index
    %325 = vector.load %arg19[%c0_143, %c0_144] : memref<2x128xf32, #tpu.memory_space<vmem>>, vector<2x128xf32>
    tpu.vector_store %arg19[%c0_143, %c0_144], %324 {strides = array<i32>} : memref<2x128xf32, #tpu.memory_space<vmem>>, vector<2x128xf32>,
    return
  }
  func.func @transform_0(%arg0: i32) -> (i32, i32) {
    %c0_i32 = arith.constant 0 : i32
    %c0_i32_0 = arith.constant 0 : i32
    %c0_i32_1 = arith.constant 0 : i32
    return %c0_i32, %c0_i32_0 : i32, i32
  }
  func.func @transform_1(%arg0: i32) -> (i32, i32) {
    %c0_i32 = arith.constant 0 : i32
    %c0_i32_0 = arith.constant 0 : i32
    %c0_i32_1 = arith.constant 0 : i32
    return %c0_i32, %c0_i32_0 : i32, i32
  }
  func.func @transform_2(%arg0: i32) -> (i32, i32) {
    %c0_i32 = arith.constant 0 : i32
    %c0_i32_0 = arith.constant 0 : i32
    %c0_i32_1 = arith.constant 0 : i32
    return %c0_i32, %c0_i32_0 : i32, i32
  }
  func.func @transform_3(%arg0: i32) -> (i32, i32) {
    %c0_i32 = arith.constant 0 : i32
    %c0_i32_0 = arith.constant 0 : i32
    %c0_i32_1 = arith.constant 0 : i32
    return %c0_i32, %c0_i32_0 : i32, i32
  }
  func.func @transform_4(%arg0: i32) -> (i32, i32, i32) {
    %c0_i32 = arith.constant 0 : i32
    %c0_i32_0 = arith.constant 0 : i32
    %c0_i32_1 = arith.constant 0 : i32
    %c0_i32_2 = arith.constant 0 : i32
    return %c0_i32, %c0_i32_0, %c0_i32_1 : i32, i32, i32
  }
  func.func @transform_5(%arg0: i32) -> (i32, i32, i32) {
    %c0_i32 = arith.constant 0 : i32
    %c0_i32_0 = arith.constant 0 : i32
    %c0_i32_1 = arith.constant 0 : i32
    %c0_i32_2 = arith.constant 0 : i32
    return %c0_i32, %c0_i32_0, %c0_i32_1 : i32, i32, i32
  }
  func.func @transform_6(%arg0: i32) -> (i32, i32, i32) {
    %c0_i32 = arith.constant 0 : i32
    %c0_i32_0 = arith.constant 0 : i32
    %c0_i32_1 = arith.constant 0 : i32
    %c0_i32_2 = arith.constant 0 : i32
    return %c0_i32, %c0_i32_0, %c0_i32_1 : i32, i32, i32
  }
  func.func @transform_7(%arg0: i32) -> (i32, i32, i32) {
    %c0_i32 = arith.constant 0 : i32
    %c0_i32_0 = arith.constant 0 : i32
    %c0_i32_1 = arith.constant 0 : i32
    %c0_i32_2 = arith.constant 0 : i32
    return %c0_i32, %c0_i32_0, %c0_i32_1 : i32, i32, i32
  }
  func.func @transform_8(%arg0: i32) -> (i32, i32, i32) {
    %c0_i32 = arith.constant 0 : i32
    %c0_i32_0 = arith.constant 0 : i32
    %c0_i32_1 = arith.constant 0 : i32
    %c0_i32_2 = arith.constant 0 : i32
    return %c0_i32, %c0_i32_0, %c0_i32_1 : i32, i32, i32
  }
  func.func @transform_9(%arg0: i32) -> (i32, i32, i32) {
    %c0_i32 = arith.constant 0 : i32
    %c0_i32_0 = arith.constant 0 : i32
    %c0_i32_1 = arith.constant 0 : i32
    %c0_i32_2 = arith.constant 0 : i32
    return %c0_i32, %c0_i32_0, %c0_i32_1 : i32, i32, i32
  }
  func.func @transform_10(%arg0: i32) -> (i32, i32, i32) {
    %c0_i32 = arith.constant 0 : i32
    %c0_i32_0 = arith.constant 0 : i32
    %c0_i32_1 = arith.constant 0 : i32
    %c0_i32_2 = arith.constant 0 : i32
    return %c0_i32, %c0_i32_0, %c0_i32_1 : i32, i32, i32
  }
  func.func @transform_11(%arg0: i32) -> (i32, i32, i32) {
    %c0_i32 = arith.constant 0 : i32
    %c0_i32_0 = arith.constant 0 : i32
    %c0_i32_1 = arith.constant 0 : i32
    %c0_i32_2 = arith.constant 0 : i32
    return %c0_i32, %c0_i32_0, %c0_i32_1 : i32, i32, i32
  }
  func.func @transform_12(%arg0: i32) -> (i32, i32, i32) {
    %c0_i32 = arith.constant 0 : i32
    %c0_i32_0 = arith.constant 0 : i32
    %c0_i32_1 = arith.constant 0 : i32
    %c0_i32_2 = arith.constant 0 : i32
    return %c0_i32, %c0_i32_0, %c0_i32_1 : i32, i32, i32
  }
  func.func @transform_13(%arg0: i32) -> (i32, i32, i32) {
    %c0_i32 = arith.constant 0 : i32
    %c0_i32_0 = arith.constant 0 : i32
    %c0_i32_1 = arith.constant 0 : i32
    %c0_i32_2 = arith.constant 0 : i32
    return %c0_i32, %c0_i32_0, %c0_i32_1 : i32, i32, i32
  }
  func.func @transform_14(%arg0: i32) -> (i32, i32, i32) {
    %c0_i32 = arith.constant 0 : i32
    %c0_i32_0 = arith.constant 0 : i32
    %c0_i32_1 = arith.constant 0 : i32
    %c0_i32_2 = arith.constant 0 : i32
    return %c0_i32, %c0_i32_0, %c0_i32_1 : i32, i32, i32
  }
  func.func @transform_15(%arg0: i32) -> (i32, i32, i32) {
    %c0_i32 = arith.constant 0 : i32
    %c0_i32_0 = arith.constant 0 : i32
    %c0_i32_1 = arith.constant 0 : i32
    %c0_i32_2 = arith.constant 0 : i32
    return %c0_i32, %c0_i32_0, %c0_i32_1 : i32, i32, i32
  }
  func.func @transform_16(%arg0: i32) -> (i32, i32) {
    %c0_i32 = arith.constant 0 : i32
    %c0_i32_0 = arith.constant 0 : i32
    %c0_i32_1 = arith.constant 0 : i32
    return %c0_i32, %c0_i32_0 : i32, i32
  }
  func.func @transform_17(%arg0: i32) -> (i32, i32) {
    %c0_i32 = arith.constant 0 : i32
    %c0_i32_0 = arith.constant 0 : i32
    %c0_i32_1 = arith.constant 0 : i32
    return %c0_i32, %c0_i32_0 : i32, i32
  }
  func.func @transform_18(%arg0: i32) -> (i32, i32) {
    %c0_i32 = arith.constant 0 : i32
    %c0_i32_0 = arith.constant 0 : i32
    %c0_i32_1 = arith.constant 0 : i32
    return %c0_i32, %c0_i32_0 : i32, i32
  }
}

</mosaic_0001>

<llo_original>
// kernel: distilbert_classifier_forward.1
$region0: #{distilbert_classifier_forward.1}
  #allocation0 [shape = 'u32[]', space=smem, size = 0x4, offset = 0x4, fixed_abs, tag = 'smem constant byte address 0x4 - core index']
  #allocation1 [shape = 'u32[144,128]{1,0:T(1,128)}', space=vmem, size = 0x12000, scoped, tag = 'internal scratch']
  %s0 = inlined_call_operand.vmem [shape: f32[16,128], index: 0, kind: input, shape index: {}]
  %s1 = inlined_call_operand.vmem [shape: f32[1,128], index: 1, kind: input, shape index: {}]
  %s2 = inlined_call_operand.vmem [shape: f32[1,128], index: 2, kind: input, shape index: {}]
  %s3 = inlined_call_operand.vmem [shape: f32[32,8], index: 3, kind: input, shape index: {}]
  %s4 = inlined_call_operand.hbm [shape: bf16[2,128,384], index: 4, kind: input, shape index: {}]
  %s5 = inlined_call_operand.vmem [shape: f32[2,1,384], index: 5, kind: input, shape index: {}]
  %s6 = inlined_call_operand.hbm [shape: bf16[2,128,128], index: 6, kind: input, shape index: {}]
  %s7 = inlined_call_operand.vmem [shape: f32[2,1,128], index: 7, kind: input, shape index: {}]
  %s8 = inlined_call_operand.vmem [shape: f32[2,1,128], index: 8, kind: input, shape index: {}]
  %s9 = inlined_call_operand.vmem [shape: f32[2,1,128], index: 9, kind: input, shape index: {}]
  %s10 = inlined_call_operand.vmem [shape: bf16[2,128,256], index: 10, kind: input, shape index: {}]
  %s11 = inlined_call_operand.vmem [shape: f32[2,1,256], index: 11, kind: input, shape index: {}]
  %s12 = inlined_call_operand.hbm [shape: bf16[2,256,128], index: 12, kind: input, shape index: {}]
  %s13 = inlined_call_operand.vmem [shape: f32[2,1,128], index: 13, kind: input, shape index: {}]
  %s14 = inlined_call_operand.vmem [shape: f32[2,1,128], index: 14, kind: input, shape index: {}]
  %s15 = inlined_call_operand.vmem [shape: f32[2,1,128], index: 15, kind: input, shape index: {}]
  %s16 = inlined_call_operand.hbm [shape: bf16[128,128], index: 16, kind: input, shape index: {}]
  %s17 = inlined_call_operand.vmem [shape: f32[1,128], index: 17, kind: input, shape index: {}]
  %s18 = inlined_call_operand.hbm [shape: f32[2,128], index: 18, kind: output, shape index: {}]
  %s19 = sld [smem:[#allocation0]]
  $region98: #{distilbert_classifier_forward.1} parent=0
    _
  %s21 = ssub.s32 1, %s19
  %s22 = scalar_select 0, %s21, %s19
  $region1: #{distilbert_classifier_forward.1} parent=0
    #allocation2 [shape = 'u8[196608]{0}', space=vmem, size = 0x30000, scoped, tag = 'input window, operand 4, single buffered']
    #allocation3 [shape = 's32[1]{0}', space=sflag, size = 0x4, scoped, tag = 'scoped memory for distilbert_classifier_forward.1']
    #allocation4 [shape = 's32[1]{0}', space=sflag, size = 0x4, scoped, tag = 'scoped memory for distilbert_classifier_forward.1']
    #allocation5 [shape = 'u8[65536]{0}', space=vmem, size = 0x10000, scoped, tag = 'input window, operand 6, single buffered']
    #allocation6 [shape = 's32[1]{0}', space=sflag, size = 0x4, scoped, tag = 'scoped memory for distilbert_classifier_forward.1']
    #allocation7 [shape = 'u8[131072]{0}', space=vmem, size = 0x20000, scoped, tag = 'input window, operand 12, single buffered']
    #allocation8 [shape = 'u8[32768]{0}', space=vmem, size = 0x8000, scoped, tag = 'input window, operand 16, single buffered']
    #allocation9 [shape = 's32[1]{0}', space=sflag, size = 0x4, scoped, tag = 'scoped memory for distilbert_classifier_forward.1']
    #allocation10 [shape = 'u8[1024]{0}', space=vmem, size = 0x400, scoped, tag = 'output window, operand 0, single buffered']
    %23 = vsyncpa [#allocation3], 0
    %24 = vsyncpa [#allocation6], 0
    %25 = vsyncpa [#allocation9], 0
    %26 = vsyncpa [#allocation4], 0
    // Predicated region
    $region2: #{distilbert_classifier_forward.1} parent=1 // pred_check
      _
    $region3: #{distilbert_classifier_forward.1} parent=1 // pred_check_branch
      %28 = sbr.rel (0) target = $region5
    $region4: #{distilbert_classifier_forward.1} parent=1 // pred_region
      _
    $region5: #{distilbert_classifier_forward.1} parent=1 // pred_fallthru
      _
    // Predicated region
    $region6: #{distilbert_classifier_forward.1} parent=1 // pred_check
      _
    $region7: #{distilbert_classifier_forward.1} parent=1 // pred_check_branch
      %30 = sbr.rel (0) target = $region9
    $region8: #{distilbert_classifier_forward.1} parent=1 // pred_region
      _
    $region9: #{distilbert_classifier_forward.1} parent=1 // pred_fallthru
      _
    // Predicated region
    $region10: #{distilbert_classifier_forward.1} parent=1 // pred_check
      _
    $region11: #{distilbert_classifier_forward.1} parent=1 // pred_check_branch
      %32 = sbr.rel (0) target = $region13
    $region12: #{distilbert_classifier_forward.1} parent=1 // pred_region
      _
    $region13: #{distilbert_classifier_forward.1} parent=1 // pred_fallthru
      _
    // Predicated region
    $region14: #{distilbert_classifier_forward.1} parent=1 // pred_check
      _
    $region15: #{distilbert_classifier_forward.1} parent=1 // pred_check_branch
      %34 = sbr.rel (0) target = $region17
    $region16: #{distilbert_classifier_forward.1} parent=1 // pred_region
      _
    $region17: #{distilbert_classifier_forward.1} parent=1 // pred_fallthru
      _
    // Predicated region
    $region18: #{distilbert_classifier_forward.1} parent=1 // pred_check
      _
    $region19: #{distilbert_classifier_forward.1} parent=1 // pred_check_branch
      %36 = sbr.rel (0) target = $region21
    $region20: #{distilbert_classifier_forward.1} parent=1 // pred_region
      %s38 = ssub.s32 6144, 6144
      %39 = vsyncadd [#allocation3], %s38
      %s40 = sshll.u32 [#allocation2], 4
      %s41 = int_to_ptr.vmem [resolvable:$true] %s40
      %46 = dma.hbm_to_vmem [thread:$0]  %s4, 6144, %s41, [#allocation3], 192, 192, 12
    $region21: #{distilbert_classifier_forward.1} parent=1 // pred_fallthru
      _
    // Predicated region
    $region22: #{distilbert_classifier_forward.1} parent=1 // pred_check
      _
    $region23: #{distilbert_classifier_forward.1} parent=1 // pred_check_branch
      %48 = sbr.rel (0) target = $region25
    $region24: #{distilbert_classifier_forward.1} parent=1 // pred_region
      _
    $region25: #{distilbert_classifier_forward.1} parent=1 // pred_fallthru
      _
    // Predicated region
    $region26: #{distilbert_classifier_forward.1} parent=1 // pred_check
      _
    $region27: #{distilbert_classifier_forward.1} parent=1 // pred_check_branch
      %50 = sbr.rel (0) target = $region29
    $region28: #{distilbert_classifier_forward.1} parent=1 // pred_region
      %s52 = ssub.s32 2048, 2048
      %53 = vsyncadd [#allocation6], %s52
      %s54 = sshll.u32 [#allocation5], 4
      %s55 = int_to_ptr.vmem [resolvable:$true] %s54
      %60 = dma.hbm_to_vmem [thread:$0]  %s6, 2048, %s55, [#allocation6], 64, 64, 4
    $region29: #{distilbert_classifier_forward.1} parent=1 // pred_fallthru
      _
    // Predicated region
    $region30: #{distilbert_classifier_forward.1} parent=1 // pred_check
      _
    $region31: #{distilbert_classifier_forward.1} parent=1 // pred_check_branch
      %62 = sbr.rel (0) target = $region33
    $region32: #{distilbert_classifier_forward.1} parent=1 // pred_region
      _
    $region33: #{distilbert_classifier_forward.1} parent=1 // pred_fallthru
      _
    // Predicated region
    $region34: #{distilbert_classifier_forward.1} parent=1 // pred_check
      _
    $region35: #{distilbert_classifier_forward.1} parent=1 // pred_check_branch
      %64 = sbr.rel (0) target = $region37
    $region36: #{distilbert_classifier_forward.1} parent=1 // pred_region
      _
    $region37: #{distilbert_classifier_forward.1} parent=1 // pred_fallthru
      _
    // Predicated region
    $region38: #{distilbert_classifier_forward.1} parent=1 // pred_check
      _
    $region39: #{distilbert_classifier_forward.1} parent=1 // pred_check_branch
      %66 = sbr.rel (0) target = $region41
    $region40: #{distilbert_classifier_forward.1} parent=1 // pred_region
      _
    $region41: #{distilbert_classifier_forward.1} parent=1 // pred_fallthru
      _
    // Predicated region
    $region42: #{distilbert_classifier_forward.1} parent=1 // pred_check
      _
    $region43: #{distilbert_classifier_forward.1} parent=1 // pred_check_branch
      %68 = sbr.rel (0) target = $region45
    $region44: #{distilbert_classifier_forward.1} parent=1 // pred_region
      _
    $region45: #{distilbert_classifier_forward.1} parent=1 // pred_fallthru
      _
    // Predicated region
    $region46: #{distilbert_classifier_forward.1} parent=1 // pred_check
      _
    $region47: #{distilbert_classifier_forward.1} parent=1 // pred_check_branch
      %70 = sbr.rel (0) target = $region49
    $region48: #{distilbert_classifier_forward.1} parent=1 // pred_region
      _
    $region49: #{distilbert_classifier_forward.1} parent=1 // pred_fallthru
      _
    // Predicated region
    $region50: #{distilbert_classifier_forward.1} parent=1 // pred_check
      _
    $region51: #{distilbert_classifier_forward.1} parent=1 // pred_check_branch
      %72 = sbr.rel (0) target = $region53
    $region52: #{distilbert_classifier_forward.1} parent=1 // pred_region
      %s74 = ssub.s32 4096, 4096
      %75 = vsyncadd [#allocation6], %s74
      %s76 = sshll.u32 [#allocation7], 4
      %s77 = int_to_ptr.vmem [resolvable:$true] %s76
      %82 = dma.hbm_to_vmem [thread:$0]  %s12, 4096, %s77, [#allocation6], 64, 64, 4
    $region53: #{distilbert_classifier_forward.1} parent=1 // pred_fallthru
      _
    // Predicated region
    $region54: #{distilbert_classifier_forward.1} parent=1 // pred_check
      _
    $region55: #{distilbert_classifier_forward.1} parent=1 // pred_check_branch
      %84 = sbr.rel (0) target = $region57
    $region56: #{distilbert_classifier_forward.1} parent=1 // pred_region
      _
    $region57: #{distilbert_classifier_forward.1} parent=1 // pred_fallthru
      _
    // Predicated region
    $region58: #{distilbert_classifier_forward.1} parent=1 // pred_check
      _
    $region59: #{distilbert_classifier_forward.1} parent=1 // pred_check_branch
      %86 = sbr.rel (0) target = $region61
    $region60: #{distilbert_classifier_forward.1} parent=1 // pred_region
      _
    $region61: #{distilbert_classifier_forward.1} parent=1 // pred_fallthru
      _
    // Predicated region
    $region62: #{distilbert_classifier_forward.1} parent=1 // pred_check
      _
    $region63: #{distilbert_classifier_forward.1} parent=1 // pred_check_branch
      %88 = sbr.rel (0) target = $region65
    $region64: #{distilbert_classifier_forward.1} parent=1 // pred_region
      _
    $region65: #{distilbert_classifier_forward.1} parent=1 // pred_fallthru
      _
    // Predicated region
    $region66: #{distilbert_classifier_forward.1} parent=1 // pred_check
      _
    $region67: #{distilbert_classifier_forward.1} parent=1 // pred_check_branch
      %90 = sbr.rel (0) target = $region69
    $region68: #{distilbert_classifier_forward.1} parent=1 // pred_region
      %s92 = ssub.s32 1024, 1024
      %93 = vsyncadd [#allocation9], %s92
      %s94 = sshll.u32 [#allocation8], 4
      %s95 = int_to_ptr.vmem [resolvable:$true] %s94
      %100 = dma.hbm_to_vmem [thread:$0]  %s16, 1024, %s95, [#allocation9], 64, 64, 4
    $region69: #{distilbert_classifier_forward.1} parent=1 // pred_fallthru
      _
    // Predicated region
    $region70: #{distilbert_classifier_forward.1} parent=1 // pred_check
      _
    $region71: #{distilbert_classifier_forward.1} parent=1 // pred_check_branch
      %102 = sbr.rel (0) target = $region73
    $region72: #{distilbert_classifier_forward.1} parent=1 // pred_region
      _
    $region73: #{distilbert_classifier_forward.1} parent=1 // pred_fallthru
      _
    // Predicated region
    $region74: #{distilbert_classifier_forward.1} parent=1 // pred_check
      _
    $region75: #{distilbert_classifier_forward.1} parent=1 // pred_check_branch
      %104 = sbr.rel (0) target = $region77
    $region76: #{distilbert_classifier_forward.1} parent=1 // pred_region
      %105 = dma.done [#allocation3], 6144
    $region77: #{distilbert_classifier_forward.1} parent=1 // pred_fallthru
      _
    // Predicated region
    $region78: #{distilbert_classifier_forward.1} parent=1 // pred_check
      _
    $region79: #{distilbert_classifier_forward.1} parent=1 // pred_check_branch
      %107 = sbr.rel (0) target = $region81
    $region80: #{distilbert_classifier_forward.1} parent=1 // pred_region
      %108 = dma.done [#allocation6], 2048
    $region81: #{distilbert_classifier_forward.1} parent=1 // pred_fallthru
      _
    // Predicated region
    $region82: #{distilbert_classifier_forward.1} parent=1 // pred_check
      _
    $region83: #{distilbert_classifier_forward.1} parent=1 // pred_check_branch
      %110 = sbr.rel (0) target = $region85
    $region84: #{distilbert_classifier_forward.1} parent=1 // pred_region
      %111 = dma.done [#allocation6], 4096
    $region85: #{distilbert_classifier_forward.1} parent=1 // pred_fallthru
      _
    // Predicated region
    $region86: #{distilbert_classifier_forward.1} parent=1 // pred_check
      _
    $region87: #{distilbert_classifier_forward.1} parent=1 // pred_check_branch
      %113 = sbr.rel (0) target = $region89
    $region88: #{distilbert_classifier_forward.1} parent=1 // pred_region
      %114 = dma.done [#allocation9], 1024
    $region89: #{distilbert_classifier_forward.1} parent=1 // pred_fallthru
      _
    %v116 = vld [vmem:[%s0] sm:$0xff]
    %v117 = vld [vmem:[%s0 + $0x8] sm:$0xff]
    %v118 = vld [vmem:[%s1] sm:$0x1]
    %v119 = vld [vmem:[%s2] sm:$0x1]
    %120 = vadd.xlane.f32.xlu0 %v116
    %v121 = vpop.xlane.xlu0 %120
    %122 = vadd.xlane.f32.xlu0 %v117
    %v123 = vpop.xlane.xlu0 %122
    %v124 = vrcp.pop 128.0
    %v125 = vmul.f32 %v121, %v124
    %v126 = vmul.f32 %v123, %v124
    %v127 = vsub.f32 %v116, %v125
    %v128 = vsub.f32 %v117, %v126
    %v129 = vmul.f32 %v127, %v127
    %v130 = vmul.f32 %v128, %v128
    %131 = vadd.xlane.f32.xlu0 %v129
    %v132 = vpop.xlane.xlu0 %131
    %133 = vadd.xlane.f32.xlu0 %v130
    %v134 = vpop.xlane.xlu0 %133
    %v135 = vmul.f32 %v132, %v124
    %v136 = vmul.f32 %v134, %v124
    %v137 = vadd.f32 %v135, 1e-12
    %v138 = vadd.f32 %v136, 1e-12
    %v139 = vrsqrt.pop %v137
    %v140 = vrsqrt.pop %v138
    %v141 = vmul.f32 %v127, %v139
    %v142 = vmul.f32 %v128, %v140
    %v144 = vlaneseq
    %v145 = vshrl.u32 %v144, 7
    %v146 = vsub.s32 0, %v145
    %v147 = vrot.slane %v118, %v146
    %v149 = vmul.f32 %v141, %v147
    %v150 = vmul.f32 %v142, %v147
    %v152 = vlaneseq
    %v153 = vshrl.u32 %v152, 7
    %v154 = vsub.s32 0, %v153
    %v155 = vrot.slane %v119, %v154
    %v157 = vadd.f32 %v149, %v155
    %v158 = vadd.f32 %v150, %v155
    %v159 = vld [vmem:[%s3] sm:$0xff]
    %v160 = vld [vmem:[%s3 + $0x8] sm:$0xff]
    %v161 = vld [vmem:[%s3 + $0x10] sm:$0xff]
    %v162 = vld [vmem:[%s3 + $0x18] sm:$0xff]
    %v163 = vpack.c.bf16 %v158, %v157
    %v164 = vld [vmem:[#allocation2] sm:$0xff]
    %v165 = vld [vmem:[#allocation2 + $0x8] sm:$0xf]
    %v166 = vld [vmem:[#allocation2 + $0xc] sm:$0xff]
    %v167 = vld [vmem:[#allocation2 + $0x14] sm:$0xf]
    %v168 = vld [vmem:[#allocation2 + $0x18] sm:$0xff]
    %v169 = vld [vmem:[#allocation2 + $0x20] sm:$0xf]
    %v170 = vld [vmem:[#allocation2 + $0x24] sm:$0xff]
    %v171 = vld [vmem:[#allocation2 + $0x2c] sm:$0xf]
    %v172 = vld [vmem:[#allocation2 + $0x30] sm:$0xff]
    %v173 = vld [vmem:[#allocation2 + $0x38] sm:$0xf]
    %v174 = vld [vmem:[#allocation2 + $0x3c] sm:$0xff]
    %v175 = vld [vmem:[#allocation2 + $0x44] sm:$0xf]
    %v176 = vld [vmem:[#allocation2 + $0x48] sm:$0xff]
    %v177 = vld [vmem:[#allocation2 + $0x50] sm:$0xf]
    %v178 = vld [vmem:[#allocation2 + $0x54] sm:$0xff]
    %v179 = vld [vmem:[#allocation2 + $0x5c] sm:$0xf]
    %v180 = vld [vmem:[#allocation2 + $0x60] sm:$0xff]
    %v181 = vld [vmem:[#allocation2 + $0x68] sm:$0xf]
    %v182 = vld [vmem:[#allocation2 + $0x6c] sm:$0xff]
    %v183 = vld [vmem:[#allocation2 + $0x74] sm:$0xf]
    %v184 = vld [vmem:[#allocation2 + $0x78] sm:$0xff]
    %v185 = vld [vmem:[#allocation2 + $0x80] sm:$0xf]
    %v186 = vld [vmem:[#allocation2 + $0x84] sm:$0xff]
    %v187 = vld [vmem:[#allocation2 + $0x8c] sm:$0xf]
    %v188 = vld [vmem:[#allocation2 + $0x90] sm:$0xff]
    %v189 = vld [vmem:[#allocation2 + $0x98] sm:$0xf]
    %v190 = vld [vmem:[#allocation2 + $0x9c] sm:$0xff]
    %v191 = vld [vmem:[#allocation2 + $0xa4] sm:$0xf]
    %v192 = vld [vmem:[#allocation2 + $0xa8] sm:$0xff]
    %v193 = vld [vmem:[#allocation2 + $0xb0] sm:$0xf]
    %v194 = vld [vmem:[#allocation2 + $0xb4] sm:$0xff]
    %v195 = vld [vmem:[#allocation2 + $0xbc] sm:$0xf]
    %v196 = vld [vmem:[%s5] sm:$0x7]
    %v198 = vlaneseq
    %v199 = vshrl.u32 %v198, 7
    %v200 = vsub.s32 0, %v199
    %v201 = vrot.slane %v196, %v200
    %v202 = vlaneseq
    %v203 = vshrl.u32 %v202, 7
    %v204 = vsub.s32 1, %v203
    %v205 = vrot.slane %v196, %v204
    %v206 = vlaneseq
    %v207 = vshrl.u32 %v206, 7
    %v208 = vsub.s32 2, %v207
    %v209 = vrot.slane %v196, %v208
    %v245 = vunpack.c.l.b16 %v164
    %v246 = vunpack.c.h.b16 %v164
    %v247 = vunpack.c.l.b16 %v165
    %v248 = vunpack.c.l.b16 %v166
    %v249 = vunpack.c.h.b16 %v166
    %v250 = vunpack.c.l.b16 %v167
    %v251 = vunpack.c.l.b16 %v168
    %v252 = vunpack.c.h.b16 %v168
    %v253 = vunpack.c.l.b16 %v169
    %v254 = vunpack.c.l.b16 %v170
    %v255 = vunpack.c.h.b16 %v170
    %v256 = vunpack.c.l.b16 %v171
    %v257 = vunpack.c.l.b16 %v172
    %v258 = vunpack.c.h.b16 %v172
    %v259 = vunpack.c.l.b16 %v173
    %v260 = vunpack.c.l.b16 %v174
    %v261 = vunpack.c.h.b16 %v174
    %v262 = vunpack.c.l.b16 %v175
    %v263 = vunpack.c.l.b16 %v176
    %v264 = vunpack.c.h.b16 %v176
    %v265 = vunpack.c.l.b16 %v177
    %v266 = vunpack.c.l.b16 %v178
    %v267 = vunpack.c.h.b16 %v178
    %v268 = vunpack.c.l.b16 %v179
    %v269 = vunpack.c.l.b16 %v180
    %v270 = vunpack.c.h.b16 %v180
    %v271 = vunpack.c.l.b16 %v181
    %v272 = vunpack.c.l.b16 %v182
    %v273 = vunpack.c.h.b16 %v182
    %v274 = vunpack.c.l.b16 %v183
    %v275 = vunpack.c.l.b16 %v184
    %v276 = vunpack.c.h.b16 %v184
    %v277 = vunpack.c.l.b16 %v185
    %v278 = vunpack.c.l.b16 %v186
    %v279 = vunpack.c.h.b16 %v186
    %v280 = vunpack.c.l.b16 %v187
    %v281 = vunpack.c.l.b16 %v188
    %v282 = vunpack.c.h.b16 %v188
    %v283 = vunpack.c.l.b16 %v189
    %v284 = vunpack.c.l.b16 %v190
    %v285 = vunpack.c.h.b16 %v190
    %v286 = vunpack.c.l.b16 %v191
    %v287 = vunpack.c.l.b16 %v192
    %v288 = vunpack.c.h.b16 %v192
    %v289 = vunpack.c.l.b16 %v193
    %v290 = vunpack.c.l.b16 %v194
    %v291 = vunpack.c.h.b16 %v194
    %v292 = vunpack.c.l.b16 %v195
    %v293 = vpack.c.b16 %v248, %v245
    %v294 = vpack.c.b16 %v249, %v246
    %v295 = vpack.c.b16 %v250, %v247
    %v296 = vpack.c.b16 %v254, %v251
    %v297 = vpack.c.b16 %v255, %v252
    %v298 = vpack.c.b16 %v256, %v253
    %v299 = vpack.c.b16 %v260, %v257
    %v300 = vpack.c.b16 %v261, %v258
    %v301 = vpack.c.b16 %v262, %v259
    %v302 = vpack.c.b16 %v266, %v263
    %v303 = vpack.c.b16 %v267, %v264
    %v304 = vpack.c.b16 %v268, %v265
    %v305 = vpack.c.b16 %v272, %v269
    %v306 = vpack.c.b16 %v273, %v270
    %v307 = vpack.c.b16 %v274, %v271
    %v308 = vpack.c.b16 %v278, %v275
    %v309 = vpack.c.b16 %v279, %v276
    %v310 = vpack.c.b16 %v280, %v277
    %v311 = vpack.c.b16 %v284, %v281
    %v312 = vpack.c.b16 %v285, %v282
    %v313 = vpack.c.b16 %v286, %v283
    %v314 = vpack.c.b16 %v290, %v287
    %v315 = vpack.c.b16 %v291, %v288
    %v316 = vpack.c.b16 %v292, %v289
    %341 = vmatprep.subr.bf16.mxu0 %v315
    %342 = vmatpush1.bf16.msra.mxu0 %v314
    %343 = vmatprep.subr.bf16.mxu0 %v312
    %344 = vmatpush1.bf16.msra.mxu0 %v311
    %345 = vmatprep.subr.bf16.mxu0 %v309
    %346 = vmatpush1.bf16.msra.mxu0 %v308
    %347 = vmatprep.subr.bf16.mxu0 %v306
    %348 = vmatpush1.bf16.msra.mxu0 %v305
    %349 = vmatprep.subr.bf16.mxu0 %v303
    %350 = vmatpush1.bf16.msra.mxu0 %v302
    %351 = vmatprep.subr.bf16.mxu0 %v300
    %352 = vmatpush1.bf16.msra.mxu0 %v299
    %353 = vmatprep.subr.bf16.mxu0 %v297
    %354 = vmatpush1.bf16.msra.mxu0 %v296
    %355 = vmatprep.subr.bf16.mxu0 %v294
    %356 = vmatpush1.bf16.msra.mxu0 %v293
    %357 = vmatprep.subr.bf16.mxu0 0
    %358 = vmatpush2.bf16.msra.mxu0 0
    %359 = vmatprep.subr.bf16.mxu0 0
    %360 = vmatpush2.bf16.msra.mxu0 0
    %361 = vmatprep.subr.bf16.mxu0 0
    %362 = vmatpush2.bf16.msra.mxu0 0
    %363 = vmatprep.subr.bf16.mxu0 0
    %364 = vmatpush2.bf16.msra.mxu0 0
    %365 = vmatprep.subr.bf16.mxu0 0
    %366 = vmatpush2.bf16.msra.mxu0 0
    %367 = vmatprep.subr.bf16.mxu0 0
    %368 = vmatpush2.bf16.msra.mxu0 0
    %369 = vmatprep.subr.bf16.mxu0 0
    %370 = vmatpush2.bf16.msra.mxu0 0
    %371 = vmatprep.subr.bf16.mxu0 0
    %372 = vmatpush2.bf16.msra.mxu0 0
    %373 = vmatprep.mubr.bf16.mxu0 0
    %374 = vmatmul.mubr.bf16.gmra.mxu0 %v163
    %v375 = vpop.f32.mrf.mxu0
    %v376 = vadd.f32 %v201, %v375
    %v377 = vpop.f32.mrf.mxu0
    %v378 = vadd.f32 %v205, %v377
    %v379 = vpop.f32.mrf.mxu0
    %v380 = vadd.f32 %v201, %v379
    %v381 = vpop.f32.mrf.mxu0
    %v382 = vadd.f32 %v205, %v381
    %383 = vdwg.mxu0
    %384 = vmatprep.subr.bf16.mxu0 0
    %385 = vmatpush1.bf16.msra.mxu0 %v316
    %386 = vmatprep.subr.bf16.mxu0 0
    %387 = vmatpush1.bf16.msra.mxu0 %v313
    %388 = vmatprep.subr.bf16.mxu0 0
    %389 = vmatpush1.bf16.msra.mxu0 %v310
    %390 = vmatprep.subr.bf16.mxu0 0
    %391 = vmatpush1.bf16.msra.mxu0 %v307
    %392 = vmatprep.subr.bf16.mxu0 0
    %393 = vmatpush1.bf16.msra.mxu0 %v304
    %394 = vmatprep.subr.bf16.mxu0 0
    %395 = vmatpush1.bf16.msra.mxu0 %v301
    %396 = vmatprep.subr.bf16.mxu0 0
    %397 = vmatpush1.bf16.msra.mxu0 %v298
    %398 = vmatprep.subr.bf16.mxu0 0
    %399 = vmatpush1.bf16.msra.mxu0 %v295
    %400 = vmatprep.subr.bf16.mxu0 0
    %401 = vmatpush2.bf16.msra.mxu0 0
    %402 = vmatprep.subr.bf16.mxu0 0
    %403 = vmatpush2.bf16.msra.mxu0 0
    %404 = vmatprep.subr.bf16.mxu0 0
    %405 = vmatpush2.bf16.msra.mxu0 0
    %406 = vmatprep.subr.bf16.mxu0 0
    %407 = vmatpush2.bf16.msra.mxu0 0
    %408 = vmatprep.subr.bf16.mxu0 0
    %409 = vmatpush2.bf16.msra.mxu0 0
    %410 = vmatprep.subr.bf16.mxu0 0
    %411 = vmatpush2.bf16.msra.mxu0 0
    %412 = vmatprep.subr.bf16.mxu0 0
    %413 = vmatpush2.bf16.msra.mxu0 0
    %414 = vmatprep.subr.bf16.mxu0 0
    %415 = vmatpush2.bf16.msra.mxu0 0
    %416 = vmatprep.mubr.bf16.mxu0 0
    %417 = vmatmul.mubr.bf16.gmra.mxu0 %v163
    %v418 = vpop.f32.mrf.mxu0
    %v419 = vadd.f32 %v209, %v418
    %v420 = vpop.f32.mrf.mxu0
    %v421 = vpop.f32.mrf.mxu0
    %v422 = vadd.f32 %v209, %v421
    %v423 = vpop.f32.mrf.mxu0
    %424 = vdwg.mxu0
    %v425 = vpack.c.bf16 %v376, %v376
    %v426 = vpack.c.bf16 %v378, %v378
    %v427 = vpack.c.bf16 %v419, %v419
    %vm428 = vcmask 523264
    %v430 = vsel %vm428, %v425, 0
    %v433 = vsel %vm428, %v426, 0
    %435 = vmatprep.subr.bf16.mxu0 0
    %436 = vmatpush1.bf16.xpose.msra.mxu0 0
    %437 = vmatprep.subr.bf16.mxu0 0
    %438 = vmatpush1.bf16.xpose.msra.mxu0 0
    %439 = vmatprep.subr.bf16.mxu0 0
    %440 = vmatpush1.bf16.xpose.msra.mxu0 0
    %441 = vmatprep.subr.bf16.mxu0 0
    %442 = vmatpush1.bf16.xpose.msra.mxu0 0
    %443 = vmatprep.subr.bf16.mxu0 0
    %444 = vmatpush1.bf16.xpose.msra.mxu0 0
    %445 = vmatprep.subr.bf16.mxu0 0
    %446 = vmatpush1.bf16.xpose.msra.mxu0 0
    %447 = vmatprep.subr.bf16.mxu0 0
    %448 = vmatpush1.bf16.xpose.msra.mxu0 0
    %449 = vmatprep.subr.bf16.mxu0 0
    %450 = vmatpush1.bf16.xpose.msra.mxu0 %v433
    %451 = vmatprep.subr.bf16.mxu0 0
    %452 = vmatpush2.bf16.xpose.msra.mxu0 0
    %453 = vmatprep.subr.bf16.mxu0 0
    %454 = vmatpush2.bf16.xpose.msra.mxu0 0
    %455 = vmatprep.subr.bf16.mxu0 0
    %456 = vmatpush2.bf16.xpose.msra.mxu0 0
    %457 = vmatprep.subr.bf16.mxu0 0
    %458 = vmatpush2.bf16.xpose.msra.mxu0 0
    %459 = vmatprep.subr.bf16.mxu0 0
    %460 = vmatpush2.bf16.xpose.msra.mxu0 0
    %461 = vmatprep.subr.bf16.mxu0 0
    %462 = vmatpush2.bf16.xpose.msra.mxu0 0
    %463 = vmatprep.subr.bf16.mxu0 0
    %464 = vmatpush2.bf16.xpose.msra.mxu0 0
    %465 = vmatprep.subr.bf16.mxu0 0
    %466 = vmatpush2.bf16.xpose.msra.mxu0 0
    %467 = vmatprep.mubr.bf16.mxu0 0
    %468 = vmatmul.mubr.bf16.gmra.mxu0 %v430
    %v469 = vpop.f32.mrf.mxu0
    %v470 = vadd.f32 0.0, %v469
    %v471 = vpop.f32.mrf.mxu0
    %v472 = vpop.f32.mrf.mxu0
    %v473 = vpop.f32.mrf.mxu0
    %474 = vdwg.mxu0
    %476 = vrot.lane.b32.xlu0 %v425, 64
    %v477 = vpop.permute.xlu0 %476
    %479 = vrot.lane.b32.xlu0 %v426, 64
    %v480 = vpop.permute.xlu0 %479
    %v482 = vsel %vm428, %v477, 0
    %v485 = vsel %vm428, %v480, 0
    %487 = vmatprep.subr.bf16.mxu0 0
    %488 = vmatpush1.bf16.xpose.msra.mxu0 0
    %489 = vmatprep.subr.bf16.mxu0 0
    %490 = vmatpush1.bf16.xpose.msra.mxu0 0
    %491 = vmatprep.subr.bf16.mxu0 0
    %492 = vmatpush1.bf16.xpose.msra.mxu0 0
    %493 = vmatprep.subr.bf16.mxu0 0
    %494 = vmatpush1.bf16.xpose.msra.mxu0 0
    %495 = vmatprep.subr.bf16.mxu0 0
    %496 = vmatpush1.bf16.xpose.msra.mxu0 0
    %497 = vmatprep.subr.bf16.mxu0 0
    %498 = vmatpush1.bf16.xpose.msra.mxu0 0
    %499 = vmatprep.subr.bf16.mxu0 0
    %500 = vmatpush1.bf16.xpose.msra.mxu0 0
    %501 = vmatprep.subr.bf16.mxu0 0
    %502 = vmatpush1.bf16.xpose.msra.mxu0 %v485
    %503 = vmatprep.subr.bf16.mxu0 0
    %504 = vmatpush2.bf16.xpose.msra.mxu0 0
    %505 = vmatprep.subr.bf16.mxu0 0
    %506 = vmatpush2.bf16.xpose.msra.mxu0 0
    %507 = vmatprep.subr.bf16.mxu0 0
    %508 = vmatpush2.bf16.xpose.msra.mxu0 0
    %509 = vmatprep.subr.bf16.mxu0 0
    %510 = vmatpush2.bf16.xpose.msra.mxu0 0
    %511 = vmatprep.subr.bf16.mxu0 0
    %512 = vmatpush2.bf16.xpose.msra.mxu0 0
    %513 = vmatprep.subr.bf16.mxu0 0
    %514 = vmatpush2.bf16.xpose.msra.mxu0 0
    %515 = vmatprep.subr.bf16.mxu0 0
    %516 = vmatpush2.bf16.xpose.msra.mxu0 0
    %517 = vmatprep.subr.bf16.mxu0 0
    %518 = vmatpush2.bf16.xpose.msra.mxu0 0
    %519 = vmatprep.mubr.bf16.mxu0 0
    %520 = vmatmul.mubr.bf16.gmra.mxu0 %v482
    %v521 = vpop.f32.mrf.mxu0
    %v522 = vadd.f32 0.0, %v521
    %v523 = vpop.f32.mrf.mxu0
    %v524 = vpop.f32.mrf.mxu0
    %v525 = vpop.f32.mrf.mxu0
    %526 = vdwg.mxu0
    %v527 = vpack.c.bf16 %v380, %v380
    %v528 = vpack.c.bf16 %v382, %v382
    %v529 = vpack.c.bf16 %v422, %v422
    %v531 = vsel %vm428, %v527, 0
    %v534 = vsel %vm428, %v528, 0
    %536 = vmatprep.subr.bf16.mxu0 0
    %537 = vmatpush1.bf16.xpose.msra.mxu0 0
    %538 = vmatprep.subr.bf16.mxu0 0
    %539 = vmatpush1.bf16.xpose.msra.mxu0 0
    %540 = vmatprep.subr.bf16.mxu0 0
    %541 = vmatpush1.bf16.xpose.msra.mxu0 0
    %542 = vmatprep.subr.bf16.mxu0 0
    %543 = vmatpush1.bf16.xpose.msra.mxu0 0
    %544 = vmatprep.subr.bf16.mxu0 0
    %545 = vmatpush1.bf16.xpose.msra.mxu0 0
    %546 = vmatprep.subr.bf16.mxu0 0
    %547 = vmatpush1.bf16.xpose.msra.mxu0 0
    %548 = vmatprep.subr.bf16.mxu0 0
    %549 = vmatpush1.bf16.xpose.msra.mxu0 0
    %550 = vmatprep.subr.bf16.mxu0 0
    %551 = vmatpush1.bf16.xpose.msra.mxu0 %v534
    %552 = vmatprep.subr.bf16.mxu0 0
    %553 = vmatpush2.bf16.xpose.msra.mxu0 0
    %554 = vmatprep.subr.bf16.mxu0 0
    %555 = vmatpush2.bf16.xpose.msra.mxu0 0
    %556 = vmatprep.subr.bf16.mxu0 0
    %557 = vmatpush2.bf16.xpose.msra.mxu0 0
    %558 = vmatprep.subr.bf16.mxu0 0
    %559 = vmatpush2.bf16.xpose.msra.mxu0 0
    %560 = vmatprep.subr.bf16.mxu0 0
    %561 = vmatpush2.bf16.xpose.msra.mxu0 0
    %562 = vmatprep.subr.bf16.mxu0 0
    %563 = vmatpush2.bf16.xpose.msra.mxu0 0
    %564 = vmatprep.subr.bf16.mxu0 0
    %565 = vmatpush2.bf16.xpose.msra.mxu0 0
    %566 = vmatprep.subr.bf16.mxu0 0
    %567 = vmatpush2.bf16.xpose.msra.mxu0 0
    %568 = vmatprep.mubr.bf16.mxu0 0
    %569 = vmatmul.mubr.bf16.gmra.mxu0 %v531
    %v570 = vpop.f32.mrf.mxu0
    %v571 = vadd.f32 0.0, %v570
    %v572 = vpop.f32.mrf.mxu0
    %v573 = vpop.f32.mrf.mxu0
    %v574 = vpop.f32.mrf.mxu0
    %575 = vdwg.mxu0
    %577 = vrot.lane.b32.xlu0 %v527, 64
    %v578 = vpop.permute.xlu0 %577
    %580 = vrot.lane.b32.xlu0 %v528, 64
    %v581 = vpop.permute.xlu0 %580
    %v583 = vsel %vm428, %v578, 0
    %v586 = vsel %vm428, %v581, 0
    %588 = vmatprep.subr.bf16.mxu0 0
    %589 = vmatpush1.bf16.xpose.msra.mxu0 0
    %590 = vmatprep.subr.bf16.mxu0 0
    %591 = vmatpush1.bf16.xpose.msra.mxu0 0
    %592 = vmatprep.subr.bf16.mxu0 0
    %593 = vmatpush1.bf16.xpose.msra.mxu0 0
    %594 = vmatprep.subr.bf16.mxu0 0
    %595 = vmatpush1.bf16.xpose.msra.mxu0 0
    %596 = vmatprep.subr.bf16.mxu0 0
    %597 = vmatpush1.bf16.xpose.msra.mxu0 0
    %598 = vmatprep.subr.bf16.mxu0 0
    %599 = vmatpush1.bf16.xpose.msra.mxu0 0
    %600 = vmatprep.subr.bf16.mxu0 0
    %601 = vmatpush1.bf16.xpose.msra.mxu0 0
    %602 = vmatprep.subr.bf16.mxu0 0
    %603 = vmatpush1.bf16.xpose.msra.mxu0 %v586
    %604 = vmatprep.subr.bf16.mxu0 0
    %605 = vmatpush2.bf16.xpose.msra.mxu0 0
    %606 = vmatprep.subr.bf16.mxu0 0
    %607 = vmatpush2.bf16.xpose.msra.mxu0 0
    %608 = vmatprep.subr.bf16.mxu0 0
    %609 = vmatpush2.bf16.xpose.msra.mxu0 0
    %610 = vmatprep.subr.bf16.mxu0 0
    %611 = vmatpush2.bf16.xpose.msra.mxu0 0
    %612 = vmatprep.subr.bf16.mxu0 0
    %613 = vmatpush2.bf16.xpose.msra.mxu0 0
    %614 = vmatprep.subr.bf16.mxu0 0
    %615 = vmatpush2.bf16.xpose.msra.mxu0 0
    %616 = vmatprep.subr.bf16.mxu0 0
    %617 = vmatpush2.bf16.xpose.msra.mxu0 0
    %618 = vmatprep.subr.bf16.mxu0 0
    %619 = vmatpush2.bf16.xpose.msra.mxu0 0
    %620 = vmatprep.mubr.bf16.mxu0 0
    %621 = vmatmul.mubr.bf16.gmra.mxu0 %v583
    %v622 = vpop.f32.mrf.mxu0
    %v623 = vadd.f32 0.0, %v622
    %v624 = vpop.f32.mrf.mxu0
    %v625 = vpop.f32.mrf.mxu0
    %v626 = vpop.f32.mrf.mxu0
    %627 = vdwg.mxu0
    %v628 = vadd.f32 %v470, %v159
    %v629 = vadd.f32 %v522, %v160
    %v630 = vadd.f32 %v571, %v161
    %v631 = vadd.f32 %v623, %v162
    %vm632 = vcmask 64512
    %v633 = vsel %vm632, %v628, -inf
    %634 = vmax.xlane.f32.xlu0 %v633
    %v635 = vpop.xlane.xlu0 %634
    %v636 = vsel %vm632, %v629, -inf
    %637 = vmax.xlane.f32.xlu0 %v636
    %v638 = vpop.xlane.xlu0 %637
    %v639 = vsel %vm632, %v630, -inf
    %640 = vmax.xlane.f32.xlu0 %v639
    %v641 = vpop.xlane.xlu0 %640
    %v642 = vsel %vm632, %v631, -inf
    %643 = vmax.xlane.f32.xlu0 %v642
    %v644 = vpop.xlane.xlu0 %643
    %v645 = vsub.f32 %v628, %v635
    %v646 = vsub.f32 %v629, %v638
    %v647 = vsub.f32 %v630, %v641
    %v648 = vsub.f32 %v631, %v644
    %v649 = vmul.f32 %v645, 1.442695
    %v650 = vpow.pop %v649
    %v651 = vmul.f32 %v646, 1.442695
    %v652 = vpow.pop %v651
    %v653 = vmul.f32 %v647, 1.442695
    %v654 = vpow.pop %v653
    %v655 = vmul.f32 %v648, 1.442695
    %v656 = vpow.pop %v655
    %v657 = vsel %vm632, %v650, 0.0
    %658 = vadd.xlane.f32.xlu0 %v657
    %v659 = vpop.xlane.xlu0 %658
    %v660 = vsel %vm632, %v652, 0.0
    %661 = vadd.xlane.f32.xlu0 %v660
    %v662 = vpop.xlane.xlu0 %661
    %v663 = vsel %vm632, %v654, 0.0
    %664 = vadd.xlane.f32.xlu0 %v663
    %v665 = vpop.xlane.xlu0 %664
    %v666 = vsel %vm632, %v656, 0.0
    %667 = vadd.xlane.f32.xlu0 %v666
    %v668 = vpop.xlane.xlu0 %667
    %v669 = vrcp.pop %v659
    %v670 = vmul.f32 %v650, %v669
    %v671 = vrcp.pop %v662
    %v672 = vmul.f32 %v652, %v671
    %v673 = vrcp.pop %v665
    %v674 = vmul.f32 %v654, %v673
    %v675 = vrcp.pop %v668
    %v676 = vmul.f32 %v656, %v675
    %v677 = vpack.c.bf16 %v672, %v670
    %v678 = vpack.c.bf16 %v676, %v674
    %v680 = vsel %vm632, %v677, 0
    %vm682 = vcmask 1043456
    %v684 = vsel %vm682, %v427, 0
    %686 = vmatprep.subr.bf16.mxu0 0
    %687 = vmatpush1.bf16.msra.mxu0 0
    %688 = vmatprep.subr.bf16.mxu0 0
    %689 = vmatpush1.bf16.msra.mxu0 0
    %690 = vmatprep.subr.bf16.mxu0 0
    %691 = vmatpush1.bf16.msra.mxu0 0
    %692 = vmatprep.subr.bf16.mxu0 0
    %693 = vmatpush1.bf16.msra.mxu0 0
    %694 = vmatprep.subr.bf16.mxu0 0
    %695 = vmatpush1.bf16.msra.mxu0 0
    %696 = vmatprep.subr.bf16.mxu0 0
    %697 = vmatpush1.bf16.msra.mxu0 0
    %698 = vmatprep.subr.bf16.mxu0 0
    %699 = vmatpush1.bf16.msra.mxu0 0
    %700 = vmatprep.subr.bf16.mxu0 0
    %701 = vmatpush1.bf16.msra.mxu0 %v684
    %702 = vmatprep.subr.bf16.mxu0 0
    %703 = vmatpush2.bf16.msra.mxu0 0
    %704 = vmatprep.subr.bf16.mxu0 0
    %705 = vmatpush2.bf16.msra.mxu0 0
    %706 = vmatprep.subr.bf16.mxu0 0
    %707 = vmatpush2.bf16.msra.mxu0 0
    %708 = vmatprep.subr.bf16.mxu0 0
    %709 = vmatpush2.bf16.msra.mxu0 0
    %710 = vmatprep.subr.bf16.mxu0 0
    %711 = vmatpush2.bf16.msra.mxu0 0
    %712 = vmatprep.subr.bf16.mxu0 0
    %713 = vmatpush2.bf16.msra.mxu0 0
    %714 = vmatprep.subr.bf16.mxu0 0
    %715 = vmatpush2.bf16.msra.mxu0 0
    %716 = vmatprep.subr.bf16.mxu0 0
    %717 = vmatpush2.bf16.msra.mxu0 0
    %718 = vmatprep.mubr.bf16.mxu0 0
    %719 = vmatmul.mubr.bf16.gmra.mxu0 %v680
    %v720 = vpop.f32.mrf.mxu0
    %v721 = vadd.f32 0.0, %v720
    %v722 = vpop.f32.mrf.mxu0
    %v723 = vpop.f32.mrf.mxu0
    %v724 = vpop.f32.mrf.mxu0
    %725 = vdwg.mxu0
    %v727 = vrot.slane %v677, 4
    %729 = vrot.lane.b32.xlu0 %v427, 64
    %v730 = vpop.permute.xlu0 %729
    %v732 = vsel %vm632, %v727, 0
    %v735 = vsel %vm682, %v730, 0
    %737 = vmatprep.subr.bf16.mxu0 0
    %738 = vmatpush1.bf16.msra.mxu0 0
    %739 = vmatprep.subr.bf16.mxu0 0
    %740 = vmatpush1.bf16.msra.mxu0 0
    %741 = vmatprep.subr.bf16.mxu0 0
    %742 = vmatpush1.bf16.msra.mxu0 0
    %743 = vmatprep.subr.bf16.mxu0 0
    %744 = vmatpush1.bf16.msra.mxu0 0
    %745 = vmatprep.subr.bf16.mxu0 0
    %746 = vmatpush1.bf16.msra.mxu0 0
    %747 = vmatprep.subr.bf16.mxu0 0
    %748 = vmatpush1.bf16.msra.mxu0 0
    %749 = vmatprep.subr.bf16.mxu0 0
    %750 = vmatpush1.bf16.msra.mxu0 0
    %751 = vmatprep.subr.bf16.mxu0 0
    %752 = vmatpush1.bf16.msra.mxu0 %v735
    %753 = vmatprep.subr.bf16.mxu0 0
    %754 = vmatpush2.bf16.msra.mxu0 0
    %755 = vmatprep.subr.bf16.mxu0 0
    %756 = vmatpush2.bf16.msra.mxu0 0
    %757 = vmatprep.subr.bf16.mxu0 0
    %758 = vmatpush2.bf16.msra.mxu0 0
    %759 = vmatprep.subr.bf16.mxu0 0
    %760 = vmatpush2.bf16.msra.mxu0 0
    %761 = vmatprep.subr.bf16.mxu0 0
    %762 = vmatpush2.bf16.msra.mxu0 0
    %763 = vmatprep.subr.bf16.mxu0 0
    %764 = vmatpush2.bf16.msra.mxu0 0
    %765 = vmatprep.subr.bf16.mxu0 0
    %766 = vmatpush2.bf16.msra.mxu0 0
    %767 = vmatprep.subr.bf16.mxu0 0
    %768 = vmatpush2.bf16.msra.mxu0 0
    %769 = vmatprep.mubr.bf16.mxu0 0
    %770 = vmatmul.mubr.bf16.gmra.mxu0 %v732
    %v771 = vpop.f32.mrf.mxu0
    %v772 = vadd.f32 0.0, %v771
    %v773 = vpop.f32.mrf.mxu0
    %v774 = vpop.f32.mrf.mxu0
    %v775 = vpop.f32.mrf.mxu0
    %776 = vdwg.mxu0
    %778 = vrot.lane.b32.xlu0 %v772, 64
    %v779 = vpop.permute.xlu0 %778
    %v781 = vsel %vm428, %v721, %v779
    %v783 = vsel %vm632, %v678, 0
    %v786 = vsel %vm682, %v529, 0
    %788 = vmatprep.subr.bf16.mxu0 0
    %789 = vmatpush1.bf16.msra.mxu0 0
    %790 = vmatprep.subr.bf16.mxu0 0
    %791 = vmatpush1.bf16.msra.mxu0 0
    %792 = vmatprep.subr.bf16.mxu0 0
    %793 = vmatpush1.bf16.msra.mxu0 0
    %794 = vmatprep.subr.bf16.mxu0 0
    %795 = vmatpush1.bf16.msra.mxu0 0
    %796 = vmatprep.subr.bf16.mxu0 0
    %797 = vmatpush1.bf16.msra.mxu0 0
    %798 = vmatprep.subr.bf16.mxu0 0
    %799 = vmatpush1.bf16.msra.mxu0 0
    %800 = vmatprep.subr.bf16.mxu0 0
    %801 = vmatpush1.bf16.msra.mxu0 0
    %802 = vmatprep.subr.bf16.mxu0 0
    %803 = vmatpush1.bf16.msra.mxu0 %v786
    %804 = vmatprep.subr.bf16.mxu0 0
    %805 = vmatpush2.bf16.msra.mxu0 0
    %806 = vmatprep.subr.bf16.mxu0 0
    %807 = vmatpush2.bf16.msra.mxu0 0
    %808 = vmatprep.subr.bf16.mxu0 0
    %809 = vmatpush2.bf16.msra.mxu0 0
    %810 = vmatprep.subr.bf16.mxu0 0
    %811 = vmatpush2.bf16.msra.mxu0 0
    %812 = vmatprep.subr.bf16.mxu0 0
    %813 = vmatpush2.bf16.msra.mxu0 0
    %814 = vmatprep.subr.bf16.mxu0 0
    %815 = vmatpush2.bf16.msra.mxu0 0
    %816 = vmatprep.subr.bf16.mxu0 0
    %817 = vmatpush2.bf16.msra.mxu0 0
    %818 = vmatprep.subr.bf16.mxu0 0
    %819 = vmatpush2.bf16.msra.mxu0 0
    %820 = vmatprep.mubr.bf16.mxu0 0
    %821 = vmatmul.mubr.bf16.gmra.mxu0 %v783
    %v822 = vpop.f32.mrf.mxu0
    %v823 = vadd.f32 0.0, %v822
    %v824 = vpop.f32.mrf.mxu0
    %v825 = vpop.f32.mrf.mxu0
    %v826 = vpop.f32.mrf.mxu0
    %827 = vdwg.mxu0
    %v829 = vrot.slane %v678, 4
    %831 = vrot.lane.b32.xlu0 %v529, 64
    %v832 = vpop.permute.xlu0 %831
    %v834 = vsel %vm632, %v829, 0
    %v837 = vsel %vm682, %v832, 0
    %839 = vmatprep.subr.bf16.mxu0 0
    %840 = vmatpush1.bf16.msra.mxu0 0
    %841 = vmatprep.subr.bf16.mxu0 0
    %842 = vmatpush1.bf16.msra.mxu0 0
    %843 = vmatprep.subr.bf16.mxu0 0
    %844 = vmatpush1.bf16.msra.mxu0 0
    %845 = vmatprep.subr.bf16.mxu0 0
    %846 = vmatpush1.bf16.msra.mxu0 0
    %847 = vmatprep.subr.bf16.mxu0 0
    %848 = vmatpush1.bf16.msra.mxu0 0
    %849 = vmatprep.subr.bf16.mxu0 0
    %850 = vmatpush1.bf16.msra.mxu0 0
    %851 = vmatprep.subr.bf16.mxu0 0
    %852 = vmatpush1.bf16.msra.mxu0 0
    %853 = vmatprep.subr.bf16.mxu0 0
    %854 = vmatpush1.bf16.msra.mxu0 %v837
    %855 = vmatprep.subr.bf16.mxu0 0
    %856 = vmatpush2.bf16.msra.mxu0 0
    %857 = vmatprep.subr.bf16.mxu0 0
    %858 = vmatpush2.bf16.msra.mxu0 0
    %859 = vmatprep.subr.bf16.mxu0 0
    %860 = vmatpush2.bf16.msra.mxu0 0
    %861 = vmatprep.subr.bf16.mxu0 0
    %862 = vmatpush2.bf16.msra.mxu0 0
    %863 = vmatprep.subr.bf16.mxu0 0
    %864 = vmatpush2.bf16.msra.mxu0 0
    %865 = vmatprep.subr.bf16.mxu0 0
    %866 = vmatpush2.bf16.msra.mxu0 0
    %867 = vmatprep.subr.bf16.mxu0 0
    %868 = vmatpush2.bf16.msra.mxu0 0
    %869 = vmatprep.subr.bf16.mxu0 0
    %870 = vmatpush2.bf16.msra.mxu0 0
    %871 = vmatprep.mubr.bf16.mxu0 0
    %872 = vmatmul.mubr.bf16.gmra.mxu0 %v834
    %v873 = vpop.f32.mrf.mxu0
    %v874 = vadd.f32 0.0, %v873
    %v875 = vpop.f32.mrf.mxu0
    %v876 = vpop.f32.mrf.mxu0
    %v877 = vpop.f32.mrf.mxu0
    %878 = vdwg.mxu0
    %880 = vrot.lane.b32.xlu0 %v874, 64
    %v881 = vpop.permute.xlu0 %880
    %v883 = vsel %vm428, %v823, %v881
    %v884 = vpack.c.bf16 %v883, %v781
    %v885 = vld [vmem:[#allocation5] sm:$0xf]
    %v886 = vld [vmem:[#allocation5 + $0x4] sm:$0xf]
    %v887 = vld [vmem:[#allocation5 + $0x8] sm:$0xf]
    %v888 = vld [vmem:[#allocation5 + $0xc] sm:$0xf]
    %v889 = vld [vmem:[#allocation5 + $0x10] sm:$0xf]
    %v890 = vld [vmem:[#allocation5 + $0x14] sm:$0xf]
    %v891 = vld [vmem:[#allocation5 + $0x18] sm:$0xf]
    %v892 = vld [vmem:[#allocation5 + $0x1c] sm:$0xf]
    %v893 = vld [vmem:[#allocation5 + $0x20] sm:$0xf]
    %v894 = vld [vmem:[#allocation5 + $0x24] sm:$0xf]
    %v895 = vld [vmem:[#allocation5 + $0x28] sm:$0xf]
    %v896 = vld [vmem:[#allocation5 + $0x2c] sm:$0xf]
    %v897 = vld [vmem:[#allocation5 + $0x30] sm:$0xf]
    %v898 = vld [vmem:[#allocation5 + $0x34] sm:$0xf]
    %v899 = vld [vmem:[#allocation5 + $0x38] sm:$0xf]
    %v900 = vld [vmem:[#allocation5 + $0x3c] sm:$0xf]
    %v901 = vld [vmem:[%s7] sm:$0x1]
    %v903 = vlaneseq
    %v904 = vshrl.u32 %v903, 7
    %v905 = vsub.s32 0, %v904
    %v906 = vrot.slane %v901, %v905
    %v924 = vunpack.c.l.b16 %v885
    %v925 = vunpack.c.l.b16 %v886
    %v926 = vunpack.c.l.b16 %v887
    %v927 = vunpack.c.l.b16 %v888
    %v928 = vunpack.c.l.b16 %v889
    %v929 = vunpack.c.l.b16 %v890
    %v930 = vunpack.c.l.b16 %v891
    %v931 = vunpack.c.l.b16 %v892
    %v932 = vunpack.c.l.b16 %v893
    %v933 = vunpack.c.l.b16 %v894
    %v934 = vunpack.c.l.b16 %v895
    %v935 = vunpack.c.l.b16 %v896
    %v936 = vunpack.c.l.b16 %v897
    %v937 = vunpack.c.l.b16 %v898
    %v938 = vunpack.c.l.b16 %v899
    %v939 = vunpack.c.l.b16 %v900
    %v940 = vpack.c.b16 %v925, %v924
    %v941 = vpack.c.b16 %v927, %v926
    %v942 = vpack.c.b16 %v929, %v928
    %v943 = vpack.c.b16 %v931, %v930
    %v944 = vpack.c.b16 %v933, %v932
    %v945 = vpack.c.b16 %v935, %v934
    %v946 = vpack.c.b16 %v937, %v936
    %v947 = vpack.c.b16 %v939, %v938
    %956 = vmatprep.subr.bf16.mxu0 0
    %957 = vmatpush1.bf16.msra.mxu0 %v947
    %958 = vmatprep.subr.bf16.mxu0 0
    %959 = vmatpush1.bf16.msra.mxu0 %v946
    %960 = vmatprep.subr.bf16.mxu0 0
    %961 = vmatpush1.bf16.msra.mxu0 %v945
    %962 = vmatprep.subr.bf16.mxu0 0
    %963 = vmatpush1.bf16.msra.mxu0 %v944
    %964 = vmatprep.subr.bf16.mxu0 0
    %965 = vmatpush1.bf16.msra.mxu0 %v943
    %966 = vmatprep.subr.bf16.mxu0 0
    %967 = vmatpush1.bf16.msra.mxu0 %v942
    %968 = vmatprep.subr.bf16.mxu0 0
    %969 = vmatpush1.bf16.msra.mxu0 %v941
    %970 = vmatprep.subr.bf16.mxu0 0
    %971 = vmatpush1.bf16.msra.mxu0 %v940
    %972 = vmatprep.subr.bf16.mxu0 0
    %973 = vmatpush2.bf16.msra.mxu0 0
    %974 = vmatprep.subr.bf16.mxu0 0
    %975 = vmatpush2.bf16.msra.mxu0 0
    %976 = vmatprep.subr.bf16.mxu0 0
    %977 = vmatpush2.bf16.msra.mxu0 0
    %978 = vmatprep.subr.bf16.mxu0 0
    %979 = vmatpush2.bf16.msra.mxu0 0
    %980 = vmatprep.subr.bf16.mxu0 0
    %981 = vmatpush2.bf16.msra.mxu0 0
    %982 = vmatprep.subr.bf16.mxu0 0
    %983 = vmatpush2.bf16.msra.mxu0 0
    %984 = vmatprep.subr.bf16.mxu0 0
    %985 = vmatpush2.bf16.msra.mxu0 0
    %986 = vmatprep.subr.bf16.mxu0 0
    %987 = vmatpush2.bf16.msra.mxu0 0
    %988 = vmatprep.mubr.bf16.mxu0 0
    %989 = vmatmul.mubr.bf16.gmra.mxu0 %v884
    %v990 = vpop.f32.mrf.mxu0
    %v991 = vadd.f32 %v906, %v990
    %v992 = vpop.f32.mrf.mxu0
    %v993 = vpop.f32.mrf.mxu0
    %v994 = vadd.f32 %v906, %v993
    %v995 = vpop.f32.mrf.mxu0
    %996 = vdwg.mxu0
    %v997 = vadd.f32 %v991, %v157
    %v998 = vadd.f32 %v994, %v158
    %v999 = vld [vmem:[%s8] sm:$0x1]
    %v1000 = vld [vmem:[%s9] sm:$0x1]
    %1001 = vadd.xlane.f32.xlu0 %v997
    %v1002 = vpop.xlane.xlu0 %1001
    %1003 = vadd.xlane.f32.xlu0 %v998
    %v1004 = vpop.xlane.xlu0 %1003
    %v1005 = vmul.f32 %v1002, %v124
    %v1006 = vmul.f32 %v1004, %v124
    %v1007 = vsub.f32 %v997, %v1005
    %v1008 = vsub.f32 %v998, %v1006
    %v1009 = vmul.f32 %v1007, %v1007
    %v1010 = vmul.f32 %v1008, %v1008
    %1011 = vadd.xlane.f32.xlu0 %v1009
    %v1012 = vpop.xlane.xlu0 %1011
    %1013 = vadd.xlane.f32.xlu0 %v1010
    %v1014 = vpop.xlane.xlu0 %1013
    %v1015 = vmul.f32 %v1012, %v124
    %v1016 = vmul.f32 %v1014, %v124
    %v1017 = vadd.f32 %v1015, 1e-12
    %v1018 = vadd.f32 %v1016, 1e-12
    %v1019 = vrsqrt.pop %v1017
    %v1020 = vrsqrt.pop %v1018
    %v1021 = vmul.f32 %v1007, %v1019
    %v1022 = vmul.f32 %v1008, %v1020
    %v1024 = vlaneseq
    %v1025 = vshrl.u32 %v1024, 7
    %v1026 = vsub.s32 0, %v1025
    %v1027 = vrot.slane %v999, %v1026
    %v1029 = vmul.f32 %v1021, %v1027
    %v1030 = vmul.f32 %v1022, %v1027
    %v1032 = vlaneseq
    %v1033 = vshrl.u32 %v1032, 7
    %v1034 = vsub.s32 0, %v1033
    %v1035 = vrot.slane %v1000, %v1034
    %v1037 = vadd.f32 %v1029, %v1035
    %v1038 = vadd.f32 %v1030, %v1035
    %v1039 = vpack.c.bf16 %v1038, %v1037
    %v1040 = vld [vmem:[%s10] sm:$0xff]
    %v1041 = vld [vmem:[%s10 + $0x8] sm:$0xff]
    %v1042 = vld [vmem:[%s10 + $0x10] sm:$0xff]
    %v1043 = vld [vmem:[%s10 + $0x18] sm:$0xff]
    %v1044 = vld [vmem:[%s10 + $0x20] sm:$0xff]
    %v1045 = vld [vmem:[%s10 + $0x28] sm:$0xff]
    %v1046 = vld [vmem:[%s10 + $0x30] sm:$0xff]
    %v1047 = vld [vmem:[%s10 + $0x38] sm:$0xff]
    %v1048 = vld [vmem:[%s10 + $0x40] sm:$0xff]
    %v1049 = vld [vmem:[%s10 + $0x48] sm:$0xff]
    %v1050 = vld [vmem:[%s10 + $0x50] sm:$0xff]
    %v1051 = vld [vmem:[%s10 + $0x58] sm:$0xff]
    %v1052 = vld [vmem:[%s10 + $0x60] sm:$0xff]
    %v1053 = vld [vmem:[%s10 + $0x68] sm:$0xff]
    %v1054 = vld [vmem:[%s10 + $0x70] sm:$0xff]
    %v1055 = vld [vmem:[%s10 + $0x78] sm:$0xff]
    %v1056 = vld [vmem:[%s11] sm:$0x3]
    %v1058 = vlaneseq
    %v1059 = vshrl.u32 %v1058, 7
    %v1060 = vsub.s32 0, %v1059
    %v1061 = vrot.slane %v1056, %v1060
    %v1062 = vlaneseq
    %v1063 = vshrl.u32 %v1062, 7
    %v1064 = vsub.s32 1, %v1063
    %v1065 = vrot.slane %v1056, %v1064
    %v1084 = vunpack.c.l.b16 %v1040
    %v1085 = vunpack.c.h.b16 %v1040
    %v1086 = vunpack.c.l.b16 %v1041
    %v1087 = vunpack.c.h.b16 %v1041
    %v1088 = vunpack.c.l.b16 %v1042
    %v1089 = vunpack.c.h.b16 %v1042
    %v1090 = vunpack.c.l.b16 %v1043
    %v1091 = vunpack.c.h.b16 %v1043
    %v1092 = vunpack.c.l.b16 %v1044
    %v1093 = vunpack.c.h.b16 %v1044
    %v1094 = vunpack.c.l.b16 %v1045
    %v1095 = vunpack.c.h.b16 %v1045
    %v1096 = vunpack.c.l.b16 %v1046
    %v1097 = vunpack.c.h.b16 %v1046
    %v1098 = vunpack.c.l.b16 %v1047
    %v1099 = vunpack.c.h.b16 %v1047
    %v1100 = vunpack.c.l.b16 %v1048
    %v1101 = vunpack.c.h.b16 %v1048
    %v1102 = vunpack.c.l.b16 %v1049
    %v1103 = vunpack.c.h.b16 %v1049
    %v1104 = vunpack.c.l.b16 %v1050
    %v1105 = vunpack.c.h.b16 %v1050
    %v1106 = vunpack.c.l.b16 %v1051
    %v1107 = vunpack.c.h.b16 %v1051
    %v1108 = vunpack.c.l.b16 %v1052
    %v1109 = vunpack.c.h.b16 %v1052
    %v1110 = vunpack.c.l.b16 %v1053
    %v1111 = vunpack.c.h.b16 %v1053
    %v1112 = vunpack.c.l.b16 %v1054
    %v1113 = vunpack.c.h.b16 %v1054
    %v1114 = vunpack.c.l.b16 %v1055
    %v1115 = vunpack.c.h.b16 %v1055
    %v1116 = vpack.c.b16 %v1086, %v1084
    %v1117 = vpack.c.b16 %v1087, %v1085
    %v1118 = vpack.c.b16 %v1090, %v1088
    %v1119 = vpack.c.b16 %v1091, %v1089
    %v1120 = vpack.c.b16 %v1094, %v1092
    %v1121 = vpack.c.b16 %v1095, %v1093
    %v1122 = vpack.c.b16 %v1098, %v1096
    %v1123 = vpack.c.b16 %v1099, %v1097
    %v1124 = vpack.c.b16 %v1102, %v1100
    %v1125 = vpack.c.b16 %v1103, %v1101
    %v1126 = vpack.c.b16 %v1106, %v1104
    %v1127 = vpack.c.b16 %v1107, %v1105
    %v1128 = vpack.c.b16 %v1110, %v1108
    %v1129 = vpack.c.b16 %v1111, %v1109
    %v1130 = vpack.c.b16 %v1114, %v1112
    %v1131 = vpack.c.b16 %v1115, %v1113
    %1148 = vmatprep.subr.bf16.mxu0 %v1131
    %1149 = vmatpush1.bf16.msra.mxu0 %v1130
    %1150 = vmatprep.subr.bf16.mxu0 %v1129
    %1151 = vmatpush1.bf16.msra.mxu0 %v1128
    %1152 = vmatprep.subr.bf16.mxu0 %v1127
    %1153 = vmatpush1.bf16.msra.mxu0 %v1126
    %1154 = vmatprep.subr.bf16.mxu0 %v1125
    %1155 = vmatpush1.bf16.msra.mxu0 %v1124
    %1156 = vmatprep.subr.bf16.mxu0 %v1123
    %1157 = vmatpush1.bf16.msra.mxu0 %v1122
    %1158 = vmatprep.subr.bf16.mxu0 %v1121
    %1159 = vmatpush1.bf16.msra.mxu0 %v1120
    %1160 = vmatprep.subr.bf16.mxu0 %v1119
    %1161 = vmatpush1.bf16.msra.mxu0 %v1118
    %1162 = vmatprep.subr.bf16.mxu0 %v1117
    %1163 = vmatpush1.bf16.msra.mxu0 %v1116
    %1164 = vmatprep.subr.bf16.mxu0 0
    %1165 = vmatpush2.bf16.msra.mxu0 0
    %1166 = vmatprep.subr.bf16.mxu0 0
    %1167 = vmatpush2.bf16.msra.mxu0 0
    %1168 = vmatprep.subr.bf16.mxu0 0
    %1169 = vmatpush2.bf16.msra.mxu0 0
    %1170 = vmatprep.subr.bf16.mxu0 0
    %1171 = vmatpush2.bf16.msra.mxu0 0
    %1172 = vmatprep.subr.bf16.mxu0 0
    %1173 = vmatpush2.bf16.msra.mxu0 0
    %1174 = vmatprep.subr.bf16.mxu0 0
    %1175 = vmatpush2.bf16.msra.mxu0 0
    %1176 = vmatprep.subr.bf16.mxu0 0
    %1177 = vmatpush2.bf16.msra.mxu0 0
    %1178 = vmatprep.subr.bf16.mxu0 0
    %1179 = vmatpush2.bf16.msra.mxu0 0
    %1180 = vmatprep.mubr.bf16.mxu0 0
    %1181 = vmatmul.mubr.bf16.gmra.mxu0 %v1039
    %v1182 = vpop.f32.mrf.mxu0
    %v1183 = vadd.f32 %v1061, %v1182
    %v1184 = vpop.f32.mrf.mxu0
    %v1185 = vadd.f32 %v1065, %v1184
    %v1186 = vpop.f32.mrf.mxu0
    %v1187 = vadd.f32 %v1061, %v1186
    %v1188 = vpop.f32.mrf.mxu0
    %v1189 = vadd.f32 %v1065, %v1188
    %1190 = vdwg.mxu0
    %v1191 = vmul.f32 %v1183, 0.5
    %v1192 = vmul.f32 %v1185, 0.5
    %v1193 = vmul.f32 %v1187, 0.5
    %v1194 = vmul.f32 %v1189, 0.5
    %v1195 = vmul.f32 %v1183, 0.044715
    %v1196 = vmul.f32 %v1185, 0.044715
    %v1197 = vmul.f32 %v1187, 0.044715
    %v1198 = vmul.f32 %v1189, 0.044715
    %v1199 = vmul.f32 %v1195, %v1183
    %v1200 = vmul.f32 %v1196, %v1185
    %v1201 = vmul.f32 %v1197, %v1187
    %v1202 = vmul.f32 %v1198, %v1189
    %v1203 = vmul.f32 %v1199, %v1183
    %v1204 = vmul.f32 %v1200, %v1185
    %v1205 = vmul.f32 %v1201, %v1187
    %v1206 = vmul.f32 %v1202, %v1189
    %v1207 = vadd.f32 %v1183, %v1203
    %v1208 = vadd.f32 %v1185, %v1204
    %v1209 = vadd.f32 %v1187, %v1205
    %v1210 = vadd.f32 %v1189, %v1206
    %v1211 = vmul.f32 %v1207, 0.7978846
    %v1212 = vmul.f32 %v1208, 0.7978846
    %v1213 = vmul.f32 %v1209, 0.7978846
    %v1214 = vmul.f32 %v1210, 0.7978846
    %v1215 = vtanh.pop %v1211
    %v1216 = vtanh.pop %v1212
    %v1217 = vtanh.pop %v1213
    %v1218 = vtanh.pop %v1214
    %v1219 = vadd.f32 %v1215, 1.0
    %v1220 = vadd.f32 %v1216, 1.0
    %v1221 = vadd.f32 %v1217, 1.0
    %v1222 = vadd.f32 %v1218, 1.0
    %v1223 = vmul.f32 %v1191, %v1219
    %v1224 = vmul.f32 %v1192, %v1220
    %v1225 = vmul.f32 %v1193, %v1221
    %v1226 = vmul.f32 %v1194, %v1222
    %v1227 = vpack.c.bf16 %v1225, %v1223
    %v1228 = vpack.c.bf16 %v1226, %v1224
    %v1229 = vld [vmem:[#allocation7] sm:$0xf]
    %v1230 = vld [vmem:[#allocation7 + $0x4] sm:$0xf]
    %v1231 = vld [vmem:[#allocation7 + $0x8] sm:$0xf]
    %v1232 = vld [vmem:[#allocation7 + $0xc] sm:$0xf]
    %v1233 = vld [vmem:[#allocation7 + $0x10] sm:$0xf]
    %v1234 = vld [vmem:[#allocation7 + $0x14] sm:$0xf]
    %v1235 = vld [vmem:[#allocation7 + $0x18] sm:$0xf]
    %v1236 = vld [vmem:[#allocation7 + $0x1c] sm:$0xf]
    %v1237 = vld [vmem:[#allocation7 + $0x20] sm:$0xf]
    %v1238 = vld [vmem:[#allocation7 + $0x24] sm:$0xf]
    %v1239 = vld [vmem:[#allocation7 + $0x28] sm:$0xf]
    %v1240 = vld [vmem:[#allocation7 + $0x2c] sm:$0xf]
    %v1241 = vld [vmem:[#allocation7 + $0x30] sm:$0xf]
    %v1242 = vld [vmem:[#allocation7 + $0x34] sm:$0xf]
    %v1243 = vld [vmem:[#allocation7 + $0x38] sm:$0xf]
    %v1244 = vld [vmem:[#allocation7 + $0x3c] sm:$0xf]
    %v1245 = vld [vmem:[#allocation7 + $0x40] sm:$0xf]
    %v1246 = vld [vmem:[#allocation7 + $0x44] sm:$0xf]
    %v1247 = vld [vmem:[#allocation7 + $0x48] sm:$0xf]
    %v1248 = vld [vmem:[#allocation7 + $0x4c] sm:$0xf]
    %v1249 = vld [vmem:[#allocation7 + $0x50] sm:$0xf]
    %v1250 = vld [vmem:[#allocation7 + $0x54] sm:$0xf]
    %v1251 = vld [vmem:[#allocation7 + $0x58] sm:$0xf]
    %v1252 = vld [vmem:[#allocation7 + $0x5c] sm:$0xf]
    %v1253 = vld [vmem:[#allocation7 + $0x60] sm:$0xf]
    %v1254 = vld [vmem:[#allocation7 + $0x64] sm:$0xf]
    %v1255 = vld [vmem:[#allocation7 + $0x68] sm:$0xf]
    %v1256 = vld [vmem:[#allocation7 + $0x6c] sm:$0xf]
    %v1257 = vld [vmem:[#allocation7 + $0x70] sm:$0xf]
    %v1258 = vld [vmem:[#allocation7 + $0x74] sm:$0xf]
    %v1259 = vld [vmem:[#allocation7 + $0x78] sm:$0xf]
    %v1260 = vld [vmem:[#allocation7 + $0x7c] sm:$0xf]
    %v1261 = vld [vmem:[%s13] sm:$0x1]
    %v1263 = vlaneseq
    %v1264 = vshrl.u32 %v1263, 7
    %v1265 = vsub.s32 0, %v1264
    %v1266 = vrot.slane %v1261, %v1265
    %v1300 = vunpack.c.l.b16 %v1229
    %v1301 = vunpack.c.l.b16 %v1230
    %v1302 = vunpack.c.l.b16 %v1231
    %v1303 = vunpack.c.l.b16 %v1232
    %v1304 = vunpack.c.l.b16 %v1233
    %v1305 = vunpack.c.l.b16 %v1234
    %v1306 = vunpack.c.l.b16 %v1235
    %v1307 = vunpack.c.l.b16 %v1236
    %v1308 = vunpack.c.l.b16 %v1237
    %v1309 = vunpack.c.l.b16 %v1238
    %v1310 = vunpack.c.l.b16 %v1239
    %v1311 = vunpack.c.l.b16 %v1240
    %v1312 = vunpack.c.l.b16 %v1241
    %v1313 = vunpack.c.l.b16 %v1242
    %v1314 = vunpack.c.l.b16 %v1243
    %v1315 = vunpack.c.l.b16 %v1244
    %v1316 = vunpack.c.l.b16 %v1245
    %v1317 = vunpack.c.l.b16 %v1246
    %v1318 = vunpack.c.l.b16 %v1247
    %v1319 = vunpack.c.l.b16 %v1248
    %v1320 = vunpack.c.l.b16 %v1249
    %v1321 = vunpack.c.l.b16 %v1250
    %v1322 = vunpack.c.l.b16 %v1251
    %v1323 = vunpack.c.l.b16 %v1252
    %v1324 = vunpack.c.l.b16 %v1253
    %v1325 = vunpack.c.l.b16 %v1254
    %v1326 = vunpack.c.l.b16 %v1255
    %v1327 = vunpack.c.l.b16 %v1256
    %v1328 = vunpack.c.l.b16 %v1257
    %v1329 = vunpack.c.l.b16 %v1258
    %v1330 = vunpack.c.l.b16 %v1259
    %v1331 = vunpack.c.l.b16 %v1260
    %v1332 = vpack.c.b16 %v1301, %v1300
    %v1333 = vpack.c.b16 %v1303, %v1302
    %v1334 = vpack.c.b16 %v1305, %v1304
    %v1335 = vpack.c.b16 %v1307, %v1306
    %v1336 = vpack.c.b16 %v1309, %v1308
    %v1337 = vpack.c.b16 %v1311, %v1310
    %v1338 = vpack.c.b16 %v1313, %v1312
    %v1339 = vpack.c.b16 %v1315, %v1314
    %v1340 = vpack.c.b16 %v1317, %v1316
    %v1341 = vpack.c.b16 %v1319, %v1318
    %v1342 = vpack.c.b16 %v1321, %v1320
    %v1343 = vpack.c.b16 %v1323, %v1322
    %v1344 = vpack.c.b16 %v1325, %v1324
    %v1345 = vpack.c.b16 %v1327, %v1326
    %v1346 = vpack.c.b16 %v1329, %v1328
    %v1347 = vpack.c.b16 %v1331, %v1330
    %1364 = vmatprep.subr.bf16.mxu0 0
    %1365 = vmatpush1.bf16.msra.mxu0 %v1339
    %1366 = vmatprep.subr.bf16.mxu0 0
    %1367 = vmatpush1.bf16.msra.mxu0 %v1338
    %1368 = vmatprep.subr.bf16.mxu0 0
    %1369 = vmatpush1.bf16.msra.mxu0 %v1337
    %1370 = vmatprep.subr.bf16.mxu0 0
    %1371 = vmatpush1.bf16.msra.mxu0 %v1336
    %1372 = vmatprep.subr.bf16.mxu0 0
    %1373 = vmatpush1.bf16.msra.mxu0 %v1335
    %1374 = vmatprep.subr.bf16.mxu0 0
    %1375 = vmatpush1.bf16.msra.mxu0 %v1334
    %1376 = vmatprep.subr.bf16.mxu0 0
    %1377 = vmatpush1.bf16.msra.mxu0 %v1333
    %1378 = vmatprep.subr.bf16.mxu0 0
    %1379 = vmatpush1.bf16.msra.mxu0 %v1332
    %1380 = vmatprep.subr.bf16.mxu0 0
    %1381 = vmatpush2.bf16.msra.mxu0 %v1347
    %1382 = vmatprep.subr.bf16.mxu0 0
    %1383 = vmatpush2.bf16.msra.mxu0 %v1346
    %1384 = vmatprep.subr.bf16.mxu0 0
    %1385 = vmatpush2.bf16.msra.mxu0 %v1345
    %1386 = vmatprep.subr.bf16.mxu0 0
    %1387 = vmatpush2.bf16.msra.mxu0 %v1344
    %1388 = vmatprep.subr.bf16.mxu0 0
    %1389 = vmatpush2.bf16.msra.mxu0 %v1343
    %1390 = vmatprep.subr.bf16.mxu0 0
    %1391 = vmatpush2.bf16.msra.mxu0 %v1342
    %1392 = vmatprep.subr.bf16.mxu0 0
    %1393 = vmatpush2.bf16.msra.mxu0 %v1341
    %1394 = vmatprep.subr.bf16.mxu0 0
    %1395 = vmatpush2.bf16.msra.mxu0 %v1340
    %1396 = vmatprep.mubr.bf16.mxu0 %v1228
    %1397 = vmatmul.mubr.bf16.gmra.mxu0 %v1227
    %v1398 = vpop.f32.mrf.mxu0
    %v1399 = vadd.f32 %v1266, %v1398
    %v1400 = vpop.f32.mrf.mxu0
    %v1401 = vpop.f32.mrf.mxu0
    %v1402 = vadd.f32 %v1266, %v1401
    %v1403 = vpop.f32.mrf.mxu0
    %1404 = vdwg.mxu0
    %v1405 = vadd.f32 %v1399, %v1037
    %v1406 = vadd.f32 %v1402, %v1038
    %v1407 = vld [vmem:[%s14] sm:$0x1]
    %v1408 = vld [vmem:[%s15] sm:$0x1]
    %1409 = vadd.xlane.f32.xlu0 %v1405
    %v1410 = vpop.xlane.xlu0 %1409
    %1411 = vadd.xlane.f32.xlu0 %v1406
    %v1412 = vpop.xlane.xlu0 %1411
    %v1413 = vmul.f32 %v1410, %v124
    %v1414 = vmul.f32 %v1412, %v124
    %v1415 = vsub.f32 %v1405, %v1413
    %v1416 = vsub.f32 %v1406, %v1414
    %v1417 = vmul.f32 %v1415, %v1415
    %v1418 = vmul.f32 %v1416, %v1416
    %1419 = vadd.xlane.f32.xlu0 %v1417
    %v1420 = vpop.xlane.xlu0 %1419
    %1421 = vadd.xlane.f32.xlu0 %v1418
    %v1422 = vpop.xlane.xlu0 %1421
    %v1423 = vmul.f32 %v1420, %v124
    %v1424 = vmul.f32 %v1422, %v124
    %v1425 = vadd.f32 %v1423, 1e-12
    %v1426 = vadd.f32 %v1424, 1e-12
    %v1427 = vrsqrt.pop %v1425
    %v1428 = vrsqrt.pop %v1426
    %v1429 = vmul.f32 %v1415, %v1427
    %v1430 = vmul.f32 %v1416, %v1428
    %v1432 = vlaneseq
    %v1433 = vshrl.u32 %v1432, 7
    %v1434 = vsub.s32 0, %v1433
    %v1435 = vrot.slane %v1407, %v1434
    %v1437 = vmul.f32 %v1429, %v1435
    %v1438 = vmul.f32 %v1430, %v1435
    %v1440 = vlaneseq
    %v1441 = vshrl.u32 %v1440, 7
    %v1442 = vsub.s32 0, %v1441
    %v1443 = vrot.slane %v1408, %v1442
    %v1445 = vadd.f32 %v1437, %v1443
    %v1446 = vadd.f32 %v1438, %v1443
    %v1447 = vpack.c.bf16 %v1446, %v1445
    %s1448 = scalar_lea.vmem [#allocation2], 192
    %v1449 = vld [vmem:[%s1448] sm:$0xff]
    %v1450 = vld [vmem:[%s1448 + $0x8] sm:$0xf]
    %v1451 = vld [vmem:[%s1448 + $0xc] sm:$0xff]
    %v1452 = vld [vmem:[%s1448 + $0x14] sm:$0xf]
    %v1453 = vld [vmem:[%s1448 + $0x18] sm:$0xff]
    %v1454 = vld [vmem:[%s1448 + $0x20] sm:$0xf]
    %v1455 = vld [vmem:[%s1448 + $0x24] sm:$0xff]
    %v1456 = vld [vmem:[%s1448 + $0x2c] sm:$0xf]
    %v1457 = vld [vmem:[%s1448 + $0x30] sm:$0xff]
    %v1458 = vld [vmem:[%s1448 + $0x38] sm:$0xf]
    %v1459 = vld [vmem:[%s1448 + $0x3c] sm:$0xff]
    %v1460 = vld [vmem:[%s1448 + $0x44] sm:$0xf]
    %v1461 = vld [vmem:[%s1448 + $0x48] sm:$0xff]
    %v1462 = vld [vmem:[%s1448 + $0x50] sm:$0xf]
    %v1463 = vld [vmem:[%s1448 + $0x54] sm:$0xff]
    %v1464 = vld [vmem:[%s1448 + $0x5c] sm:$0xf]
    %v1465 = vld [vmem:[%s1448 + $0x60] sm:$0xff]
    %v1466 = vld [vmem:[%s1448 + $0x68] sm:$0xf]
    %v1467 = vld [vmem:[%s1448 + $0x6c] sm:$0xff]
    %v1468 = vld [vmem:[%s1448 + $0x74] sm:$0xf]
    %v1469 = vld [vmem:[%s1448 + $0x78] sm:$0xff]
    %v1470 = vld [vmem:[%s1448 + $0x80] sm:$0xf]
    %v1471 = vld [vmem:[%s1448 + $0x84] sm:$0xff]
    %v1472 = vld [vmem:[%s1448 + $0x8c] sm:$0xf]
    %v1473 = vld [vmem:[%s1448 + $0x90] sm:$0xff]
    %v1474 = vld [vmem:[%s1448 + $0x98] sm:$0xf]
    %v1475 = vld [vmem:[%s1448 + $0x9c] sm:$0xff]
    %v1476 = vld [vmem:[%s1448 + $0xa4] sm:$0xf]
    %v1477 = vld [vmem:[%s1448 + $0xa8] sm:$0xff]
    %v1478 = vld [vmem:[%s1448 + $0xb0] sm:$0xf]
    %v1479 = vld [vmem:[%s1448 + $0xb4] sm:$0xff]
    %v1480 = vld [vmem:[%s1448 + $0xbc] sm:$0xf]
    %s1481 = scalar_lea.vmem %s5, 3
    %v1482 = vld [vmem:[%s1481] sm:$0x7]
    %v1484 = vlaneseq
    %v1485 = vshrl.u32 %v1484, 7
    %v1486 = vsub.s32 0, %v1485
    %v1487 = vrot.slane %v1482, %v1486
    %v1488 = vlaneseq
    %v1489 = vshrl.u32 %v1488, 7
    %v1490 = vsub.s32 1, %v1489
    %v1491 = vrot.slane %v1482, %v1490
    %v1492 = vlaneseq
    %v1493 = vshrl.u32 %v1492, 7
    %v1494 = vsub.s32 2, %v1493
    %v1495 = vrot.slane %v1482, %v1494
    %v1531 = vunpack.c.l.b16 %v1449
    %v1532 = vunpack.c.h.b16 %v1449
    %v1533 = vunpack.c.l.b16 %v1450
    %v1534 = vunpack.c.l.b16 %v1451
    %v1535 = vunpack.c.h.b16 %v1451
    %v1536 = vunpack.c.l.b16 %v1452
    %v1537 = vunpack.c.l.b16 %v1453
    %v1538 = vunpack.c.h.b16 %v1453
    %v1539 = vunpack.c.l.b16 %v1454
    %v1540 = vunpack.c.l.b16 %v1455
    %v1541 = vunpack.c.h.b16 %v1455
    %v1542 = vunpack.c.l.b16 %v1456
    %v1543 = vunpack.c.l.b16 %v1457
    %v1544 = vunpack.c.h.b16 %v1457
    %v1545 = vunpack.c.l.b16 %v1458
    %v1546 = vunpack.c.l.b16 %v1459
    %v1547 = vunpack.c.h.b16 %v1459
    %v1548 = vunpack.c.l.b16 %v1460
    %v1549 = vunpack.c.l.b16 %v1461
    %v1550 = vunpack.c.h.b16 %v1461
    %v1551 = vunpack.c.l.b16 %v1462
    %v1552 = vunpack.c.l.b16 %v1463
    %v1553 = vunpack.c.h.b16 %v1463
    %v1554 = vunpack.c.l.b16 %v1464
    %v1555 = vunpack.c.l.b16 %v1465
    %v1556 = vunpack.c.h.b16 %v1465
    %v1557 = vunpack.c.l.b16 %v1466
    %v1558 = vunpack.c.l.b16 %v1467
    %v1559 = vunpack.c.h.b16 %v1467
    %v1560 = vunpack.c.l.b16 %v1468
    %v1561 = vunpack.c.l.b16 %v1469
    %v1562 = vunpack.c.h.b16 %v1469
    %v1563 = vunpack.c.l.b16 %v1470
    %v1564 = vunpack.c.l.b16 %v1471
    %v1565 = vunpack.c.h.b16 %v1471
    %v1566 = vunpack.c.l.b16 %v1472
    %v1567 = vunpack.c.l.b16 %v1473
    %v1568 = vunpack.c.h.b16 %v1473
    %v1569 = vunpack.c.l.b16 %v1474
    %v1570 = vunpack.c.l.b16 %v1475
    %v1571 = vunpack.c.h.b16 %v1475
    %v1572 = vunpack.c.l.b16 %v1476
    %v1573 = vunpack.c.l.b16 %v1477
    %v1574 = vunpack.c.h.b16 %v1477
    %v1575 = vunpack.c.l.b16 %v1478
    %v1576 = vunpack.c.l.b16 %v1479
    %v1577 = vunpack.c.h.b16 %v1479
    %v1578 = vunpack.c.l.b16 %v1480
    %v1579 = vpack.c.b16 %v1534, %v1531
    %v1580 = vpack.c.b16 %v1535, %v1532
    %v1581 = vpack.c.b16 %v1536, %v1533
    %v1582 = vpack.c.b16 %v1540, %v1537
    %v1583 = vpack.c.b16 %v1541, %v1538
    %v1584 = vpack.c.b16 %v1542, %v1539
    %v1585 = vpack.c.b16 %v1546, %v1543
    %v1586 = vpack.c.b16 %v1547, %v1544
    %v1587 = vpack.c.b16 %v1548, %v1545
    %v1588 = vpack.c.b16 %v1552, %v1549
    %v1589 = vpack.c.b16 %v1553, %v1550
    %v1590 = vpack.c.b16 %v1554, %v1551
    %v1591 = vpack.c.b16 %v1558, %v1555
    %v1592 = vpack.c.b16 %v1559, %v1556
    %v1593 = vpack.c.b16 %v1560, %v1557
    %v1594 = vpack.c.b16 %v1564, %v1561
    %v1595 = vpack.c.b16 %v1565, %v1562
    %v1596 = vpack.c.b16 %v1566, %v1563
    %v1597 = vpack.c.b16 %v1570, %v1567
    %v1598 = vpack.c.b16 %v1571, %v1568
    %v1599 = vpack.c.b16 %v1572, %v1569
    %v1600 = vpack.c.b16 %v1576, %v1573
    %v1601 = vpack.c.b16 %v1577, %v1574
    %v1602 = vpack.c.b16 %v1578, %v1575
    %1627 = vmatprep.subr.bf16.mxu0 %v1601
    %1628 = vmatpush1.bf16.msra.mxu0 %v1600
    %1629 = vmatprep.subr.bf16.mxu0 %v1598
    %1630 = vmatpush1.bf16.msra.mxu0 %v1597
    %1631 = vmatprep.subr.bf16.mxu0 %v1595
    %1632 = vmatpush1.bf16.msra.mxu0 %v1594
    %1633 = vmatprep.subr.bf16.mxu0 %v1592
    %1634 = vmatpush1.bf16.msra.mxu0 %v1591
    %1635 = vmatprep.subr.bf16.mxu0 %v1589
    %1636 = vmatpush1.bf16.msra.mxu0 %v1588
    %1637 = vmatprep.subr.bf16.mxu0 %v1586
    %1638 = vmatpush1.bf16.msra.mxu0 %v1585
    %1639 = vmatprep.subr.bf16.mxu0 %v1583
    %1640 = vmatpush1.bf16.msra.mxu0 %v1582
    %1641 = vmatprep.subr.bf16.mxu0 %v1580
    %1642 = vmatpush1.bf16.msra.mxu0 %v1579
    %1643 = vmatprep.subr.bf16.mxu0 0
    %1644 = vmatpush2.bf16.msra.mxu0 0
    %1645 = vmatprep.subr.bf16.mxu0 0
    %1646 = vmatpush2.bf16.msra.mxu0 0
    %1647 = vmatprep.subr.bf16.mxu0 0
    %1648 = vmatpush2.bf16.msra.mxu0 0
    %1649 = vmatprep.subr.bf16.mxu0 0
    %1650 = vmatpush2.bf16.msra.mxu0 0
    %1651 = vmatprep.subr.bf16.mxu0 0
    %1652 = vmatpush2.bf16.msra.mxu0 0
    %1653 = vmatprep.subr.bf16.mxu0 0
    %1654 = vmatpush2.bf16.msra.mxu0 0
    %1655 = vmatprep.subr.bf16.mxu0 0
    %1656 = vmatpush2.bf16.msra.mxu0 0
    %1657 = vmatprep.subr.bf16.mxu0 0
    %1658 = vmatpush2.bf16.msra.mxu0 0
    %1659 = vmatprep.mubr.bf16.mxu0 0
    %1660 = vmatmul.mubr.bf16.gmra.mxu0 %v1447
    %v1661 = vpop.f32.mrf.mxu0
    %v1662 = vadd.f32 %v1487, %v1661
    %v1663 = vpop.f32.mrf.mxu0
    %v1664 = vadd.f32 %v1491, %v1663
    %v1665 = vpop.f32.mrf.mxu0
    %v1666 = vadd.f32 %v1487, %v1665
    %v1667 = vpop.f32.mrf.mxu0
    %v1668 = vadd.f32 %v1491, %v1667
    %1669 = vdwg.mxu0
    %1670 = vmatprep.subr.bf16.mxu0 0
    %1671 = vmatpush1.bf16.msra.mxu0 %v1602
    %1672 = vmatprep.subr.bf16.mxu0 0
    %1673 = vmatpush1.bf16.msra.mxu0 %v1599
    %1674 = vmatprep.subr.bf16.mxu0 0
    %1675 = vmatpush1.bf16.msra.mxu0 %v1596
    %1676 = vmatprep.subr.bf16.mxu0 0
    %1677 = vmatpush1.bf16.msra.mxu0 %v1593
    %1678 = vmatprep.subr.bf16.mxu0 0
    %1679 = vmatpush1.bf16.msra.mxu0 %v1590
    %1680 = vmatprep.subr.bf16.mxu0 0
    %1681 = vmatpush1.bf16.msra.mxu0 %v1587
    %1682 = vmatprep.subr.bf16.mxu0 0
    %1683 = vmatpush1.bf16.msra.mxu0 %v1584
    %1684 = vmatprep.subr.bf16.mxu0 0
    %1685 = vmatpush1.bf16.msra.mxu0 %v1581
    %1686 = vmatprep.subr.bf16.mxu0 0
    %1687 = vmatpush2.bf16.msra.mxu0 0
    %1688 = vmatprep.subr.bf16.mxu0 0
    %1689 = vmatpush2.bf16.msra.mxu0 0
    %1690 = vmatprep.subr.bf16.mxu0 0
    %1691 = vmatpush2.bf16.msra.mxu0 0
    %1692 = vmatprep.subr.bf16.mxu0 0
    %1693 = vmatpush2.bf16.msra.mxu0 0
    %1694 = vmatprep.subr.bf16.mxu0 0
    %1695 = vmatpush2.bf16.msra.mxu0 0
    %1696 = vmatprep.subr.bf16.mxu0 0
    %1697 = vmatpush2.bf16.msra.mxu0 0
    %1698 = vmatprep.subr.bf16.mxu0 0
    %1699 = vmatpush2.bf16.msra.mxu0 0
    %1700 = vmatprep.subr.bf16.mxu0 0
    %1701 = vmatpush2.bf16.msra.mxu0 0
    %1702 = vmatprep.mubr.bf16.mxu0 0
    %1703 = vmatmul.mubr.bf16.gmra.mxu0 %v1447
    %v1704 = vpop.f32.mrf.mxu0
    %v1705 = vadd.f32 %v1495, %v1704
    %v1706 = vpop.f32.mrf.mxu0
    %v1707 = vpop.f32.mrf.mxu0
    %v1708 = vadd.f32 %v1495, %v1707
    %v1709 = vpop.f32.mrf.mxu0
    %1710 = vdwg.mxu0
    %v1711 = vpack.c.bf16 %v1662, %v1662
    %v1712 = vpack.c.bf16 %v1664, %v1664
    %v1713 = vpack.c.bf16 %v1705, %v1705
    %v1715 = vsel %vm428, %v1711, 0
    %v1718 = vsel %vm428, %v1712, 0
    %1720 = vmatprep.subr.bf16.mxu0 0
    %1721 = vmatpush1.bf16.xpose.msra.mxu0 0
    %1722 = vmatprep.subr.bf16.mxu0 0
    %1723 = vmatpush1.bf16.xpose.msra.mxu0 0
    %1724 = vmatprep.subr.bf16.mxu0 0
    %1725 = vmatpush1.bf16.xpose.msra.mxu0 0
    %1726 = vmatprep.subr.bf16.mxu0 0
    %1727 = vmatpush1.bf16.xpose.msra.mxu0 0
    %1728 = vmatprep.subr.bf16.mxu0 0
    %1729 = vmatpush1.bf16.xpose.msra.mxu0 0
    %1730 = vmatprep.subr.bf16.mxu0 0
    %1731 = vmatpush1.bf16.xpose.msra.mxu0 0
    %1732 = vmatprep.subr.bf16.mxu0 0
    %1733 = vmatpush1.bf16.xpose.msra.mxu0 0
    %1734 = vmatprep.subr.bf16.mxu0 0
    %1735 = vmatpush1.bf16.xpose.msra.mxu0 %v1718
    %1736 = vmatprep.subr.bf16.mxu0 0
    %1737 = vmatpush2.bf16.xpose.msra.mxu0 0
    %1738 = vmatprep.subr.bf16.mxu0 0
    %1739 = vmatpush2.bf16.xpose.msra.mxu0 0
    %1740 = vmatprep.subr.bf16.mxu0 0
    %1741 = vmatpush2.bf16.xpose.msra.mxu0 0
    %1742 = vmatprep.subr.bf16.mxu0 0
    %1743 = vmatpush2.bf16.xpose.msra.mxu0 0
    %1744 = vmatprep.subr.bf16.mxu0 0
    %1745 = vmatpush2.bf16.xpose.msra.mxu0 0
    %1746 = vmatprep.subr.bf16.mxu0 0
    %1747 = vmatpush2.bf16.xpose.msra.mxu0 0
    %1748 = vmatprep.subr.bf16.mxu0 0
    %1749 = vmatpush2.bf16.xpose.msra.mxu0 0
    %1750 = vmatprep.subr.bf16.mxu0 0
    %1751 = vmatpush2.bf16.xpose.msra.mxu0 0
    %1752 = vmatprep.mubr.bf16.mxu0 0
    %1753 = vmatmul.mubr.bf16.gmra.mxu0 %v1715
    %v1754 = vpop.f32.mrf.mxu0
    %v1755 = vadd.f32 0.0, %v1754
    %v1756 = vpop.f32.mrf.mxu0
    %v1757 = vpop.f32.mrf.mxu0
    %v1758 = vpop.f32.mrf.mxu0
    %1759 = vdwg.mxu0
    %1761 = vrot.lane.b32.xlu0 %v1711, 64
    %v1762 = vpop.permute.xlu0 %1761
    %1764 = vrot.lane.b32.xlu0 %v1712, 64
    %v1765 = vpop.permute.xlu0 %1764
    %v1767 = vsel %vm428, %v1762, 0
    %v1770 = vsel %vm428, %v1765, 0
    %1772 = vmatprep.subr.bf16.mxu0 0
    %1773 = vmatpush1.bf16.xpose.msra.mxu0 0
    %1774 = vmatprep.subr.bf16.mxu0 0
    %1775 = vmatpush1.bf16.xpose.msra.mxu0 0
    %1776 = vmatprep.subr.bf16.mxu0 0
    %1777 = vmatpush1.bf16.xpose.msra.mxu0 0
    %1778 = vmatprep.subr.bf16.mxu0 0
    %1779 = vmatpush1.bf16.xpose.msra.mxu0 0
    %1780 = vmatprep.subr.bf16.mxu0 0
    %1781 = vmatpush1.bf16.xpose.msra.mxu0 0
    %1782 = vmatprep.subr.bf16.mxu0 0
    %1783 = vmatpush1.bf16.xpose.msra.mxu0 0
    %1784 = vmatprep.subr.bf16.mxu0 0
    %1785 = vmatpush1.bf16.xpose.msra.mxu0 0
    %1786 = vmatprep.subr.bf16.mxu0 0
    %1787 = vmatpush1.bf16.xpose.msra.mxu0 %v1770
    %1788 = vmatprep.subr.bf16.mxu0 0
    %1789 = vmatpush2.bf16.xpose.msra.mxu0 0
    %1790 = vmatprep.subr.bf16.mxu0 0
    %1791 = vmatpush2.bf16.xpose.msra.mxu0 0
    %1792 = vmatprep.subr.bf16.mxu0 0
    %1793 = vmatpush2.bf16.xpose.msra.mxu0 0
    %1794 = vmatprep.subr.bf16.mxu0 0
    %1795 = vmatpush2.bf16.xpose.msra.mxu0 0
    %1796 = vmatprep.subr.bf16.mxu0 0
    %1797 = vmatpush2.bf16.xpose.msra.mxu0 0
    %1798 = vmatprep.subr.bf16.mxu0 0
    %1799 = vmatpush2.bf16.xpose.msra.mxu0 0
    %1800 = vmatprep.subr.bf16.mxu0 0
    %1801 = vmatpush2.bf16.xpose.msra.mxu0 0
    %1802 = vmatprep.subr.bf16.mxu0 0
    %1803 = vmatpush2.bf16.xpose.msra.mxu0 0
    %1804 = vmatprep.mubr.bf16.mxu0 0
    %1805 = vmatmul.mubr.bf16.gmra.mxu0 %v1767
    %v1806 = vpop.f32.mrf.mxu0
    %v1807 = vadd.f32 0.0, %v1806
    %v1808 = vpop.f32.mrf.mxu0
    %v1809 = vpop.f32.mrf.mxu0
    %v1810 = vpop.f32.mrf.mxu0
    %1811 = vdwg.mxu0
    %v1812 = vpack.c.bf16 %v1666, %v1666
    %v1813 = vpack.c.bf16 %v1668, %v1668
    %v1814 = vpack.c.bf16 %v1708, %v1708
    %v1816 = vsel %vm428, %v1812, 0
    %v1819 = vsel %vm428, %v1813, 0
    %1821 = vmatprep.subr.bf16.mxu0 0
    %1822 = vmatpush1.bf16.xpose.msra.mxu0 0
    %1823 = vmatprep.subr.bf16.mxu0 0
    %1824 = vmatpush1.bf16.xpose.msra.mxu0 0
    %1825 = vmatprep.subr.bf16.mxu0 0
    %1826 = vmatpush1.bf16.xpose.msra.mxu0 0
    %1827 = vmatprep.subr.bf16.mxu0 0
    %1828 = vmatpush1.bf16.xpose.msra.mxu0 0
    %1829 = vmatprep.subr.bf16.mxu0 0
    %1830 = vmatpush1.bf16.xpose.msra.mxu0 0
    %1831 = vmatprep.subr.bf16.mxu0 0
    %1832 = vmatpush1.bf16.xpose.msra.mxu0 0
    %1833 = vmatprep.subr.bf16.mxu0 0
    %1834 = vmatpush1.bf16.xpose.msra.mxu0 0
    %1835 = vmatprep.subr.bf16.mxu0 0
    %1836 = vmatpush1.bf16.xpose.msra.mxu0 %v1819
    %1837 = vmatprep.subr.bf16.mxu0 0
    %1838 = vmatpush2.bf16.xpose.msra.mxu0 0
    %1839 = vmatprep.subr.bf16.mxu0 0
    %1840 = vmatpush2.bf16.xpose.msra.mxu0 0
    %1841 = vmatprep.subr.bf16.mxu0 0
    %1842 = vmatpush2.bf16.xpose.msra.mxu0 0
    %1843 = vmatprep.subr.bf16.mxu0 0
    %1844 = vmatpush2.bf16.xpose.msra.mxu0 0
    %1845 = vmatprep.subr.bf16.mxu0 0
    %1846 = vmatpush2.bf16.xpose.msra.mxu0 0
    %1847 = vmatprep.subr.bf16.mxu0 0
    %1848 = vmatpush2.bf16.xpose.msra.mxu0 0
    %1849 = vmatprep.subr.bf16.mxu0 0
    %1850 = vmatpush2.bf16.xpose.msra.mxu0 0
    %1851 = vmatprep.subr.bf16.mxu0 0
    %1852 = vmatpush2.bf16.xpose.msra.mxu0 0
    %1853 = vmatprep.mubr.bf16.mxu0 0
    %1854 = vmatmul.mubr.bf16.gmra.mxu0 %v1816
    %v1855 = vpop.f32.mrf.mxu0
    %v1856 = vadd.f32 0.0, %v1855
    %v1857 = vpop.f32.mrf.mxu0
    %v1858 = vpop.f32.mrf.mxu0
    %v1859 = vpop.f32.mrf.mxu0
    %1860 = vdwg.mxu0
    %1862 = vrot.lane.b32.xlu0 %v1812, 64
    %v1863 = vpop.permute.xlu0 %1862
    %1865 = vrot.lane.b32.xlu0 %v1813, 64
    %v1866 = vpop.permute.xlu0 %1865
    %v1868 = vsel %vm428, %v1863, 0
    %v1871 = vsel %vm428, %v1866, 0
    %1873 = vmatprep.subr.bf16.mxu0 0
    %1874 = vmatpush1.bf16.xpose.msra.mxu0 0
    %1875 = vmatprep.subr.bf16.mxu0 0
    %1876 = vmatpush1.bf16.xpose.msra.mxu0 0
    %1877 = vmatprep.subr.bf16.mxu0 0
    %1878 = vmatpush1.bf16.xpose.msra.mxu0 0
    %1879 = vmatprep.subr.bf16.mxu0 0
    %1880 = vmatpush1.bf16.xpose.msra.mxu0 0
    %1881 = vmatprep.subr.bf16.mxu0 0
    %1882 = vmatpush1.bf16.xpose.msra.mxu0 0
    %1883 = vmatprep.subr.bf16.mxu0 0
    %1884 = vmatpush1.bf16.xpose.msra.mxu0 0
    %1885 = vmatprep.subr.bf16.mxu0 0
    %1886 = vmatpush1.bf16.xpose.msra.mxu0 0
    %1887 = vmatprep.subr.bf16.mxu0 0
    %1888 = vmatpush1.bf16.xpose.msra.mxu0 %v1871
    %1889 = vmatprep.subr.bf16.mxu0 0
    %1890 = vmatpush2.bf16.xpose.msra.mxu0 0
    %1891 = vmatprep.subr.bf16.mxu0 0
    %1892 = vmatpush2.bf16.xpose.msra.mxu0 0
    %1893 = vmatprep.subr.bf16.mxu0 0
    %1894 = vmatpush2.bf16.xpose.msra.mxu0 0
    %1895 = vmatprep.subr.bf16.mxu0 0
    %1896 = vmatpush2.bf16.xpose.msra.mxu0 0
    %1897 = vmatprep.subr.bf16.mxu0 0
    %1898 = vmatpush2.bf16.xpose.msra.mxu0 0
    %1899 = vmatprep.subr.bf16.mxu0 0
    %1900 = vmatpush2.bf16.xpose.msra.mxu0 0
    %1901 = vmatprep.subr.bf16.mxu0 0
    %1902 = vmatpush2.bf16.xpose.msra.mxu0 0
    %1903 = vmatprep.subr.bf16.mxu0 0
    %1904 = vmatpush2.bf16.xpose.msra.mxu0 0
    %1905 = vmatprep.mubr.bf16.mxu0 0
    %1906 = vmatmul.mubr.bf16.gmra.mxu0 %v1868
    %v1907 = vpop.f32.mrf.mxu0
    %v1908 = vadd.f32 0.0, %v1907
    %v1909 = vpop.f32.mrf.mxu0
    %v1910 = vpop.f32.mrf.mxu0
    %v1911 = vpop.f32.mrf.mxu0
    %1912 = vdwg.mxu0
    %v1913 = vadd.f32 %v1755, %v159
    %v1914 = vadd.f32 %v1807, %v160
    %v1915 = vadd.f32 %v1856, %v161
    %v1916 = vadd.f32 %v1908, %v162
    %v1917 = vsel %vm632, %v1913, -inf
    %1918 = vmax.xlane.f32.xlu0 %v1917
    %v1919 = vpop.xlane.xlu0 %1918
    %v1920 = vsel %vm632, %v1914, -inf
    %1921 = vmax.xlane.f32.xlu0 %v1920
    %v1922 = vpop.xlane.xlu0 %1921
    %v1923 = vsel %vm632, %v1915, -inf
    %1924 = vmax.xlane.f32.xlu0 %v1923
    %v1925 = vpop.xlane.xlu0 %1924
    %v1926 = vsel %vm632, %v1916, -inf
    %1927 = vmax.xlane.f32.xlu0 %v1926
    %v1928 = vpop.xlane.xlu0 %1927
    %v1929 = vsub.f32 %v1913, %v1919
    %v1930 = vsub.f32 %v1914, %v1922
    %v1931 = vsub.f32 %v1915, %v1925
    %v1932 = vsub.f32 %v1916, %v1928
    %v1933 = vmul.f32 %v1929, 1.442695
    %v1934 = vpow.pop %v1933
    %v1935 = vmul.f32 %v1930, 1.442695
    %v1936 = vpow.pop %v1935
    %v1937 = vmul.f32 %v1931, 1.442695
    %v1938 = vpow.pop %v1937
    %v1939 = vmul.f32 %v1932, 1.442695
    %v1940 = vpow.pop %v1939
    %v1941 = vsel %vm632, %v1934, 0.0
    %1942 = vadd.xlane.f32.xlu0 %v1941
    %v1943 = vpop.xlane.xlu0 %1942
    %v1944 = vsel %vm632, %v1936, 0.0
    %1945 = vadd.xlane.f32.xlu0 %v1944
    %v1946 = vpop.xlane.xlu0 %1945
    %v1947 = vsel %vm632, %v1938, 0.0
    %1948 = vadd.xlane.f32.xlu0 %v1947
    %v1949 = vpop.xlane.xlu0 %1948
    %v1950 = vsel %vm632, %v1940, 0.0
    %1951 = vadd.xlane.f32.xlu0 %v1950
    %v1952 = vpop.xlane.xlu0 %1951
    %v1953 = vrcp.pop %v1943
    %v1954 = vmul.f32 %v1934, %v1953
    %v1955 = vrcp.pop %v1946
    %v1956 = vmul.f32 %v1936, %v1955
    %v1957 = vrcp.pop %v1949
    %v1958 = vmul.f32 %v1938, %v1957
    %v1959 = vrcp.pop %v1952
    %v1960 = vmul.f32 %v1940, %v1959
    %v1961 = vpack.c.bf16 %v1956, %v1954
    %v1962 = vpack.c.bf16 %v1960, %v1958
    %v1964 = vsel %vm632, %v1961, 0
    %v1967 = vsel %vm682, %v1713, 0
    %1969 = vmatprep.subr.bf16.mxu0 0
    %1970 = vmatpush1.bf16.msra.mxu0 0
    %1971 = vmatprep.subr.bf16.mxu0 0
    %1972 = vmatpush1.bf16.msra.mxu0 0
    %1973 = vmatprep.subr.bf16.mxu0 0
    %1974 = vmatpush1.bf16.msra.mxu0 0
    %1975 = vmatprep.subr.bf16.mxu0 0
    %1976 = vmatpush1.bf16.msra.mxu0 0
    %1977 = vmatprep.subr.bf16.mxu0 0
    %1978 = vmatpush1.bf16.msra.mxu0 0
    %1979 = vmatprep.subr.bf16.mxu0 0
    %1980 = vmatpush1.bf16.msra.mxu0 0
    %1981 = vmatprep.subr.bf16.mxu0 0
    %1982 = vmatpush1.bf16.msra.mxu0 0
    %1983 = vmatprep.subr.bf16.mxu0 0
    %1984 = vmatpush1.bf16.msra.mxu0 %v1967
    %1985 = vmatprep.subr.bf16.mxu0 0
    %1986 = vmatpush2.bf16.msra.mxu0 0
    %1987 = vmatprep.subr.bf16.mxu0 0
    %1988 = vmatpush2.bf16.msra.mxu0 0
    %1989 = vmatprep.subr.bf16.mxu0 0
    %1990 = vmatpush2.bf16.msra.mxu0 0
    %1991 = vmatprep.subr.bf16.mxu0 0
    %1992 = vmatpush2.bf16.msra.mxu0 0
    %1993 = vmatprep.subr.bf16.mxu0 0
    %1994 = vmatpush2.bf16.msra.mxu0 0
    %1995 = vmatprep.subr.bf16.mxu0 0
    %1996 = vmatpush2.bf16.msra.mxu0 0
    %1997 = vmatprep.subr.bf16.mxu0 0
    %1998 = vmatpush2.bf16.msra.mxu0 0
    %1999 = vmatprep.subr.bf16.mxu0 0
    %2000 = vmatpush2.bf16.msra.mxu0 0
    %2001 = vmatprep.mubr.bf16.mxu0 0
    %2002 = vmatmul.mubr.bf16.gmra.mxu0 %v1964
    %v2003 = vpop.f32.mrf.mxu0
    %v2004 = vadd.f32 0.0, %v2003
    %v2005 = vpop.f32.mrf.mxu0
    %v2006 = vpop.f32.mrf.mxu0
    %v2007 = vpop.f32.mrf.mxu0
    %2008 = vdwg.mxu0
    %v2010 = vrot.slane %v1961, 4
    %2012 = vrot.lane.b32.xlu0 %v1713, 64
    %v2013 = vpop.permute.xlu0 %2012
    %v2015 = vsel %vm632, %v2010, 0
    %v2018 = vsel %vm682, %v2013, 0
    %2020 = vmatprep.subr.bf16.mxu0 0
    %2021 = vmatpush1.bf16.msra.mxu0 0
    %2022 = vmatprep.subr.bf16.mxu0 0
    %2023 = vmatpush1.bf16.msra.mxu0 0
    %2024 = vmatprep.subr.bf16.mxu0 0
    %2025 = vmatpush1.bf16.msra.mxu0 0
    %2026 = vmatprep.subr.bf16.mxu0 0
    %2027 = vmatpush1.bf16.msra.mxu0 0
    %2028 = vmatprep.subr.bf16.mxu0 0
    %2029 = vmatpush1.bf16.msra.mxu0 0
    %2030 = vmatprep.subr.bf16.mxu0 0
    %2031 = vmatpush1.bf16.msra.mxu0 0
    %2032 = vmatprep.subr.bf16.mxu0 0
    %2033 = vmatpush1.bf16.msra.mxu0 0
    %2034 = vmatprep.subr.bf16.mxu0 0
    %2035 = vmatpush1.bf16.msra.mxu0 %v2018
    %2036 = vmatprep.subr.bf16.mxu0 0
    %2037 = vmatpush2.bf16.msra.mxu0 0
    %2038 = vmatprep.subr.bf16.mxu0 0
    %2039 = vmatpush2.bf16.msra.mxu0 0
    %2040 = vmatprep.subr.bf16.mxu0 0
    %2041 = vmatpush2.bf16.msra.mxu0 0
    %2042 = vmatprep.subr.bf16.mxu0 0
    %2043 = vmatpush2.bf16.msra.mxu0 0
    %2044 = vmatprep.subr.bf16.mxu0 0
    %2045 = vmatpush2.bf16.msra.mxu0 0
    %2046 = vmatprep.subr.bf16.mxu0 0
    %2047 = vmatpush2.bf16.msra.mxu0 0
    %2048 = vmatprep.subr.bf16.mxu0 0
    %2049 = vmatpush2.bf16.msra.mxu0 0
    %2050 = vmatprep.subr.bf16.mxu0 0
    %2051 = vmatpush2.bf16.msra.mxu0 0
    %2052 = vmatprep.mubr.bf16.mxu0 0
    %2053 = vmatmul.mubr.bf16.gmra.mxu0 %v2015
    %v2054 = vpop.f32.mrf.mxu0
    %v2055 = vadd.f32 0.0, %v2054
    %v2056 = vpop.f32.mrf.mxu0
    %v2057 = vpop.f32.mrf.mxu0
    %v2058 = vpop.f32.mrf.mxu0
    %2059 = vdwg.mxu0
    %2061 = vrot.lane.b32.xlu0 %v2055, 64
    %v2062 = vpop.permute.xlu0 %2061
    %v2064 = vsel %vm428, %v2004, %v2062
    %v2066 = vsel %vm632, %v1962, 0
    %v2069 = vsel %vm682, %v1814, 0
    %2071 = vmatprep.subr.bf16.mxu0 0
    %2072 = vmatpush1.bf16.msra.mxu0 0
    %2073 = vmatprep.subr.bf16.mxu0 0
    %2074 = vmatpush1.bf16.msra.mxu0 0
    %2075 = vmatprep.subr.bf16.mxu0 0
    %2076 = vmatpush1.bf16.msra.mxu0 0
    %2077 = vmatprep.subr.bf16.mxu0 0
    %2078 = vmatpush1.bf16.msra.mxu0 0
    %2079 = vmatprep.subr.bf16.mxu0 0
    %2080 = vmatpush1.bf16.msra.mxu0 0
    %2081 = vmatprep.subr.bf16.mxu0 0
    %2082 = vmatpush1.bf16.msra.mxu0 0
    %2083 = vmatprep.subr.bf16.mxu0 0
    %2084 = vmatpush1.bf16.msra.mxu0 0
    %2085 = vmatprep.subr.bf16.mxu0 0
    %2086 = vmatpush1.bf16.msra.mxu0 %v2069
    %2087 = vmatprep.subr.bf16.mxu0 0
    %2088 = vmatpush2.bf16.msra.mxu0 0
    %2089 = vmatprep.subr.bf16.mxu0 0
    %2090 = vmatpush2.bf16.msra.mxu0 0
    %2091 = vmatprep.subr.bf16.mxu0 0
    %2092 = vmatpush2.bf16.msra.mxu0 0
    %2093 = vmatprep.subr.bf16.mxu0 0
    %2094 = vmatpush2.bf16.msra.mxu0 0
    %2095 = vmatprep.subr.bf16.mxu0 0
    %2096 = vmatpush2.bf16.msra.mxu0 0
    %2097 = vmatprep.subr.bf16.mxu0 0
    %2098 = vmatpush2.bf16.msra.mxu0 0
    %2099 = vmatprep.subr.bf16.mxu0 0
    %2100 = vmatpush2.bf16.msra.mxu0 0
    %2101 = vmatprep.subr.bf16.mxu0 0
    %2102 = vmatpush2.bf16.msra.mxu0 0
    %2103 = vmatprep.mubr.bf16.mxu0 0
    %2104 = vmatmul.mubr.bf16.gmra.mxu0 %v2066
    %v2105 = vpop.f32.mrf.mxu0
    %v2106 = vadd.f32 0.0, %v2105
    %v2107 = vpop.f32.mrf.mxu0
    %v2108 = vpop.f32.mrf.mxu0
    %v2109 = vpop.f32.mrf.mxu0
    %2110 = vdwg.mxu0
    %v2112 = vrot.slane %v1962, 4
    %2114 = vrot.lane.b32.xlu0 %v1814, 64
    %v2115 = vpop.permute.xlu0 %2114
    %v2117 = vsel %vm632, %v2112, 0
    %v2120 = vsel %vm682, %v2115, 0
    %2122 = vmatprep.subr.bf16.mxu0 0
    %2123 = vmatpush1.bf16.msra.mxu0 0
    %2124 = vmatprep.subr.bf16.mxu0 0
    %2125 = vmatpush1.bf16.msra.mxu0 0
    %2126 = vmatprep.subr.bf16.mxu0 0
    %2127 = vmatpush1.bf16.msra.mxu0 0
    %2128 = vmatprep.subr.bf16.mxu0 0
    %2129 = vmatpush1.bf16.msra.mxu0 0
    %2130 = vmatprep.subr.bf16.mxu0 0
    %2131 = vmatpush1.bf16.msra.mxu0 0
    %2132 = vmatprep.subr.bf16.mxu0 0
    %2133 = vmatpush1.bf16.msra.mxu0 0
    %2134 = vmatprep.subr.bf16.mxu0 0
    %2135 = vmatpush1.bf16.msra.mxu0 0
    %2136 = vmatprep.subr.bf16.mxu0 0
    %2137 = vmatpush1.bf16.msra.mxu0 %v2120
    %2138 = vmatprep.subr.bf16.mxu0 0
    %2139 = vmatpush2.bf16.msra.mxu0 0
    %2140 = vmatprep.subr.bf16.mxu0 0
    %2141 = vmatpush2.bf16.msra.mxu0 0
    %2142 = vmatprep.subr.bf16.mxu0 0
    %2143 = vmatpush2.bf16.msra.mxu0 0
    %2144 = vmatprep.subr.bf16.mxu0 0
    %2145 = vmatpush2.bf16.msra.mxu0 0
    %2146 = vmatprep.subr.bf16.mxu0 0
    %2147 = vmatpush2.bf16.msra.mxu0 0
    %2148 = vmatprep.subr.bf16.mxu0 0
    %2149 = vmatpush2.bf16.msra.mxu0 0
    %2150 = vmatprep.subr.bf16.mxu0 0
    %2151 = vmatpush2.bf16.msra.mxu0 0
    %2152 = vmatprep.subr.bf16.mxu0 0
    %2153 = vmatpush2.bf16.msra.mxu0 0
    %2154 = vmatprep.mubr.bf16.mxu0 0
    %2155 = vmatmul.mubr.bf16.gmra.mxu0 %v2117
    %v2156 = vpop.f32.mrf.mxu0
    %v2157 = vadd.f32 0.0, %v2156
    %v2158 = vpop.f32.mrf.mxu0
    %v2159 = vpop.f32.mrf.mxu0
    %v2160 = vpop.f32.mrf.mxu0
    %2161 = vdwg.mxu0
    %2163 = vrot.lane.b32.xlu0 %v2157, 64
    %v2164 = vpop.permute.xlu0 %2163
    %v2166 = vsel %vm428, %v2106, %v2164
    %v2167 = vpack.c.bf16 %v2166, %v2064
    %s2168 = scalar_lea.vmem [#allocation5], 64
    %v2169 = vld [vmem:[%s2168] sm:$0xf]
    %v2170 = vld [vmem:[%s2168 + $0x4] sm:$0xf]
    %v2171 = vld [vmem:[%s2168 + $0x8] sm:$0xf]
    %v2172 = vld [vmem:[%s2168 + $0xc] sm:$0xf]
    %v2173 = vld [vmem:[%s2168 + $0x10] sm:$0xf]
    %v2174 = vld [vmem:[%s2168 + $0x14] sm:$0xf]
    %v2175 = vld [vmem:[%s2168 + $0x18] sm:$0xf]
    %v2176 = vld [vmem:[%s2168 + $0x1c] sm:$0xf]
    %v2177 = vld [vmem:[%s2168 + $0x20] sm:$0xf]
    %v2178 = vld [vmem:[%s2168 + $0x24] sm:$0xf]
    %v2179 = vld [vmem:[%s2168 + $0x28] sm:$0xf]
    %v2180 = vld [vmem:[%s2168 + $0x2c] sm:$0xf]
    %v2181 = vld [vmem:[%s2168 + $0x30] sm:$0xf]
    %v2182 = vld [vmem:[%s2168 + $0x34] sm:$0xf]
    %v2183 = vld [vmem:[%s2168 + $0x38] sm:$0xf]
    %v2184 = vld [vmem:[%s2168 + $0x3c] sm:$0xf]
    %s2185 = scalar_lea.vmem %s7, 1
    %v2186 = vld [vmem:[%s2185] sm:$0x1]
    %v2188 = vlaneseq
    %v2189 = vshrl.u32 %v2188, 7
    %v2190 = vsub.s32 0, %v2189
    %v2191 = vrot.slane %v2186, %v2190
    %v2209 = vunpack.c.l.b16 %v2169
    %v2210 = vunpack.c.l.b16 %v2170
    %v2211 = vunpack.c.l.b16 %v2171
    %v2212 = vunpack.c.l.b16 %v2172
    %v2213 = vunpack.c.l.b16 %v2173
    %v2214 = vunpack.c.l.b16 %v2174
    %v2215 = vunpack.c.l.b16 %v2175
    %v2216 = vunpack.c.l.b16 %v2176
    %v2217 = vunpack.c.l.b16 %v2177
    %v2218 = vunpack.c.l.b16 %v2178
    %v2219 = vunpack.c.l.b16 %v2179
    %v2220 = vunpack.c.l.b16 %v2180
    %v2221 = vunpack.c.l.b16 %v2181
    %v2222 = vunpack.c.l.b16 %v2182
    %v2223 = vunpack.c.l.b16 %v2183
    %v2224 = vunpack.c.l.b16 %v2184
    %v2225 = vpack.c.b16 %v2210, %v2209
    %v2226 = vpack.c.b16 %v2212, %v2211
    %v2227 = vpack.c.b16 %v2214, %v2213
    %v2228 = vpack.c.b16 %v2216, %v2215
    %v2229 = vpack.c.b16 %v2218, %v2217
    %v2230 = vpack.c.b16 %v2220, %v2219
    %v2231 = vpack.c.b16 %v2222, %v2221
    %v2232 = vpack.c.b16 %v2224, %v2223
    %2241 = vmatprep.subr.bf16.mxu0 0
    %2242 = vmatpush1.bf16.msra.mxu0 %v2232
    %2243 = vmatprep.subr.bf16.mxu0 0
    %2244 = vmatpush1.bf16.msra.mxu0 %v2231
    %2245 = vmatprep.subr.bf16.mxu0 0
    %2246 = vmatpush1.bf16.msra.mxu0 %v2230
    %2247 = vmatprep.subr.bf16.mxu0 0
    %2248 = vmatpush1.bf16.msra.mxu0 %v2229
    %2249 = vmatprep.subr.bf16.mxu0 0
    %2250 = vmatpush1.bf16.msra.mxu0 %v2228
    %2251 = vmatprep.subr.bf16.mxu0 0
    %2252 = vmatpush1.bf16.msra.mxu0 %v2227
    %2253 = vmatprep.subr.bf16.mxu0 0
    %2254 = vmatpush1.bf16.msra.mxu0 %v2226
    %2255 = vmatprep.subr.bf16.mxu0 0
    %2256 = vmatpush1.bf16.msra.mxu0 %v2225
    %2257 = vmatprep.subr.bf16.mxu0 0
    %2258 = vmatpush2.bf16.msra.mxu0 0
    %2259 = vmatprep.subr.bf16.mxu0 0
    %2260 = vmatpush2.bf16.msra.mxu0 0
    %2261 = vmatprep.subr.bf16.mxu0 0
    %2262 = vmatpush2.bf16.msra.mxu0 0
    %2263 = vmatprep.subr.bf16.mxu0 0
    %2264 = vmatpush2.bf16.msra.mxu0 0
    %2265 = vmatprep.subr.bf16.mxu0 0
    %2266 = vmatpush2.bf16.msra.mxu0 0
    %2267 = vmatprep.subr.bf16.mxu0 0
    %2268 = vmatpush2.bf16.msra.mxu0 0
    %2269 = vmatprep.subr.bf16.mxu0 0
    %2270 = vmatpush2.bf16.msra.mxu0 0
    %2271 = vmatprep.subr.bf16.mxu0 0
    %2272 = vmatpush2.bf16.msra.mxu0 0
    %2273 = vmatprep.mubr.bf16.mxu0 0
    %2274 = vmatmul.mubr.bf16.gmra.mxu0 %v2167
    %v2275 = vpop.f32.mrf.mxu0
    %v2276 = vadd.f32 %v2191, %v2275
    %v2277 = vpop.f32.mrf.mxu0
    %v2278 = vpop.f32.mrf.mxu0
    %v2279 = vadd.f32 %v2191, %v2278
    %v2280 = vpop.f32.mrf.mxu0
    %2281 = vdwg.mxu0
    %v2282 = vadd.f32 %v2276, %v1445
    %v2283 = vadd.f32 %v2279, %v1446
    %s2284 = scalar_lea.vmem %s8, 1
    %v2285 = vld [vmem:[%s2284] sm:$0x1]
    %s2286 = scalar_lea.vmem %s9, 1
    %v2287 = vld [vmem:[%s2286] sm:$0x1]
    %2288 = vadd.xlane.f32.xlu0 %v2282
    %v2289 = vpop.xlane.xlu0 %2288
    %2290 = vadd.xlane.f32.xlu0 %v2283
    %v2291 = vpop.xlane.xlu0 %2290
    %v2292 = vmul.f32 %v2289, %v124
    %v2293 = vmul.f32 %v2291, %v124
    %v2294 = vsub.f32 %v2282, %v2292
    %v2295 = vsub.f32 %v2283, %v2293
    %v2296 = vmul.f32 %v2294, %v2294
    %v2297 = vmul.f32 %v2295, %v2295
    %2298 = vadd.xlane.f32.xlu0 %v2296
    %v2299 = vpop.xlane.xlu0 %2298
    %2300 = vadd.xlane.f32.xlu0 %v2297
    %v2301 = vpop.xlane.xlu0 %2300
    %v2302 = vmul.f32 %v2299, %v124
    %v2303 = vmul.f32 %v2301, %v124
    %v2304 = vadd.f32 %v2302, 1e-12
    %v2305 = vadd.f32 %v2303, 1e-12
    %v2306 = vrsqrt.pop %v2304
    %v2307 = vrsqrt.pop %v2305
    %v2308 = vmul.f32 %v2294, %v2306
    %v2309 = vmul.f32 %v2295, %v2307
    %v2311 = vlaneseq
    %v2312 = vshrl.u32 %v2311, 7
    %v2313 = vsub.s32 0, %v2312
    %v2314 = vrot.slane %v2285, %v2313
    %v2316 = vmul.f32 %v2308, %v2314
    %v2317 = vmul.f32 %v2309, %v2314
    %v2319 = vlaneseq
    %v2320 = vshrl.u32 %v2319, 7
    %v2321 = vsub.s32 0, %v2320
    %v2322 = vrot.slane %v2287, %v2321
    %v2324 = vadd.f32 %v2316, %v2322
    %v2325 = vadd.f32 %v2317, %v2322
    %v2326 = vpack.c.bf16 %v2325, %v2324
    %s2327 = scalar_lea.vmem %s10, 128
    %v2328 = vld [vmem:[%s2327] sm:$0xff]
    %v2329 = vld [vmem:[%s2327 + $0x8] sm:$0xff]
    %v2330 = vld [vmem:[%s2327 + $0x10] sm:$0xff]
    %v2331 = vld [vmem:[%s2327 + $0x18] sm:$0xff]
    %v2332 = vld [vmem:[%s2327 + $0x20] sm:$0xff]
    %v2333 = vld [vmem:[%s2327 + $0x28] sm:$0xff]
    %v2334 = vld [vmem:[%s2327 + $0x30] sm:$0xff]
    %v2335 = vld [vmem:[%s2327 + $0x38] sm:$0xff]
    %v2336 = vld [vmem:[%s2327 + $0x40] sm:$0xff]
    %v2337 = vld [vmem:[%s2327 + $0x48] sm:$0xff]
    %v2338 = vld [vmem:[%s2327 + $0x50] sm:$0xff]
    %v2339 = vld [vmem:[%s2327 + $0x58] sm:$0xff]
    %v2340 = vld [vmem:[%s2327 + $0x60] sm:$0xff]
    %v2341 = vld [vmem:[%s2327 + $0x68] sm:$0xff]
    %v2342 = vld [vmem:[%s2327 + $0x70] sm:$0xff]
    %v2343 = vld [vmem:[%s2327 + $0x78] sm:$0xff]
    %s2344 = scalar_lea.vmem %s11, 2
    %v2345 = vld [vmem:[%s2344] sm:$0x3]
    %v2347 = vlaneseq
    %v2348 = vshrl.u32 %v2347, 7
    %v2349 = vsub.s32 0, %v2348
    %v2350 = vrot.slane %v2345, %v2349
    %v2351 = vlaneseq
    %v2352 = vshrl.u32 %v2351, 7
    %v2353 = vsub.s32 1, %v2352
    %v2354 = vrot.slane %v2345, %v2353
    %v2373 = vunpack.c.l.b16 %v2328
    %v2374 = vunpack.c.h.b16 %v2328
    %v2375 = vunpack.c.l.b16 %v2329
    %v2376 = vunpack.c.h.b16 %v2329
    %v2377 = vunpack.c.l.b16 %v2330
    %v2378 = vunpack.c.h.b16 %v2330
    %v2379 = vunpack.c.l.b16 %v2331
    %v2380 = vunpack.c.h.b16 %v2331
    %v2381 = vunpack.c.l.b16 %v2332
    %v2382 = vunpack.c.h.b16 %v2332
    %v2383 = vunpack.c.l.b16 %v2333
    %v2384 = vunpack.c.h.b16 %v2333
    %v2385 = vunpack.c.l.b16 %v2334
    %v2386 = vunpack.c.h.b16 %v2334
    %v2387 = vunpack.c.l.b16 %v2335
    %v2388 = vunpack.c.h.b16 %v2335
    %v2389 = vunpack.c.l.b16 %v2336
    %v2390 = vunpack.c.h.b16 %v2336
    %v2391 = vunpack.c.l.b16 %v2337
    %v2392 = vunpack.c.h.b16 %v2337
    %v2393 = vunpack.c.l.b16 %v2338
    %v2394 = vunpack.c.h.b16 %v2338
    %v2395 = vunpack.c.l.b16 %v2339
    %v2396 = vunpack.c.h.b16 %v2339
    %v2397 = vunpack.c.l.b16 %v2340
    %v2398 = vunpack.c.h.b16 %v2340
    %v2399 = vunpack.c.l.b16 %v2341
    %v2400 = vunpack.c.h.b16 %v2341
    %v2401 = vunpack.c.l.b16 %v2342
    %v2402 = vunpack.c.h.b16 %v2342
    %v2403 = vunpack.c.l.b16 %v2343
    %v2404 = vunpack.c.h.b16 %v2343
    %v2405 = vpack.c.b16 %v2375, %v2373
    %v2406 = vpack.c.b16 %v2376, %v2374
    %v2407 = vpack.c.b16 %v2379, %v2377
    %v2408 = vpack.c.b16 %v2380, %v2378
    %v2409 = vpack.c.b16 %v2383, %v2381
    %v2410 = vpack.c.b16 %v2384, %v2382
    %v2411 = vpack.c.b16 %v2387, %v2385
    %v2412 = vpack.c.b16 %v2388, %v2386
    %v2413 = vpack.c.b16 %v2391, %v2389
    %v2414 = vpack.c.b16 %v2392, %v2390
    %v2415 = vpack.c.b16 %v2395, %v2393
    %v2416 = vpack.c.b16 %v2396, %v2394
    %v2417 = vpack.c.b16 %v2399, %v2397
    %v2418 = vpack.c.b16 %v2400, %v2398
    %v2419 = vpack.c.b16 %v2403, %v2401
    %v2420 = vpack.c.b16 %v2404, %v2402
    %2437 = vmatprep.subr.bf16.mxu0 %v2420
    %2438 = vmatpush1.bf16.msra.mxu0 %v2419
    %2439 = vmatprep.subr.bf16.mxu0 %v2418
    %2440 = vmatpush1.bf16.msra.mxu0 %v2417
    %2441 = vmatprep.subr.bf16.mxu0 %v2416
    %2442 = vmatpush1.bf16.msra.mxu0 %v2415
    %2443 = vmatprep.subr.bf16.mxu0 %v2414
    %2444 = vmatpush1.bf16.msra.mxu0 %v2413
    %2445 = vmatprep.subr.bf16.mxu0 %v2412
    %2446 = vmatpush1.bf16.msra.mxu0 %v2411
    %2447 = vmatprep.subr.bf16.mxu0 %v2410
    %2448 = vmatpush1.bf16.msra.mxu0 %v2409
    %2449 = vmatprep.subr.bf16.mxu0 %v2408
    %2450 = vmatpush1.bf16.msra.mxu0 %v2407
    %2451 = vmatprep.subr.bf16.mxu0 %v2406
    %2452 = vmatpush1.bf16.msra.mxu0 %v2405
    %2453 = vmatprep.subr.bf16.mxu0 0
    %2454 = vmatpush2.bf16.msra.mxu0 0
    %2455 = vmatprep.subr.bf16.mxu0 0
    %2456 = vmatpush2.bf16.msra.mxu0 0
    %2457 = vmatprep.subr.bf16.mxu0 0
    %2458 = vmatpush2.bf16.msra.mxu0 0
    %2459 = vmatprep.subr.bf16.mxu0 0
    %2460 = vmatpush2.bf16.msra.mxu0 0
    %2461 = vmatprep.subr.bf16.mxu0 0
    %2462 = vmatpush2.bf16.msra.mxu0 0
    %2463 = vmatprep.subr.bf16.mxu0 0
    %2464 = vmatpush2.bf16.msra.mxu0 0
    %2465 = vmatprep.subr.bf16.mxu0 0
    %2466 = vmatpush2.bf16.msra.mxu0 0
    %2467 = vmatprep.subr.bf16.mxu0 0
    %2468 = vmatpush2.bf16.msra.mxu0 0
    %2469 = vmatprep.mubr.bf16.mxu0 0
    %2470 = vmatmul.mubr.bf16.gmra.mxu0 %v2326
    %v2471 = vpop.f32.mrf.mxu0
    %v2472 = vadd.f32 %v2350, %v2471
    %v2473 = vpop.f32.mrf.mxu0
    %v2474 = vadd.f32 %v2354, %v2473
    %v2475 = vpop.f32.mrf.mxu0
    %v2476 = vadd.f32 %v2350, %v2475
    %v2477 = vpop.f32.mrf.mxu0
    %v2478 = vadd.f32 %v2354, %v2477
    %2479 = vdwg.mxu0
    %v2480 = vmul.f32 %v2472, 0.5
    %v2481 = vmul.f32 %v2474, 0.5
    %v2482 = vmul.f32 %v2476, 0.5
    %v2483 = vmul.f32 %v2478, 0.5
    %v2484 = vmul.f32 %v2472, 0.044715
    %v2485 = vmul.f32 %v2474, 0.044715
    %v2486 = vmul.f32 %v2476, 0.044715
    %v2487 = vmul.f32 %v2478, 0.044715
    %v2488 = vmul.f32 %v2484, %v2472
    %v2489 = vmul.f32 %v2485, %v2474
    %v2490 = vmul.f32 %v2486, %v2476
    %v2491 = vmul.f32 %v2487, %v2478
    %v2492 = vmul.f32 %v2488, %v2472
    %v2493 = vmul.f32 %v2489, %v2474
    %v2494 = vmul.f32 %v2490, %v2476
    %v2495 = vmul.f32 %v2491, %v2478
    %v2496 = vadd.f32 %v2472, %v2492
    %v2497 = vadd.f32 %v2474, %v2493
    %v2498 = vadd.f32 %v2476, %v2494
    %v2499 = vadd.f32 %v2478, %v2495
    %v2500 = vmul.f32 %v2496, 0.7978846
    %v2501 = vmul.f32 %v2497, 0.7978846
    %v2502 = vmul.f32 %v2498, 0.7978846
    %v2503 = vmul.f32 %v2499, 0.7978846
    %v2504 = vtanh.pop %v2500
    %v2505 = vtanh.pop %v2501
    %v2506 = vtanh.pop %v2502
    %v2507 = vtanh.pop %v2503
    %v2508 = vadd.f32 %v2504, 1.0
    %v2509 = vadd.f32 %v2505, 1.0
    %v2510 = vadd.f32 %v2506, 1.0
    %v2511 = vadd.f32 %v2507, 1.0
    %v2512 = vmul.f32 %v2480, %v2508
    %v2513 = vmul.f32 %v2481, %v2509
    %v2514 = vmul.f32 %v2482, %v2510
    %v2515 = vmul.f32 %v2483, %v2511
    %v2516 = vpack.c.bf16 %v2514, %v2512
    %v2517 = vpack.c.bf16 %v2515, %v2513
    %s2518 = scalar_lea.vmem [#allocation7], 128
    %v2519 = vld [vmem:[%s2518] sm:$0xf]
    %v2520 = vld [vmem:[%s2518 + $0x4] sm:$0xf]
    %v2521 = vld [vmem:[%s2518 + $0x8] sm:$0xf]
    %v2522 = vld [vmem:[%s2518 + $0xc] sm:$0xf]
    %v2523 = vld [vmem:[%s2518 + $0x10] sm:$0xf]
    %v2524 = vld [vmem:[%s2518 + $0x14] sm:$0xf]
    %v2525 = vld [vmem:[%s2518 + $0x18] sm:$0xf]
    %v2526 = vld [vmem:[%s2518 + $0x1c] sm:$0xf]
    %v2527 = vld [vmem:[%s2518 + $0x20] sm:$0xf]
    %v2528 = vld [vmem:[%s2518 + $0x24] sm:$0xf]
    %v2529 = vld [vmem:[%s2518 + $0x28] sm:$0xf]
    %v2530 = vld [vmem:[%s2518 + $0x2c] sm:$0xf]
    %v2531 = vld [vmem:[%s2518 + $0x30] sm:$0xf]
    %v2532 = vld [vmem:[%s2518 + $0x34] sm:$0xf]
    %v2533 = vld [vmem:[%s2518 + $0x38] sm:$0xf]
    %v2534 = vld [vmem:[%s2518 + $0x3c] sm:$0xf]
    %v2535 = vld [vmem:[%s2518 + $0x40] sm:$0xf]
    %v2536 = vld [vmem:[%s2518 + $0x44] sm:$0xf]
    %v2537 = vld [vmem:[%s2518 + $0x48] sm:$0xf]
    %v2538 = vld [vmem:[%s2518 + $0x4c] sm:$0xf]
    %v2539 = vld [vmem:[%s2518 + $0x50] sm:$0xf]
    %v2540 = vld [vmem:[%s2518 + $0x54] sm:$0xf]
    %v2541 = vld [vmem:[%s2518 + $0x58] sm:$0xf]
    %v2542 = vld [vmem:[%s2518 + $0x5c] sm:$0xf]
    %v2543 = vld [vmem:[%s2518 + $0x60] sm:$0xf]
    %v2544 = vld [vmem:[%s2518 + $0x64] sm:$0xf]
    %v2545 = vld [vmem:[%s2518 + $0x68] sm:$0xf]
    %v2546 = vld [vmem:[%s2518 + $0x6c] sm:$0xf]
    %v2547 = vld [vmem:[%s2518 + $0x70] sm:$0xf]
    %v2548 = vld [vmem:[%s2518 + $0x74] sm:$0xf]
    %v2549 = vld [vmem:[%s2518 + $0x78] sm:$0xf]
    %v2550 = vld [vmem:[%s2518 + $0x7c] sm:$0xf]
    %s2551 = scalar_lea.vmem %s13, 1
    %v2552 = vld [vmem:[%s2551] sm:$0x1]
    %v2554 = vlaneseq
    %v2555 = vshrl.u32 %v2554, 7
    %v2556 = vsub.s32 0, %v2555
    %v2557 = vrot.slane %v2552, %v2556
    %v2591 = vunpack.c.l.b16 %v2519
    %v2592 = vunpack.c.l.b16 %v2520
    %v2593 = vunpack.c.l.b16 %v2521
    %v2594 = vunpack.c.l.b16 %v2522
    %v2595 = vunpack.c.l.b16 %v2523
    %v2596 = vunpack.c.l.b16 %v2524
    %v2597 = vunpack.c.l.b16 %v2525
    %v2598 = vunpack.c.l.b16 %v2526
    %v2599 = vunpack.c.l.b16 %v2527
    %v2600 = vunpack.c.l.b16 %v2528
    %v2601 = vunpack.c.l.b16 %v2529
    %v2602 = vunpack.c.l.b16 %v2530
    %v2603 = vunpack.c.l.b16 %v2531
    %v2604 = vunpack.c.l.b16 %v2532
    %v2605 = vunpack.c.l.b16 %v2533
    %v2606 = vunpack.c.l.b16 %v2534
    %v2607 = vunpack.c.l.b16 %v2535
    %v2608 = vunpack.c.l.b16 %v2536
    %v2609 = vunpack.c.l.b16 %v2537
    %v2610 = vunpack.c.l.b16 %v2538
    %v2611 = vunpack.c.l.b16 %v2539
    %v2612 = vunpack.c.l.b16 %v2540
    %v2613 = vunpack.c.l.b16 %v2541
    %v2614 = vunpack.c.l.b16 %v2542
    %v2615 = vunpack.c.l.b16 %v2543
    %v2616 = vunpack.c.l.b16 %v2544
    %v2617 = vunpack.c.l.b16 %v2545
    %v2618 = vunpack.c.l.b16 %v2546
    %v2619 = vunpack.c.l.b16 %v2547
    %v2620 = vunpack.c.l.b16 %v2548
    %v2621 = vunpack.c.l.b16 %v2549
    %v2622 = vunpack.c.l.b16 %v2550
    %v2623 = vpack.c.b16 %v2592, %v2591
    %v2624 = vpack.c.b16 %v2594, %v2593
    %v2625 = vpack.c.b16 %v2596, %v2595
    %v2626 = vpack.c.b16 %v2598, %v2597
    %v2627 = vpack.c.b16 %v2600, %v2599
    %v2628 = vpack.c.b16 %v2602, %v2601
    %v2629 = vpack.c.b16 %v2604, %v2603
    %v2630 = vpack.c.b16 %v2606, %v2605
    %v2631 = vpack.c.b16 %v2608, %v2607
    %v2632 = vpack.c.b16 %v2610, %v2609
    %v2633 = vpack.c.b16 %v2612, %v2611
    %v2634 = vpack.c.b16 %v2614, %v2613
    %v2635 = vpack.c.b16 %v2616, %v2615
    %v2636 = vpack.c.b16 %v2618, %v2617
    %v2637 = vpack.c.b16 %v2620, %v2619
    %v2638 = vpack.c.b16 %v2622, %v2621
    %2655 = vmatprep.subr.bf16.mxu0 0
    %2656 = vmatpush1.bf16.msra.mxu0 %v2630
    %2657 = vmatprep.subr.bf16.mxu0 0
    %2658 = vmatpush1.bf16.msra.mxu0 %v2629
    %2659 = vmatprep.subr.bf16.mxu0 0
    %2660 = vmatpush1.bf16.msra.mxu0 %v2628
    %2661 = vmatprep.subr.bf16.mxu0 0
    %2662 = vmatpush1.bf16.msra.mxu0 %v2627
    %2663 = vmatprep.subr.bf16.mxu0 0
    %2664 = vmatpush1.bf16.msra.mxu0 %v2626
    %2665 = vmatprep.subr.bf16.mxu0 0
    %2666 = vmatpush1.bf16.msra.mxu0 %v2625
    %2667 = vmatprep.subr.bf16.mxu0 0
    %2668 = vmatpush1.bf16.msra.mxu0 %v2624
    %2669 = vmatprep.subr.bf16.mxu0 0
    %2670 = vmatpush1.bf16.msra.mxu0 %v2623
    %2671 = vmatprep.subr.bf16.mxu0 0
    %2672 = vmatpush2.bf16.msra.mxu0 %v2638
    %2673 = vmatprep.subr.bf16.mxu0 0
    %2674 = vmatpush2.bf16.msra.mxu0 %v2637
    %2675 = vmatprep.subr.bf16.mxu0 0
    %2676 = vmatpush2.bf16.msra.mxu0 %v2636
    %2677 = vmatprep.subr.bf16.mxu0 0
    %2678 = vmatpush2.bf16.msra.mxu0 %v2635
    %2679 = vmatprep.subr.bf16.mxu0 0
    %2680 = vmatpush2.bf16.msra.mxu0 %v2634
    %2681 = vmatprep.subr.bf16.mxu0 0
    %2682 = vmatpush2.bf16.msra.mxu0 %v2633
    %2683 = vmatprep.subr.bf16.mxu0 0
    %2684 = vmatpush2.bf16.msra.mxu0 %v2632
    %2685 = vmatprep.subr.bf16.mxu0 0
    %2686 = vmatpush2.bf16.msra.mxu0 %v2631
    %2687 = vmatprep.mubr.bf16.mxu0 %v2517
    %2688 = vmatmul.mubr.bf16.gmra.mxu0 %v2516
    %v2689 = vpop.f32.mrf.mxu0
    %v2690 = vadd.f32 %v2557, %v2689
    %v2691 = vpop.f32.mrf.mxu0
    %v2692 = vpop.f32.mrf.mxu0
    %v2693 = vadd.f32 %v2557, %v2692
    %v2694 = vpop.f32.mrf.mxu0
    %2695 = vdwg.mxu0
    %v2696 = vadd.f32 %v2690, %v2324
    %v2697 = vadd.f32 %v2693, %v2325
    %s2698 = scalar_lea.vmem %s14, 1
    %v2699 = vld [vmem:[%s2698] sm:$0x1]
    %s2700 = scalar_lea.vmem %s15, 1
    %v2701 = vld [vmem:[%s2700] sm:$0x1]
    %2702 = vadd.xlane.f32.xlu0 %v2696
    %v2703 = vpop.xlane.xlu0 %2702
    %2704 = vadd.xlane.f32.xlu0 %v2697
    %v2705 = vpop.xlane.xlu0 %2704
    %v2706 = vmul.f32 %v2703, %v124
    %v2707 = vmul.f32 %v2705, %v124
    %v2708 = vsub.f32 %v2696, %v2706
    %v2709 = vsub.f32 %v2697, %v2707
    %v2710 = vmul.f32 %v2708, %v2708
    %v2711 = vmul.f32 %v2709, %v2709
    %2712 = vadd.xlane.f32.xlu0 %v2710
    %v2713 = vpop.xlane.xlu0 %2712
    %2714 = vadd.xlane.f32.xlu0 %v2711
    %v2715 = vpop.xlane.xlu0 %2714
    %v2716 = vmul.f32 %v2713, %v124
    %v2717 = vmul.f32 %v2715, %v124
    %v2718 = vadd.f32 %v2716, 1e-12
    %v2719 = vadd.f32 %v2717, 1e-12
    %v2720 = vrsqrt.pop %v2718
    %v2721 = vrsqrt.pop %v2719
    %v2722 = vmul.f32 %v2708, %v2720
    %v2723 = vmul.f32 %v2709, %v2721
    %v2725 = vlaneseq
    %v2726 = vshrl.u32 %v2725, 7
    %v2727 = vsub.s32 0, %v2726
    %v2728 = vrot.slane %v2699, %v2727
    %v2730 = vmul.f32 %v2722, %v2728
    %v2731 = vmul.f32 %v2723, %v2728
    %v2733 = vlaneseq
    %v2734 = vshrl.u32 %v2733, 7
    %v2735 = vsub.s32 0, %v2734
    %v2736 = vrot.slane %v2701, %v2735
    %v2738 = vadd.f32 %v2730, %v2736
    %v2739 = vadd.f32 %v2731, %v2736
    %v2741 = vrot.slane %v2739, 7
    %vm2743 = vcmask 1040384
    %v2744 = vsel %vm2743, %v2738, %v2741
    %v2745 = vpack.c.bf16 %v2744, %v2744
    %v2746 = vld [vmem:[#allocation8] sm:$0xf]
    %v2747 = vld [vmem:[#allocation8 + $0x4] sm:$0xf]
    %v2748 = vld [vmem:[#allocation8 + $0x8] sm:$0xf]
    %v2749 = vld [vmem:[#allocation8 + $0xc] sm:$0xf]
    %v2750 = vld [vmem:[#allocation8 + $0x10] sm:$0xf]
    %v2751 = vld [vmem:[#allocation8 + $0x14] sm:$0xf]
    %v2752 = vld [vmem:[#allocation8 + $0x18] sm:$0xf]
    %v2753 = vld [vmem:[#allocation8 + $0x1c] sm:$0xf]
    %v2754 = vld [vmem:[#allocation8 + $0x20] sm:$0xf]
    %v2755 = vld [vmem:[#allocation8 + $0x24] sm:$0xf]
    %v2756 = vld [vmem:[#allocation8 + $0x28] sm:$0xf]
    %v2757 = vld [vmem:[#allocation8 + $0x2c] sm:$0xf]
    %v2758 = vld [vmem:[#allocation8 + $0x30] sm:$0xf]
    %v2759 = vld [vmem:[#allocation8 + $0x34] sm:$0xf]
    %v2760 = vld [vmem:[#allocation8 + $0x38] sm:$0xf]
    %v2761 = vld [vmem:[#allocation8 + $0x3c] sm:$0xf]
    %v2762 = vld [vmem:[%s17] sm:$0x1]
    %v2764 = vlaneseq
    %v2765 = vshrl.u32 %v2764, 7
    %v2766 = vsub.s32 0, %v2765
    %v2767 = vrot.slane %v2762, %v2766
    %v2785 = vunpack.c.l.b16 %v2746
    %v2786 = vunpack.c.l.b16 %v2747
    %v2787 = vunpack.c.l.b16 %v2748
    %v2788 = vunpack.c.l.b16 %v2749
    %v2789 = vunpack.c.l.b16 %v2750
    %v2790 = vunpack.c.l.b16 %v2751
    %v2791 = vunpack.c.l.b16 %v2752
    %v2792 = vunpack.c.l.b16 %v2753
    %v2793 = vunpack.c.l.b16 %v2754
    %v2794 = vunpack.c.l.b16 %v2755
    %v2795 = vunpack.c.l.b16 %v2756
    %v2796 = vunpack.c.l.b16 %v2757
    %v2797 = vunpack.c.l.b16 %v2758
    %v2798 = vunpack.c.l.b16 %v2759
    %v2799 = vunpack.c.l.b16 %v2760
    %v2800 = vunpack.c.l.b16 %v2761
    %v2801 = vpack.c.b16 %v2786, %v2785
    %v2802 = vpack.c.b16 %v2788, %v2787
    %v2803 = vpack.c.b16 %v2790, %v2789
    %v2804 = vpack.c.b16 %v2792, %v2791
    %v2805 = vpack.c.b16 %v2794, %v2793
    %v2806 = vpack.c.b16 %v2796, %v2795
    %v2807 = vpack.c.b16 %v2798, %v2797
    %v2808 = vpack.c.b16 %v2800, %v2799
    %2817 = vmatprep.subr.bf16.mxu0 0
    %2818 = vmatpush1.bf16.msra.mxu0 %v2808
    %2819 = vmatprep.subr.bf16.mxu0 0
    %2820 = vmatpush1.bf16.msra.mxu0 %v2807
    %2821 = vmatprep.subr.bf16.mxu0 0
    %2822 = vmatpush1.bf16.msra.mxu0 %v2806
    %2823 = vmatprep.subr.bf16.mxu0 0
    %2824 = vmatpush1.bf16.msra.mxu0 %v2805
    %2825 = vmatprep.subr.bf16.mxu0 0
    %2826 = vmatpush1.bf16.msra.mxu0 %v2804
    %2827 = vmatprep.subr.bf16.mxu0 0
    %2828 = vmatpush1.bf16.msra.mxu0 %v2803
    %2829 = vmatprep.subr.bf16.mxu0 0
    %2830 = vmatpush1.bf16.msra.mxu0 %v2802
    %2831 = vmatprep.subr.bf16.mxu0 0
    %2832 = vmatpush1.bf16.msra.mxu0 %v2801
    %2833 = vmatprep.subr.bf16.mxu0 0
    %2834 = vmatpush2.bf16.msra.mxu0 0
    %2835 = vmatprep.subr.bf16.mxu0 0
    %2836 = vmatpush2.bf16.msra.mxu0 0
    %2837 = vmatprep.subr.bf16.mxu0 0
    %2838 = vmatpush2.bf16.msra.mxu0 0
    %2839 = vmatprep.subr.bf16.mxu0 0
    %2840 = vmatpush2.bf16.msra.mxu0 0
    %2841 = vmatprep.subr.bf16.mxu0 0
    %2842 = vmatpush2.bf16.msra.mxu0 0
    %2843 = vmatprep.subr.bf16.mxu0 0
    %2844 = vmatpush2.bf16.msra.mxu0 0
    %2845 = vmatprep.subr.bf16.mxu0 0
    %2846 = vmatpush2.bf16.msra.mxu0 0
    %2847 = vmatprep.subr.bf16.mxu0 0
    %2848 = vmatpush2.bf16.msra.mxu0 0
    %2849 = vmatprep.mubr.bf16.mxu0 0
    %2850 = vmatmul.mubr.bf16.gmra.mxu0 %v2745
    %v2851 = vpop.f32.mrf.mxu0
    %v2852 = vadd.f32 %v2767, %v2851
    %v2853 = vpop.f32.mrf.mxu0
    %v2854 = vpop.f32.mrf.mxu0
    %v2855 = vpop.f32.mrf.mxu0
    %2856 = vdwg.mxu0
    %2857 = vst [vmem:[#allocation10] sm:$0x3] %v2852
    // Predicated region
    $region90: #{distilbert_classifier_forward.1} parent=1 // pred_check
      _
    $region91: #{distilbert_classifier_forward.1} parent=1 // pred_check_branch
      %2859 = sbr.rel (0) target = $region93
    $region92: #{distilbert_classifier_forward.1} parent=1 // pred_region
      %s2861 = ssub.s32 32, 32
      %2862 = vsyncadd [#allocation4], %s2861
      %s2864 = sshll.u32 [#allocation10], 4
      %s2865 = int_to_ptr.vmem [resolvable:$true] %s2864
      %2867 = dma.vmem_to_hbm [thread:$0]  %s2865, 32, %s18, [#allocation4]
    $region93: #{distilbert_classifier_forward.1} parent=1 // pred_fallthru
      _
    // Predicated region
    $region94: #{distilbert_classifier_forward.1} parent=1 // pred_check
      _
    $region95: #{distilbert_classifier_forward.1} parent=1 // pred_check_branch
      %2869 = sbr.rel (0) target = $region97
    $region96: #{distilbert_classifier_forward.1} parent=1 // pred_region
      %2870 = dma.done [#allocation4], 32
    $region97: #{distilbert_classifier_forward.1} parent=1 // pred_fallthru
      _
    %2871 = vsyncpa [#allocation3], 1
    %2872 = vsyncpa [#allocation6], 1
    %2873 = vsyncpa [#allocation9], 1
    %2874 = vsyncpa [#allocation4], 1

</llo_original>
